<compile_context>
chip_gen: v5e
topology: v5e:2x2
jax: 0.10.0
libtpu: 0.0.40
codegen_flags: <defaults>
</compile_context>

<pallas_src>
import functools

import jax
import jax.numpy as jnp
from jax.experimental import pallas as pl
from jax.experimental.pallas import tpu as pltpu


KMAX = 7                    # largest branch kernel; all branches share its padding
PAD = (KMAX - 1) // 2       # 'same' padding of the shared, width-unrolled input


# ----------------------------------------------------------------------------
# Small helpers
# ----------------------------------------------------------------------------
def _pick_row_tile(m, preferred=(1024, 512, 256, 128, 64, 32, 16, 8)):
    """Largest tile from `preferred` that divides m, preferring a grid of >= 2
    steps (keeps both v7x TCs busy) and avoiding any pad/unpad of the M axis."""
    divisors = [t for t in preferred if m % t == 0]
    for t in divisors:
        if m // t >= 2:
            return t
    return divisors[0] if divisors else m


def _conv_weight_to_gemm(w):
    """(Cout, Cin, kh, kw) -> (kh*kw*Cin, Cout); rows ordered (i, j, c)."""
    c_out = w.shape[0]
    return jnp.transpose(w, (2, 3, 1, 0)).reshape(-1, c_out)


def _width_unrolled_cols(x_nhwc):
    """Pad by PAD and unroll ONLY the KMAX horizontal taps.

    Result rows are (n, y_padded, x), columns are (j, c) for horizontal tap j.
    HBM cost ~= KMAX x the (small) input -- the full k*k im2col never hits HBM;
    the vertical taps are produced inside the Pallas kernel.
    """
    N, H, W, C = x_nhwc.shape
    xp = jnp.pad(x_nhwc, ((0, 0), (PAD, PAD), (PAD, PAD), (0, 0))).astype(jnp.bfloat16)
    cols = jnp.concatenate([xp[:, :, j:j + W, :] for j in range(KMAX)], axis=-1)
    return cols.reshape(N * (H + 2 * PAD) * W, KMAX * C)


# ----------------------------------------------------------------------------
# Fused multi-branch 'same' conv kernel (im2col-free over H; per-branch true K)
# ----------------------------------------------------------------------------
def _inception_conv_kernel(a_ref, w1_ref, w2_ref, w3_ref, bias_ref, o_ref, *,
                           branch_specs, H, W, C):
    """a_ref : ((H+2*PAD)*W, KMAX*C) bf16 -- width-unrolled rows of ONE image.
    w*_ref  : (k*k*C, oc) bf16 per branch, rows ordered (i, j, c).
    bias_ref: (1, total_oc) f32.
    o_ref   : (H*W, total_oc).
    branch_specs: static tuple of (k, oc, sigmoid_cols) per branch.
    """
    HW = H * W
    w_refs = (w1_ref, w2_ref, w3_ref)
    col = 0
    for (k, oc, sig_cols), w_ref in zip(branch_specs, w_refs):
        off = (KMAX - k) // 2               # branch offset inside the 7x7 window
        acc = None
        for i in range(k):                  # vertical taps -> k accumulated matmuls
            a_tap = a_ref[pl.ds((off + i) * W, HW), pl.ds(off * C, k * C)]
            w_tap = w_ref[pl.ds(i * k * C, k * C), :]
            part = jnp.dot(a_tap, w_tap, preferred_element_type=jnp.float32)
            acc = part if acc is None else acc + part
        acc = acc + bias_ref[:, pl.ds(col, oc)]
        lin_cols = oc - sig_cols
        if sig_cols == 0:
            o_ref[:, pl.ds(col, oc)] = acc.astype(o_ref.dtype)
        else:
            # sigmoid fused ONLY on the trailing mask columns of this branch.
            o_ref[:, pl.ds(col, lin_cols)] = acc[:, :lin_cols].astype(o_ref.dtype)
            o_ref[:, pl.ds(col + lin_cols, sig_cols)] = (
                jax.nn.sigmoid(acc[:, lin_cols:]).astype(o_ref.dtype))
        col += oc


def inception_conv(a, weights, bias, branch_specs, *, N, H, W, C, out_dtype):
    """One Pallas call: all branches' 'same' convs + bias + per-branch sigmoid tail.

    a: (N*(H+2*PAD)*W, KMAX*C) bf16 from _width_unrolled_cols.
    weights: list of 3 bf16 arrays (k*k*C, oc).
    bias: (total_oc,) f32 or None.
    branch_specs: tuple of (k, oc, sigmoid_cols).
    Returns (N*H*W, total_oc) in out_dtype; rows are (n, y, x) row-major.
    """
    HW = H * W
    Hp = H + 2 * PAD
    total_oc = sum(oc for _, oc, _ in branch_specs)
    if bias is None:
        bias = jnp.zeros((total_oc,), jnp.float32)
    bias = bias.reshape(1, total_oc).astype(jnp.float32)

    out_bytes = jnp.dtype(out_dtype).itemsize
    flops = 2 * N * HW * sum(k * k * C * oc for k, oc, _ in branch_specs)
    transcend = N * HW * sum(s for _, _, s in branch_specs)
    bytes_acc = (a.size * 2 + sum(int(w.size) for w in weights) * 2
                 + total_oc * 4 + N * HW * total_oc * out_bytes)

    # Per-step VMEM: double-buffered input/output blocks + grid-invariant weights.
    # TODO(synk): single-buffer the grid-invariant weight/bias blocks
    # (pipeline_mode=pl.Buffered(1)) to reclaim VMEM on v7x once needed.
    # TODO(synk): for large H*W add a row-tile grid axis with a haloed manual DMA
    # (P4) instead of one whole image per block.
    vmem_need = 2 * (Hp * W * KMAX * C * 2 + HW * total_oc * 4
                     + sum(int(w.size) for w in weights) * 2 + total_oc * 4)
    vmem_limit = int(min(max(2 * vmem_need + (4 << 20), 16 << 20), 48 << 20))

    kernel = functools.partial(_inception_conv_kernel,
                               branch_specs=tuple(branch_specs), H=H, W=W, C=C)
    return pl.pallas_call(
        kernel,
        out_shape=jax.ShapeDtypeStruct((N * HW, total_oc), out_dtype),
        grid=(N,),
        in_specs=[
            pl.BlockSpec((Hp * W, KMAX * C), lambda n: (n, 0)),
            pl.BlockSpec(weights[0].shape, lambda n: (0, 0)),
            pl.BlockSpec(weights[1].shape, lambda n: (0, 0)),
            pl.BlockSpec(weights[2].shape, lambda n: (0, 0)),
            pl.BlockSpec((1, total_oc), lambda n: (0, 0)),
        ],
        out_specs=pl.BlockSpec((HW, total_oc), lambda n: (n, 0)),
        compiler_params=pltpu.CompilerParams(
            dimension_semantics=("parallel",),     # one image per step -> both v7x TCs busy
            vmem_limit_bytes=vmem_limit),
        cost_estimate=pl.CostEstimate(flops=int(flops), transcendentals=int(transcend),
                                      bytes_accessed=int(bytes_acc)),
    )(a, weights[0], weights[1], weights[2], bias)


# ----------------------------------------------------------------------------
# Plain GEMM kernel (general path: modulated-im2col @ W_dcn)
# ----------------------------------------------------------------------------
def _matmul_kernel(a_ref, b_ref, o_ref):
    o_ref[...] = jnp.dot(a_ref[...], b_ref[...],
                         preferred_element_type=jnp.float32).astype(o_ref.dtype)


def pallas_matmul(a, b, out_dtype=jnp.float32):
    """A[M,K] @ B[K,N], bf16 operands, f32 accumulation.  The M tile divides M
    (no pad / unpad passes); K and N stay full-extent blocks (no zero columns)."""
    M, K = a.shape
    K2, Nc = b.shape
    assert K == K2
    a = a.astype(jnp.bfloat16)
    b = b.astype(jnp.bfloat16)
    tm = _pick_row_tile(M)
    out_bytes = jnp.dtype(out_dtype).itemsize
    vmem_need = 2 * (tm * K * 2 + K * Nc * 2 + tm * Nc * out_bytes)
    return pl.pallas_call(
        _matmul_kernel,
        out_shape=jax.ShapeDtypeStruct((M, Nc), out_dtype),
        grid=(M // tm,),
        in_specs=[pl.BlockSpec((tm, K), lambda i: (i, 0)),
                  pl.BlockSpec((K, Nc), lambda i: (0, 0))],
        out_specs=pl.BlockSpec((tm, Nc), lambda i: (i, 0)),
        compiler_params=pltpu.CompilerParams(
            dimension_semantics=("parallel",),
            vmem_limit_bytes=int(min(max(2 * vmem_need + (4 << 20), 16 << 20), 48 << 20))),
        cost_estimate=pl.CostEstimate(
            flops=2 * M * K * Nc, transcendentals=0,
            bytes_accessed=(M * K + K * Nc) * 2 + M * Nc * out_bytes),
    )(a, b)


# ----------------------------------------------------------------------------
# DCNv2 modulated im2col (general path glue; data-dependent bilinear gather)
# ----------------------------------------------------------------------------
def deformable_im2col(x_nhwc, offset, mask, k, pad):
    """Bilinear sampling with zeros outside the image; output bf16.

    offset: [N, H, W, 2*k*k] interleaved (dy, dx) per tap; mask: [N, H, W, k*k].
    """
    # TODO(synk): move this data-dependent gather into a Pallas kernel (manual
    # DMA gather + fused 4-tap blend / mask multiply); XLA gather dominates the
    # trained-offset path.
    N, H, W, C = x_nhwc.shape
    T = k * k
    off = offset.reshape(N, H, W, T, 2)
    dy, dx = off[..., 0], off[..., 1]

    ki = jnp.arange(k, dtype=jnp.float32)
    base_i = jnp.repeat(ki, k).reshape(1, 1, 1, T)
    base_j = jnp.tile(ki, k).reshape(1, 1, 1, T)
    ys = jnp.arange(H, dtype=jnp.float32).reshape(1, H, 1, 1)
    xs = jnp.arange(W, dtype=jnp.float32).reshape(1, 1, W, 1)

    py = ys - pad + base_i + dy
    px = xs - pad + base_j + dx

    y0 = jnp.floor(py)
    x0 = jnp.floor(px)
    y1, x1 = y0 + 1.0, x0 + 1.0
    wy1, wx1 = py - y0, px - x0
    wy0, wx0 = 1.0 - wy1, 1.0 - wx1

    img_flat = x_nhwc.reshape(N, H * W, C)

    def gather(yy, xx):
        valid = (yy >= 0) & (yy <= H - 1) & (xx >= 0) & (xx <= W - 1)
        yyc = jnp.clip(yy, 0, H - 1).astype(jnp.int32)
        xxc = jnp.clip(xx, 0, W - 1).astype(jnp.int32)
        idx = (yyc * W + xxc).reshape(N, H * W * T, 1)
        vals = jnp.take_along_axis(img_flat, idx, axis=1)
        vals = vals.reshape(N, H, W, T, C)
        return vals * valid[..., None].astype(vals.dtype)

    v00, v01 = gather(y0, x0), gather(y0, x1)
    v10, v11 = gather(y1, x0), gather(y1, x1)
    sampled = (v00 * (wy0 * wx0)[..., None] + v01 * (wy0 * wx1)[..., None]
               + v10 * (wy1 * wx0)[..., None] + v11 * (wy1 * wx1)[..., None])
    sampled = sampled * mask[..., None]
    return sampled.reshape(N * H * W, T * C).astype(jnp.bfloat16)


# ----------------------------------------------------------------------------
# Fast path: zero-init offset/mask generators  =>  one fused conv kernel
# ----------------------------------------------------------------------------
def fused_inception_forward(x_nhwc, params):
    N, H, W, C = x_nhwc.shape
    out_ch = params["p1"]["w_dcn"].shape[0]
    a = _width_unrolled_cols(x_nhwc)
    weights, specs = [], []
    for name, k in (("p1", 3), ("p2", 5), ("p3", 7)):
        # Fold the constant 0.5 mask (sigmoid(0)) into the weights; the DCN conv
        # itself has no bias (no_bias=True in the module spec).
        w = 0.5 * params[name]["w_dcn"]
        weights.append(_conv_weight_to_gemm(w).astype(jnp.bfloat16))
        specs.append((k, out_ch, 0))
    out = inception_conv(a, weights, None, specs, N=N, H=H, W=W, C=C,
                         out_dtype=jnp.bfloat16)   # bf16 out: halves HBM writes
    return out.reshape(N, H, W, 3 * out_ch)


# ----------------------------------------------------------------------------
# General path (trainable offset/mask weights), kept for fidelity / training
# ----------------------------------------------------------------------------
def general_inception_forward(x_nhwc, params):
    N, H, W, C = x_nhwc.shape
    out_ch = params["p1"]["w_dcn"].shape[0]
    a = _width_unrolled_cols(x_nhwc)      # shared across all three generators

    # All offset+mask generators in ONE fused kernel call, sigmoid fused on the
    # trailing k*k mask columns of each branch.
    weights, biases, specs = [], [], []
    for name, k in (("p1", 3), ("p2", 5), ("p3", 7)):
        p = params[name]
        w_gen = jnp.concatenate([p["w_off"], p["w_msk"]], axis=0)   # (3k^2, C, k, k)
        weights.append(_conv_weight_to_gemm(w_gen).astype(jnp.bfloat16))
        biases.append(jnp.concatenate([p["b_off"], p["b_msk"]]).astype(jnp.float32))
        specs.append((k, 3 * k * k, k * k))
    gen = inception_conv(a, weights, jnp.concatenate(biases), specs,
                         N=N, H=H, W=W, C=C, out_dtype=jnp.float32)

    outs, col = [], 0
    for name, k in (("p1", 3), ("p2", 5), ("p3", 7)):
        kk = k * k
        om = gen[:, col:col + 3 * kk]
        col += 3 * kk
        offset = om[:, :2 * kk].reshape(N, H, W, 2 * kk)
        mask = om[:, 2 * kk:].reshape(N, H, W, kk)
        dcols = deformable_im2col(x_nhwc, offset, mask, k, (k - 1) // 2)
        w_dcn = _conv_weight_to_gemm(params[name]["w_dcn"]).astype(jnp.bfloat16)
        outs.append(pallas_matmul(dcols, w_dcn, out_dtype=jnp.float32))
    out = jnp.concatenate(outs, axis=-1)
    return out.reshape(N, H, W, 3 * out_ch)


# ----------------------------------------------------------------------------
# Module forward, params, pure-JAX reference
# ----------------------------------------------------------------------------
def deformable_inception_forward(x_nchw, params, *, offset_mask_zero_init=True):
    x_nhwc = jnp.transpose(x_nchw, (0, 2, 3, 1))
    if offset_mask_zero_init:
        out = fused_inception_forward(x_nhwc, params)
    else:
        out = general_inception_forward(x_nhwc, params)
    # TODO(synk): keep NHWC through the surrounding model (or write the
    # transposed layout from the out_spec) to avoid this extra HBM pass.
    return jnp.transpose(out, (0, 3, 1, 2))       # -> NCHW (PyTorch convention)


def init_params(key, in_ch, out_ch):
    params = {}
    for name, k in (("p1", 3), ("p2", 5), ("p3", 7)):
        key, sk = jax.random.split(key)
        fan_in = in_ch * k * k
        params[name] = dict(
            w_off=jnp.zeros((2 * k * k, in_ch, k, k), jnp.float32),  # zero init (spec)
            b_off=jnp.zeros((2 * k * k,), jnp.float32),
            w_msk=jnp.zeros((k * k, in_ch, k, k), jnp.float32),
            b_msk=jnp.zeros((k * k,), jnp.float32),
            w_dcn=jax.random.normal(sk, (out_ch, in_ch, k, k),
                                    jnp.float32) * (1.0 / fan_in) ** 0.5,
        )
    return params


def reference_forward(x_nchw, params):
    """f32 reference of the module-as-specified semantics (0.5 * conv, no bias)."""
    outs = []
    for name, k, pad in (("p1", 3, 1), ("p2", 5, 2), ("p3", 7, 3)):
        o = jax.lax.conv_general_dilated(
            x_nchw, params[name]["w_dcn"], window_strides=(1, 1),
            padding=((pad, pad), (pad, pad)),
            dimension_numbers=("NCHW", "OIHW", "NCHW"),
            precision=jax.lax.Precision.HIGHEST)
        outs.append(0.5 * o)
    return jnp.concatenate(outs, axis=1)


if __name__ == "__main__":
    key = jax.random.PRNGKey(0)
    k_x, k_p = jax.random.split(key)

    N, C_in, H, W = 2, 4, 16, 16
    C_out = 8
    x = jax.random.normal(k_x, (N, C_in, H, W), jnp.float32)
    params = init_params(k_p, C_in, C_out)

    # Module-as-specified forward (zero-init offset/mask generators) -> one
    # fused Pallas conv kernel for all three branches.
    fwd = jax.jit(functools.partial(deformable_inception_forward,
                                    offset_mask_zero_init=True))
    out = fwd(x, params)
    jax.block_until_ready(out)
    assert out.shape == (N, 3 * C_out, H, W), out.shape

    ref = reference_forward(x, params)
    err = float(jnp.max(jnp.abs(out.astype(jnp.float32) - ref)))
    assert err < 5e-2, f"fast path vs reference max abs err {err}"

    # General (trainable offset/mask) path; with zero generator weights it must
    # reproduce the fast path.
    fwd_gen = jax.jit(functools.partial(deformable_inception_forward,
                                        offset_mask_zero_init=False))
    out_gen = fwd_gen(x, params)
    jax.block_until_ready(out_gen)
    err_gen = float(jnp.max(jnp.abs(out_gen - out.astype(jnp.float32))))
    assert err_gen < 5e-2, f"general path vs fast path max abs err {err_gen}"

    print("KERNEL_OK")
</pallas_src>

<mosaic_0001>
module attributes {stable_mosaic.version = 11 : i64} {
  func.func @_inception_conv_kernel(%arg0: i32, %arg1: memref<352x28xbf16, #tpu.memory_space<vmem>>, %arg2: memref<36x8xbf16, #tpu.memory_space<vmem>>, %arg3: memref<100x8xbf16, #tpu.memory_space<vmem>>, %arg4: memref<196x8xbf16, #tpu.memory_space<vmem>>, %arg5: memref<1x24xf32, #tpu.memory_space<vmem>>, %arg6: memref<256x24xbf16, #tpu.memory_space<vmem>>) attributes {dimension_semantics = [#tpu.dimension_semantics<parallel>], iteration_bounds = array<i64: 2>, scalar_prefetch = 0 : i64, scratch_operands = 0 : i64, tpu.core_type = #tpu.core_type<tc>, window_params = [{transform_indices = @transform_0, window_bounds = array<i64: 352, 28>}, {pipeline_mode = #tpu.pipeline_mode<synchronous>, transform_indices = @transform_1, window_bounds = array<i64: 36, 8>}, {pipeline_mode = #tpu.pipeline_mode<synchronous>, transform_indices = @transform_2, window_bounds = array<i64: 100, 8>}, {pipeline_mode = #tpu.pipeline_mode<synchronous>, transform_indices = @transform_3, window_bounds = array<i64: 196, 8>}, {pipeline_mode = #tpu.pipeline_mode<synchronous>, transform_indices = @transform_4, window_bounds = array<i64: 1, 24>}, {transform_indices = @transform_5, window_bounds = array<i64: 256, 24>}]} {
    %c32 = arith.constant 32 : index
    %c8 = arith.constant 8 : index
    %0 = vector.load %arg1[%c32, %c8] : memref<352x28xbf16, #tpu.memory_space<vmem>>, vector<256x12xbf16>
    %c0 = arith.constant 0 : index
    %c0_0 = arith.constant 0 : index
    %1 = vector.load %arg2[%c0, %c0_0] : memref<36x8xbf16, #tpu.memory_space<vmem>>, vector<12x8xbf16>
    %cst = arith.constant dense<0.000000e+00> : vector<256x8xf32>
    %2 = tpu.matmul %0, %1, %cst {dimension_numbers = #tpu.dot_dimension_numbers<[1], [0], [0], [1], [0, 0, 1, 1], [], []>} : vector<256x12xbf16>, vector<12x8xbf16>, vector<256x8xf32> -> vector<256x8xf32>
    %c48 = arith.constant 48 : index
    %c8_1 = arith.constant 8 : index
    %3 = vector.load %arg1[%c48, %c8_1] : memref<352x28xbf16, #tpu.memory_space<vmem>>, vector<256x12xbf16>
    %c12 = arith.constant 12 : index
    %c0_2 = arith.constant 0 : index
    %4 = vector.load %arg2[%c12, %c0_2] : memref<36x8xbf16, #tpu.memory_space<vmem>>, vector<12x8xbf16>
    %cst_3 = arith.constant dense<0.000000e+00> : vector<256x8xf32>
    %5 = tpu.matmul %3, %4, %cst_3 {dimension_numbers = #tpu.dot_dimension_numbers<[1], [0], [0], [1], [0, 0, 1, 1], [], []>} : vector<256x12xbf16>, vector<12x8xbf16>, vector<256x8xf32> -> vector<256x8xf32>
    %6 = arith.addf %2, %5 : vector<256x8xf32>
    %c64 = arith.constant 64 : index
    %c8_4 = arith.constant 8 : index
    %7 = vector.load %arg1[%c64, %c8_4] : memref<352x28xbf16, #tpu.memory_space<vmem>>, vector<256x12xbf16>
    %c24 = arith.constant 24 : index
    %c0_5 = arith.constant 0 : index
    %8 = vector.load %arg2[%c24, %c0_5] : memref<36x8xbf16, #tpu.memory_space<vmem>>, vector<12x8xbf16>
    %cst_6 = arith.constant dense<0.000000e+00> : vector<256x8xf32>
    %9 = tpu.matmul %7, %8, %cst_6 {dimension_numbers = #tpu.dot_dimension_numbers<[1], [0], [0], [1], [0, 0, 1, 1], [], []>} : vector<256x12xbf16>, vector<12x8xbf16>, vector<256x8xf32> -> vector<256x8xf32>
    %10 = arith.addf %6, %9 : vector<256x8xf32>
    %c0_7 = arith.constant 0 : index
    %c0_8 = arith.constant 0 : index
    %11 = vector.load %arg5[%c0_7, %c0_8] : memref<1x24xf32, #tpu.memory_space<vmem>>, vector<1x8xf32>
    %12 = vector.broadcast %11 : vector<1x8xf32> to vector<256x8xf32>
    %13 = arith.addf %10, %12 : vector<256x8xf32>
    %14 = arith.truncf %13 : vector<256x8xf32> to vector<256x8xbf16>
    %c0_9 = arith.constant 0 : index
    %c0_10 = arith.constant 0 : index
    %15 = vector.load %arg6[%c0_9, %c0_10] : memref<256x24xbf16, #tpu.memory_space<vmem>>, vector<256x8xbf16>
    tpu.vector_store %arg6[%c0_9, %c0_10], %14 {strides = array<i32>} : memref<256x24xbf16, #tpu.memory_space<vmem>>, vector<256x8xbf16>,
    %c16 = arith.constant 16 : index
    %c4 = arith.constant 4 : index
    %16 = vector.load %arg1[%c16, %c4] : memref<352x28xbf16, #tpu.memory_space<vmem>>, vector<256x20xbf16>
    %c0_11 = arith.constant 0 : index
    %c0_12 = arith.constant 0 : index
    %17 = vector.load %arg3[%c0_11, %c0_12] : memref<100x8xbf16, #tpu.memory_space<vmem>>, vector<20x8xbf16>
    %cst_13 = arith.constant dense<0.000000e+00> : vector<256x8xf32>
    %18 = tpu.matmul %16, %17, %cst_13 {dimension_numbers = #tpu.dot_dimension_numbers<[1], [0], [0], [1], [0, 0, 1, 1], [], []>} : vector<256x20xbf16>, vector<20x8xbf16>, vector<256x8xf32> -> vector<256x8xf32>
    %c32_14 = arith.constant 32 : index
    %c4_15 = arith.constant 4 : index
    %19 = vector.load %arg1[%c32_14, %c4_15] : memref<352x28xbf16, #tpu.memory_space<vmem>>, vector<256x20xbf16>
    %c20 = arith.constant 20 : index
    %c0_16 = arith.constant 0 : index
    %20 = vector.load %arg3[%c20, %c0_16] : memref<100x8xbf16, #tpu.memory_space<vmem>>, vector<20x8xbf16>
    %cst_17 = arith.constant dense<0.000000e+00> : vector<256x8xf32>
    %21 = tpu.matmul %19, %20, %cst_17 {dimension_numbers = #tpu.dot_dimension_numbers<[1], [0], [0], [1], [0, 0, 1, 1], [], []>} : vector<256x20xbf16>, vector<20x8xbf16>, vector<256x8xf32> -> vector<256x8xf32>
    %22 = arith.addf %18, %21 : vector<256x8xf32>
    %c48_18 = arith.constant 48 : index
    %c4_19 = arith.constant 4 : index
    %23 = vector.load %arg1[%c48_18, %c4_19] : memref<352x28xbf16, #tpu.memory_space<vmem>>, vector<256x20xbf16>
    %c40 = arith.constant 40 : index
    %c0_20 = arith.constant 0 : index
    %24 = vector.load %arg3[%c40, %c0_20] : memref<100x8xbf16, #tpu.memory_space<vmem>>, vector<20x8xbf16>
    %cst_21 = arith.constant dense<0.000000e+00> : vector<256x8xf32>
    %25 = tpu.matmul %23, %24, %cst_21 {dimension_numbers = #tpu.dot_dimension_numbers<[1], [0], [0], [1], [0, 0, 1, 1], [], []>} : vector<256x20xbf16>, vector<20x8xbf16>, vector<256x8xf32> -> vector<256x8xf32>
    %26 = arith.addf %22, %25 : vector<256x8xf32>
    %c64_22 = arith.constant 64 : index
    %c4_23 = arith.constant 4 : index
    %27 = vector.load %arg1[%c64_22, %c4_23] : memref<352x28xbf16, #tpu.memory_space<vmem>>, vector<256x20xbf16>
    %c60 = arith.constant 60 : index
    %c0_24 = arith.constant 0 : index
    %28 = vector.load %arg3[%c60, %c0_24] : memref<100x8xbf16, #tpu.memory_space<vmem>>, vector<20x8xbf16>
    %cst_25 = arith.constant dense<0.000000e+00> : vector<256x8xf32>
    %29 = tpu.matmul %27, %28, %cst_25 {dimension_numbers = #tpu.dot_dimension_numbers<[1], [0], [0], [1], [0, 0, 1, 1], [], []>} : vector<256x20xbf16>, vector<20x8xbf16>, vector<256x8xf32> -> vector<256x8xf32>
    %30 = arith.addf %26, %29 : vector<256x8xf32>
    %c80 = arith.constant 80 : index
    %c4_26 = arith.constant 4 : index
    %31 = vector.load %arg1[%c80, %c4_26] : memref<352x28xbf16, #tpu.memory_space<vmem>>, vector<256x20xbf16>
    %c80_27 = arith.constant 80 : index
    %c0_28 = arith.constant 0 : index
    %32 = vector.load %arg3[%c80_27, %c0_28] : memref<100x8xbf16, #tpu.memory_space<vmem>>, vector<20x8xbf16>
    %cst_29 = arith.constant dense<0.000000e+00> : vector<256x8xf32>
    %33 = tpu.matmul %31, %32, %cst_29 {dimension_numbers = #tpu.dot_dimension_numbers<[1], [0], [0], [1], [0, 0, 1, 1], [], []>} : vector<256x20xbf16>, vector<20x8xbf16>, vector<256x8xf32> -> vector<256x8xf32>
    %34 = arith.addf %30, %33 : vector<256x8xf32>
    %c0_30 = arith.constant 0 : index
    %c8_31 = arith.constant 8 : index
    %35 = vector.load %arg5[%c0_30, %c8_31] : memref<1x24xf32, #tpu.memory_space<vmem>>, vector<1x8xf32>
    %36 = vector.broadcast %35 : vector<1x8xf32> to vector<256x8xf32>
    %37 = arith.addf %34, %36 : vector<256x8xf32>
    %38 = arith.truncf %37 : vector<256x8xf32> to vector<256x8xbf16>
    %c0_32 = arith.constant 0 : index
    %c8_33 = arith.constant 8 : index
    %39 = vector.load %arg6[%c0_32, %c8_33] : memref<256x24xbf16, #tpu.memory_space<vmem>>, vector<256x8xbf16>
    tpu.vector_store %arg6[%c0_32, %c8_33], %38 {strides = array<i32>} : memref<256x24xbf16, #tpu.memory_space<vmem>>, vector<256x8xbf16>,
    %c0_34 = arith.constant 0 : index
    %c0_35 = arith.constant 0 : index
    %40 = vector.load %arg1[%c0_34, %c0_35] : memref<352x28xbf16, #tpu.memory_space<vmem>>, vector<256x28xbf16>
    %c0_36 = arith.constant 0 : index
    %c0_37 = arith.constant 0 : index
    %41 = vector.load %arg4[%c0_36, %c0_37] : memref<196x8xbf16, #tpu.memory_space<vmem>>, vector<28x8xbf16>
    %cst_38 = arith.constant dense<0.000000e+00> : vector<256x8xf32>
    %42 = tpu.matmul %40, %41, %cst_38 {dimension_numbers = #tpu.dot_dimension_numbers<[1], [0], [0], [1], [0, 0, 1, 1], [], []>} : vector<256x28xbf16>, vector<28x8xbf16>, vector<256x8xf32> -> vector<256x8xf32>
    %c16_39 = arith.constant 16 : index
    %c0_40 = arith.constant 0 : index
    %43 = vector.load %arg1[%c16_39, %c0_40] : memref<352x28xbf16, #tpu.memory_space<vmem>>, vector<256x28xbf16>
    %c28 = arith.constant 28 : index
    %c0_41 = arith.constant 0 : index
    %44 = vector.load %arg4[%c28, %c0_41] : memref<196x8xbf16, #tpu.memory_space<vmem>>, vector<28x8xbf16>
    %cst_42 = arith.constant dense<0.000000e+00> : vector<256x8xf32>
    %45 = tpu.matmul %43, %44, %cst_42 {dimension_numbers = #tpu.dot_dimension_numbers<[1], [0], [0], [1], [0, 0, 1, 1], [], []>} : vector<256x28xbf16>, vector<28x8xbf16>, vector<256x8xf32> -> vector<256x8xf32>
    %46 = arith.addf %42, %45 : vector<256x8xf32>
    %c32_43 = arith.constant 32 : index
    %c0_44 = arith.constant 0 : index
    %47 = vector.load %arg1[%c32_43, %c0_44] : memref<352x28xbf16, #tpu.memory_space<vmem>>, vector<256x28xbf16>
    %c56 = arith.constant 56 : index
    %c0_45 = arith.constant 0 : index
    %48 = vector.load %arg4[%c56, %c0_45] : memref<196x8xbf16, #tpu.memory_space<vmem>>, vector<28x8xbf16>
    %cst_46 = arith.constant dense<0.000000e+00> : vector<256x8xf32>
    %49 = tpu.matmul %47, %48, %cst_46 {dimension_numbers = #tpu.dot_dimension_numbers<[1], [0], [0], [1], [0, 0, 1, 1], [], []>} : vector<256x28xbf16>, vector<28x8xbf16>, vector<256x8xf32> -> vector<256x8xf32>
    %50 = arith.addf %46, %49 : vector<256x8xf32>
    %c48_47 = arith.constant 48 : index
    %c0_48 = arith.constant 0 : index
    %51 = vector.load %arg1[%c48_47, %c0_48] : memref<352x28xbf16, #tpu.memory_space<vmem>>, vector<256x28xbf16>
    %c84 = arith.constant 84 : index
    %c0_49 = arith.constant 0 : index
    %52 = vector.load %arg4[%c84, %c0_49] : memref<196x8xbf16, #tpu.memory_space<vmem>>, vector<28x8xbf16>
    %cst_50 = arith.constant dense<0.000000e+00> : vector<256x8xf32>
    %53 = tpu.matmul %51, %52, %cst_50 {dimension_numbers = #tpu.dot_dimension_numbers<[1], [0], [0], [1], [0, 0, 1, 1], [], []>} : vector<256x28xbf16>, vector<28x8xbf16>, vector<256x8xf32> -> vector<256x8xf32>
    %54 = arith.addf %50, %53 : vector<256x8xf32>
    %c64_51 = arith.constant 64 : index
    %c0_52 = arith.constant 0 : index
    %55 = vector.load %arg1[%c64_51, %c0_52] : memref<352x28xbf16, #tpu.memory_space<vmem>>, vector<256x28xbf16>
    %c112 = arith.constant 112 : index
    %c0_53 = arith.constant 0 : index
    %56 = vector.load %arg4[%c112, %c0_53] : memref<196x8xbf16, #tpu.memory_space<vmem>>, vector<28x8xbf16>
    %cst_54 = arith.constant dense<0.000000e+00> : vector<256x8xf32>
    %57 = tpu.matmul %55, %56, %cst_54 {dimension_numbers = #tpu.dot_dimension_numbers<[1], [0], [0], [1], [0, 0, 1, 1], [], []>} : vector<256x28xbf16>, vector<28x8xbf16>, vector<256x8xf32> -> vector<256x8xf32>
    %58 = arith.addf %54, %57 : vector<256x8xf32>
    %c80_55 = arith.constant 80 : index
    %c0_56 = arith.constant 0 : index
    %59 = vector.load %arg1[%c80_55, %c0_56] : memref<352x28xbf16, #tpu.memory_space<vmem>>, vector<256x28xbf16>
    %c140 = arith.constant 140 : index
    %c0_57 = arith.constant 0 : index
    %60 = vector.load %arg4[%c140, %c0_57] : memref<196x8xbf16, #tpu.memory_space<vmem>>, vector<28x8xbf16>
    %cst_58 = arith.constant dense<0.000000e+00> : vector<256x8xf32>
    %61 = tpu.matmul %59, %60, %cst_58 {dimension_numbers = #tpu.dot_dimension_numbers<[1], [0], [0], [1], [0, 0, 1, 1], [], []>} : vector<256x28xbf16>, vector<28x8xbf16>, vector<256x8xf32> -> vector<256x8xf32>
    %62 = arith.addf %58, %61 : vector<256x8xf32>
    %c96 = arith.constant 96 : index
    %c0_59 = arith.constant 0 : index
    %63 = vector.load %arg1[%c96, %c0_59] : memref<352x28xbf16, #tpu.memory_space<vmem>>, vector<256x28xbf16>
    %c168 = arith.constant 168 : index
    %c0_60 = arith.constant 0 : index
    %64 = vector.load %arg4[%c168, %c0_60] : memref<196x8xbf16, #tpu.memory_space<vmem>>, vector<28x8xbf16>
    %cst_61 = arith.constant dense<0.000000e+00> : vector<256x8xf32>
    %65 = tpu.matmul %63, %64, %cst_61 {dimension_numbers = #tpu.dot_dimension_numbers<[1], [0], [0], [1], [0, 0, 1, 1], [], []>} : vector<256x28xbf16>, vector<28x8xbf16>, vector<256x8xf32> -> vector<256x8xf32>
    %66 = arith.addf %62, %65 : vector<256x8xf32>
    %c0_62 = arith.constant 0 : index
    %c16_63 = arith.constant 16 : index
    %67 = vector.load %arg5[%c0_62, %c16_63] : memref<1x24xf32, #tpu.memory_space<vmem>>, vector<1x8xf32>
    %68 = vector.broadcast %67 : vector<1x8xf32> to vector<256x8xf32>
    %69 = arith.addf %66, %68 : vector<256x8xf32>
    %70 = arith.truncf %69 : vector<256x8xf32> to vector<256x8xbf16>
    %c0_64 = arith.constant 0 : index
    %c16_65 = arith.constant 16 : index
    %71 = vector.load %arg6[%c0_64, %c16_65] : memref<256x24xbf16, #tpu.memory_space<vmem>>, vector<256x8xbf16>
    tpu.vector_store %arg6[%c0_64, %c16_65], %70 {strides = array<i32>} : memref<256x24xbf16, #tpu.memory_space<vmem>>, vector<256x8xbf16>,
    return
  }
  func.func @transform_0(%arg0: i32) -> (i32, i32) {
    %c0_i32 = arith.constant 0 : i32
    %c0_i32_0 = arith.constant 0 : i32
    return %arg0, %c0_i32 : i32, i32
  }
  func.func @transform_1(%arg0: i32) -> (i32, i32) {
    %c0_i32 = arith.constant 0 : i32
    %c0_i32_0 = arith.constant 0 : i32
    %c0_i32_1 = arith.constant 0 : i32
    return %c0_i32, %c0_i32_0 : i32, i32
  }
  func.func @transform_2(%arg0: i32) -> (i32, i32) {
    %c0_i32 = arith.constant 0 : i32
    %c0_i32_0 = arith.constant 0 : i32
    %c0_i32_1 = arith.constant 0 : i32
    return %c0_i32, %c0_i32_0 : i32, i32
  }
  func.func @transform_3(%arg0: i32) -> (i32, i32) {
    %c0_i32 = arith.constant 0 : i32
    %c0_i32_0 = arith.constant 0 : i32
    %c0_i32_1 = arith.constant 0 : i32
    return %c0_i32, %c0_i32_0 : i32, i32
  }
  func.func @transform_4(%arg0: i32) -> (i32, i32) {
    %c0_i32 = arith.constant 0 : i32
    %c0_i32_0 = arith.constant 0 : i32
    %c0_i32_1 = arith.constant 0 : i32
    return %c0_i32, %c0_i32_0 : i32, i32
  }
  func.func @transform_5(%arg0: i32) -> (i32, i32) {
    %c0_i32 = arith.constant 0 : i32
    %c0_i32_0 = arith.constant 0 : i32
    return %arg0, %c0_i32 : i32, i32
  }
}

</mosaic_0001>

<llo_original>
// kernel: deformable_inception_forward.1
$region0: #{deformable_inception_forward.1}
  #allocation0 [shape = 'u32[]', space=smem, size = 0x4, offset = 0x4, fixed_abs, tag = 'smem constant byte address 0x4 - core index']
  #allocation1 [shape = 'u32[72,128]{1,0:T(1,128)}', space=vmem, size = 0x9000, scoped, tag = 'internal scratch']
  %s0 = inlined_call_operand.vmem [shape: bf16[704,28], index: 0, kind: input, shape index: {}]
  %s1 = inlined_call_operand.vmem [shape: bf16[36,8], index: 1, kind: input, shape index: {}]
  %s2 = inlined_call_operand.vmem [shape: bf16[100,8], index: 2, kind: input, shape index: {}]
  %s3 = inlined_call_operand.vmem [shape: bf16[196,8], index: 3, kind: input, shape index: {}]
  %s4 = inlined_call_operand.vmem [shape: f32[1,24], index: 4, kind: input, shape index: {}]
  %s5 = inlined_call_operand.hbm [shape: bf16[512,24], index: 5, kind: output, shape index: {}]
  %s6 = sld [smem:[#allocation0]]
  $region53: #{deformable_inception_forward.1} parent=0
    _
  %s8 = ssub.s32 1, %s6
  %s9 = scalar_select 0, %s8, %s6
  $region1: #{deformable_inception_forward.1} parent=0
    #allocation2 [shape = 'u8[131072]{0}', space=vmem, size = 0x20000, scoped, tag = 'output window, operand 0']
    #allocation3 [shape = 's32[2]{0}', space=sflag, size = 0x8, scoped, tag = 'scoped memory for deformable_inception_forward.1']
    %10 = vsyncpa [#allocation3], 0
    %s11 = scalar_lea.sflag [#allocation3], 1
    %12 = vsyncpa %s11, 0
    loop: start=0, step=1, limit=4
    $region2: #{deformable_inception_forward.1} parent=1 // loop_pre_header
      _
    $region3: #{deformable_inception_forward.1} parent=1 // loop_header
      %s14 = sphi 0, %s18
      %p15 = scmp.ge.s32.totalorder %s14, 4
      %s24 = sphi 0, %s26
      %s27 = sphi 0, %s24
      %s28 = sphi 0, %s27
      %s44 = sphi 0, %s28
      %s48 = sphi 0, %s48
      %s50 = sphi 0, %s48
      %s51 = sphi 0, %s50
      %s65 = sphi 0, %s51
      %s69 = sphi 0, %s69
      %s71 = sphi 0, %s69
      %s72 = sphi 0, %s71
      %s86 = sphi 0, %s72
      %s90 = sphi 0, %s90
      %s92 = sphi 0, %s90
      %s93 = sphi 0, %s92
      %s107 = sphi 0, %s93
      %s111 = sphi 0, %s111
      %s113 = sphi 0, %s111
      %s114 = sphi 0, %s113
      %s128 = sphi 0, %s114
      %s134 = sphi 0, %s136
      %s137 = sphi 0, %s134
      %s138 = sphi 0, %s137
      %s154 = sphi 0, %s138
    $region4: #{deformable_inception_forward.1} parent=1 // loop_header_branch
      %17 = sbr.rel (%p15) target = $region8
    $region5: #{deformable_inception_forward.1} parent=1 // loop_body
      %s19 = ssub.s32 %s14, 1
      %s20 = ssub.s32 %s14, 2
      %s21 = sadd.s32 %s14, 1
      %s22 = ssub.s32 %s14, %s21
      %p23 = scmp.eq.s32.totalorder %s22, 0
      %s25 = sadd.s32 %s24, 1
      %s26 = scalar_select %p23, %s24, %s25
      %p29 = pneg %p23
      %p30 = scmp.eq.s32.totalorder %s14, 1
      %p31 = por %p29, %p30
      %p32 = scmp.ne.s32.totalorder %s24, %s27
      %p33 = scmp.eq.s32.totalorder %s14, 0
      %p34 = por %p32, %p33
      %p35 = scmp.ne.s32.totalorder %s24, %s27
      %p36 = scmp.eq.s32.totalorder %s19, 1
      %p37 = por %p35, %p36
      %p38 = scmp.ne.s32.totalorder %s27, %s28
      %p39 = scmp.eq.s32.totalorder %s19, 0
      %p40 = por %p38, %p39
      %p41 = scmp.ne.s32.totalorder %s27, %s28
      %p42 = scmp.eq.s32.totalorder %s20, 1
      %p43 = por %p41, %p42
      %p45 = scmp.ne.s32.totalorder %s28, %s44
      %p46 = scmp.eq.s32.totalorder %s20, 0
      %p47 = por %p45, %p46
      %s49 = sadd.s32 %s48, 1
      %p52 = scmp.eq.s32.totalorder %s14, 1
      %p53 = scmp.ne.s32.totalorder %s48, %s50
      %p54 = scmp.eq.s32.totalorder %s14, 0
      %p55 = por %p53, %p54
      %p56 = scmp.ne.s32.totalorder %s48, %s50
      %p57 = scmp.eq.s32.totalorder %s19, 1
      %p58 = por %p56, %p57
      %p59 = scmp.ne.s32.totalorder %s50, %s51
      %p60 = scmp.eq.s32.totalorder %s19, 0
      %p61 = por %p59, %p60
      %p62 = scmp.ne.s32.totalorder %s50, %s51
      %p63 = scmp.eq.s32.totalorder %s20, 1
      %p64 = por %p62, %p63
      %p66 = scmp.ne.s32.totalorder %s51, %s65
      %p67 = scmp.eq.s32.totalorder %s20, 0
      %p68 = por %p66, %p67
      %s70 = sadd.s32 %s69, 1
      %p73 = scmp.eq.s32.totalorder %s14, 1
      %p74 = scmp.ne.s32.totalorder %s69, %s71
      %p75 = scmp.eq.s32.totalorder %s14, 0
      %p76 = por %p74, %p75
      %p77 = scmp.ne.s32.totalorder %s69, %s71
      %p78 = scmp.eq.s32.totalorder %s19, 1
      %p79 = por %p77, %p78
      %p80 = scmp.ne.s32.totalorder %s71, %s72
      %p81 = scmp.eq.s32.totalorder %s19, 0
      %p82 = por %p80, %p81
      %p83 = scmp.ne.s32.totalorder %s71, %s72
      %p84 = scmp.eq.s32.totalorder %s20, 1
      %p85 = por %p83, %p84
      %p87 = scmp.ne.s32.totalorder %s72, %s86
      %p88 = scmp.eq.s32.totalorder %s20, 0
      %p89 = por %p87, %p88
      %s91 = sadd.s32 %s90, 1
      %p94 = scmp.eq.s32.totalorder %s14, 1
      %p95 = scmp.ne.s32.totalorder %s90, %s92
      %p96 = scmp.eq.s32.totalorder %s14, 0
      %p97 = por %p95, %p96
      %p98 = scmp.ne.s32.totalorder %s90, %s92
      %p99 = scmp.eq.s32.totalorder %s19, 1
      %p100 = por %p98, %p99
      %p101 = scmp.ne.s32.totalorder %s92, %s93
      %p102 = scmp.eq.s32.totalorder %s19, 0
      %p103 = por %p101, %p102
      %p104 = scmp.ne.s32.totalorder %s92, %s93
      %p105 = scmp.eq.s32.totalorder %s20, 1
      %p106 = por %p104, %p105
      %p108 = scmp.ne.s32.totalorder %s93, %s107
      %p109 = scmp.eq.s32.totalorder %s20, 0
      %p110 = por %p108, %p109
      %s112 = sadd.s32 %s111, 1
      %p115 = scmp.eq.s32.totalorder %s14, 1
      %p116 = scmp.ne.s32.totalorder %s111, %s113
      %p117 = scmp.eq.s32.totalorder %s14, 0
      %p118 = por %p116, %p117
      %p119 = scmp.ne.s32.totalorder %s111, %s113
      %p120 = scmp.eq.s32.totalorder %s19, 1
      %p121 = por %p119, %p120
      %p122 = scmp.ne.s32.totalorder %s113, %s114
      %p123 = scmp.eq.s32.totalorder %s19, 0
      %p124 = por %p122, %p123
      %p125 = scmp.ne.s32.totalorder %s113, %s114
      %p126 = scmp.eq.s32.totalorder %s20, 1
      %p127 = por %p125, %p126
      %p129 = scmp.ne.s32.totalorder %s114, %s128
      %p130 = scmp.eq.s32.totalorder %s20, 0
      %p131 = por %p129, %p130
      %s132 = ssub.s32 %s14, %s21
      %p133 = scmp.eq.s32.totalorder %s132, 0
      %s135 = sadd.s32 %s134, 1
      %s136 = scalar_select %p133, %s134, %s135
      %p139 = pneg %p133
      %p140 = scmp.eq.s32.totalorder %s14, 1
      %p141 = por %p139, %p140
      %p142 = scmp.ne.s32.totalorder %s134, %s137
      %p143 = scmp.eq.s32.totalorder %s14, 0
      %p144 = por %p142, %p143
      %p145 = scmp.ne.s32.totalorder %s134, %s137
      %p146 = scmp.eq.s32.totalorder %s19, 1
      %p147 = por %p145, %p146
      %p148 = scmp.ne.s32.totalorder %s137, %s138
      %p149 = scmp.eq.s32.totalorder %s19, 0
      %p150 = por %p148, %p149
      %p151 = scmp.ne.s32.totalorder %s137, %s138
      %p152 = scmp.eq.s32.totalorder %s20, 1
      %p153 = por %p151, %p152
      %p155 = scmp.ne.s32.totalorder %s138, %s154
      %p156 = scmp.eq.s32.totalorder %s20, 0
      %p157 = por %p155, %p156
      %p158 = scmp.le.s32.totalorder 1, %s14
      %p159 = scmp.lt.s32.totalorder %s14, 3
      %p160 = pnand %p158, %p159
      %p161 = pneg %p160
      // Predicated region
      $region9: #{deformable_inception_forward.1} parent=5 // pred_check
        _
      $region10: #{deformable_inception_forward.1} parent=5 // pred_check_branch
        %163 = sbr.rel (%p160) target = $region12
      $region11: #{deformable_inception_forward.1} parent=5 // pred_region
        %s164 = ssub.s32 %s14, 1
        // Predicated region
        $region13: #{deformable_inception_forward.1} parent=11 // pred_check
          %p165 = pneg %p61
        $region14: #{deformable_inception_forward.1} parent=11 // pred_check_branch
          %167 = sbr.rel (%p165) target = $region16
        $region15: #{deformable_inception_forward.1} parent=11 // pred_region
          _
        $region16: #{deformable_inception_forward.1} parent=11 // pred_fallthru
          _
        // Predicated region
        $region17: #{deformable_inception_forward.1} parent=11 // pred_check
          %p168 = pneg %p82
        $region18: #{deformable_inception_forward.1} parent=11 // pred_check_branch
          %170 = sbr.rel (%p168) target = $region20
        $region19: #{deformable_inception_forward.1} parent=11 // pred_region
          _
        $region20: #{deformable_inception_forward.1} parent=11 // pred_fallthru
          _
        // Predicated region
        $region21: #{deformable_inception_forward.1} parent=11 // pred_check
          %p171 = pneg %p103
        $region22: #{deformable_inception_forward.1} parent=11 // pred_check_branch
          %173 = sbr.rel (%p171) target = $region24
        $region23: #{deformable_inception_forward.1} parent=11 // pred_region
          _
        $region24: #{deformable_inception_forward.1} parent=11 // pred_fallthru
          _
        // Predicated region
        $region25: #{deformable_inception_forward.1} parent=11 // pred_check
          %p174 = pneg %p124
        $region26: #{deformable_inception_forward.1} parent=11 // pred_check_branch
          %176 = sbr.rel (%p174) target = $region28
        $region27: #{deformable_inception_forward.1} parent=11 // pred_region
          _
        $region28: #{deformable_inception_forward.1} parent=11 // pred_fallthru
          _
      $region12: #{deformable_inception_forward.1} parent=5 // pred_fallthru
        _
      %p177 = scmp.lt.s32.totalorder %s14, 2
      // Predicated region
      $region29: #{deformable_inception_forward.1} parent=5 // pred_check
        %p178 = pneg %p177
      $region30: #{deformable_inception_forward.1} parent=5 // pred_check_branch
        %180 = sbr.rel (%p178) target = $region32
      $region31: #{deformable_inception_forward.1} parent=5 // pred_region
        // Predicated region
        $region33: #{deformable_inception_forward.1} parent=31 // pred_check
          %p181 = pneg %p34
        $region34: #{deformable_inception_forward.1} parent=31 // pred_check_branch
          %183 = sbr.rel (%p181) target = $region36
        $region35: #{deformable_inception_forward.1} parent=31 // pred_region
          %s184 = smul.u32 44, %s14
          %p185 = scmp.lt.s32.totalorder %s184, 87
          %s186 = scalar_select %p185, %s184, 87
          %s187 = smul.addr %s186, 4
          %s188 = scalar_lea.vmem %s0, %s187
          %s189 = smul.u32 44, %s14
        $region36: #{deformable_inception_forward.1} parent=31 // pred_fallthru
          _
      $region32: #{deformable_inception_forward.1} parent=5 // pred_fallthru
        _
      %p190 = scmp.le.s32.totalorder 1, %s14
      %p191 = scmp.lt.s32.totalorder %s14, 3
      %p192 = pnand %p190, %p191
      %p193 = pneg %p192
      // Predicated region
      $region37: #{deformable_inception_forward.1} parent=5 // pred_check
        _
      $region38: #{deformable_inception_forward.1} parent=5 // pred_check_branch
        %195 = sbr.rel (%p192) target = $region40
      $region39: #{deformable_inception_forward.1} parent=5 // pred_region
        %s196 = ssub.s32 %s14, 1
        %s197 = smul.u32 44, %s19
        %p198 = scmp.lt.s32.totalorder %s197, 87
        %s199 = scalar_select %p198, %s197, 87
        %s200 = smul.addr %s199, 4
        %s201 = scalar_lea.vmem %s0, %s200
        %p202 = pneg %p40
        %p203 = pneg %p37
        %p204 = pneg %p61
        %p205 = pneg %p58
        %p206 = pneg %p82
        %p207 = pneg %p79
        %p208 = pneg %p103
        %p209 = pneg %p100
        %p210 = pneg %p124
        %p211 = pneg %p121
        %p212 = pneg %p150
        %p213 = pneg %p147
        %s214 = sand.u32 %s137, 1
        %s215 = scalar_lea.sflag [#allocation3], %s214
        %s216 = sand.u32 %s137, 1
        %s217 = smul.addr %s216, 128
        %s218 = scalar_lea.vmem [#allocation2], %s217
        %s219 = smul.u32 44, %s19
        %p220 = scmp.lt.s32.totalorder %s219, 87
        %s221 = scalar_select %p220, %s219, 87
        %s222 = smul.addr %s221, 4
        %s223 = scalar_lea.vmem %s0, %s222
        %s224 = smul.u32 44, %s19
        %s225 = smul.u32 32, %s19
        %v227 = vld [vmem:[%s223 + $0x10] sm:$0xf]
        %v228 = vld [vmem:[%s223 + $0x14] sm:$0xf]
        %v229 = vld [vmem:[%s223 + $0x18] sm:$0xf]
        %v230 = vld [vmem:[%s223 + $0x1c] sm:$0xf]
        %v231 = vld [vmem:[%s223 + $0x20] sm:$0xf]
        %v232 = vld [vmem:[%s223 + $0x24] sm:$0xf]
        %v233 = vld [vmem:[%s223 + $0x28] sm:$0xf]
        %v234 = vld [vmem:[%s223 + $0x2c] sm:$0xf]
        %v235 = vld [vmem:[%s223 + $0x30] sm:$0xf]
        %v236 = vld [vmem:[%s223 + $0x34] sm:$0xf]
        %v237 = vld [vmem:[%s223 + $0x38] sm:$0xf]
        %v238 = vld [vmem:[%s223 + $0x3c] sm:$0xf]
        %v239 = vld [vmem:[%s223 + $0x40] sm:$0xf]
        %v240 = vld [vmem:[%s223 + $0x44] sm:$0xf]
        %v241 = vld [vmem:[%s223 + $0x48] sm:$0xf]
        %v242 = vld [vmem:[%s223 + $0x4c] sm:$0xf]
        %v243 = vld [vmem:[%s223 + $0x50] sm:$0xf]
        %v244 = vld [vmem:[%s223 + $0x54] sm:$0xf]
        %v245 = vld [vmem:[%s223 + $0x58] sm:$0xf]
        %v246 = vld [vmem:[%s223 + $0x5c] sm:$0xf]
        %v247 = vld [vmem:[%s223 + $0x60] sm:$0xf]
        %v248 = vld [vmem:[%s223 + $0x64] sm:$0xf]
        %v249 = vld [vmem:[%s223 + $0x68] sm:$0xf]
        %v250 = vld [vmem:[%s223 + $0x6c] sm:$0xf]
        %v251 = vld [vmem:[%s223 + $0x70] sm:$0xf]
        %v252 = vld [vmem:[%s223 + $0x74] sm:$0xf]
        %v253 = vld [vmem:[%s223 + $0x78] sm:$0xf]
        %v254 = vld [vmem:[%s223 + $0x7c] sm:$0xf]
        %v255 = vld [vmem:[%s223 + $0x80] sm:$0xf]
        %v256 = vld [vmem:[%s223 + $0x84] sm:$0xf]
        %v257 = vld [vmem:[%s223 + $0x88] sm:$0xf]
        %v258 = vld [vmem:[%s223 + $0x8c] sm:$0xf]
        %v259 = vld [vmem:[%s1] sm:$0xf]
        %v260 = vld [vmem:[%s1 + $0x4] sm:$0x3]
        %v261 = vld [vmem:[%s223 + $0x90] sm:$0xf]
        %v262 = vld [vmem:[%s223 + $0x94] sm:$0xf]
        %v263 = vld [vmem:[%s1 + $0x4] sm:$0xc]
        %v264 = vld [vmem:[%s1 + $0x8] sm:$0xf]
        %v297 = vunpack.c.l.b16 %v229
        %v298 = vunpack.c.l.b16 %v230
        %v299 = vunpack.c.l.b16 %v231
        %v300 = vunpack.c.l.b16 %v232
        %v301 = vunpack.c.l.b16 %v233
        %v302 = vunpack.c.l.b16 %v234
        %v303 = vunpack.c.l.b16 %v235
        %v304 = vunpack.c.l.b16 %v236
        %v305 = vunpack.c.l.b16 %v237
        %v306 = vunpack.c.l.b16 %v238
        %v307 = vunpack.c.l.b16 %v239
        %v308 = vunpack.c.l.b16 %v240
        %v309 = vunpack.c.l.b16 %v241
        %v310 = vunpack.c.l.b16 %v242
        %v311 = vunpack.c.l.b16 %v243
        %v312 = vunpack.c.l.b16 %v244
        %v313 = vunpack.c.l.b16 %v245
        %v314 = vunpack.c.l.b16 %v246
        %v315 = vunpack.c.l.b16 %v247
        %v316 = vunpack.c.l.b16 %v248
        %v317 = vunpack.c.l.b16 %v249
        %v318 = vunpack.c.l.b16 %v250
        %v319 = vunpack.c.l.b16 %v251
        %v320 = vunpack.c.l.b16 %v252
        %v321 = vunpack.c.l.b16 %v253
        %v322 = vunpack.c.l.b16 %v254
        %v323 = vunpack.c.l.b16 %v255
        %v324 = vunpack.c.l.b16 %v256
        %v325 = vunpack.c.l.b16 %v257
        %v326 = vunpack.c.l.b16 %v258
        %v327 = vunpack.c.l.b16 %v261
        %v328 = vunpack.c.l.b16 %v262
        %v329 = vpack.c.b16 %v298, %v297
        %v330 = vpack.c.b16 %v300, %v299
        %v331 = vpack.c.b16 %v302, %v301
        %v332 = vpack.c.b16 %v304, %v303
        %v333 = vpack.c.b16 %v306, %v305
        %v334 = vpack.c.b16 %v308, %v307
        %v335 = vpack.c.b16 %v310, %v309
        %v336 = vpack.c.b16 %v312, %v311
        %v337 = vpack.c.b16 %v314, %v313
        %v338 = vpack.c.b16 %v316, %v315
        %v339 = vpack.c.b16 %v318, %v317
        %v340 = vpack.c.b16 %v320, %v319
        %v341 = vpack.c.b16 %v322, %v321
        %v342 = vpack.c.b16 %v324, %v323
        %v343 = vpack.c.b16 %v326, %v325
        %v344 = vpack.c.b16 %v328, %v327
        %345 = vrot.lane.b32.xlu0 %v329, 120
        %v346 = vpop.permute.xlu0 %345
        %347 = vrot.lane.b32.xlu0 %v330, 120
        %v348 = vpop.permute.xlu0 %347
        %349 = vrot.lane.b32.xlu0 %v331, 120
        %v350 = vpop.permute.xlu0 %349
        %351 = vrot.lane.b32.xlu0 %v332, 120
        %v352 = vpop.permute.xlu0 %351
        %353 = vrot.lane.b32.xlu0 %v333, 120
        %v354 = vpop.permute.xlu0 %353
        %355 = vrot.lane.b32.xlu0 %v334, 120
        %v356 = vpop.permute.xlu0 %355
        %357 = vrot.lane.b32.xlu0 %v335, 120
        %v358 = vpop.permute.xlu0 %357
        %359 = vrot.lane.b32.xlu0 %v336, 120
        %v360 = vpop.permute.xlu0 %359
        %361 = vrot.lane.b32.xlu0 %v337, 120
        %v362 = vpop.permute.xlu0 %361
        %363 = vrot.lane.b32.xlu0 %v338, 120
        %v364 = vpop.permute.xlu0 %363
        %365 = vrot.lane.b32.xlu0 %v339, 120
        %v366 = vpop.permute.xlu0 %365
        %367 = vrot.lane.b32.xlu0 %v340, 120
        %v368 = vpop.permute.xlu0 %367
        %369 = vrot.lane.b32.xlu0 %v341, 120
        %v370 = vpop.permute.xlu0 %369
        %371 = vrot.lane.b32.xlu0 %v342, 120
        %v372 = vpop.permute.xlu0 %371
        %373 = vrot.lane.b32.xlu0 %v343, 120
        %v374 = vpop.permute.xlu0 %373
        %375 = vrot.lane.b32.xlu0 %v344, 120
        %v376 = vpop.permute.xlu0 %375
        %v379 = vunpack.c.l.b16 %v263
        %v380 = vunpack.c.l.b16 %v264
        %v381 = vpack.c.b16 %v380, %v379
        %v382 = vrot.slane %v381, 2
        %vm383 = vcmask 97280
        %v385 = vsel %vm383, %v346, 0
        %v388 = vsel %vm383, %v348, 0
        %v391 = vsel %vm383, %v350, 0
        %v394 = vsel %vm383, %v352, 0
        %v397 = vsel %vm383, %v354, 0
        %v400 = vsel %vm383, %v356, 0
        %v403 = vsel %vm383, %v358, 0
        %v406 = vsel %vm383, %v360, 0
        %v409 = vsel %vm383, %v362, 0
        %v412 = vsel %vm383, %v364, 0
        %v415 = vsel %vm383, %v366, 0
        %v418 = vsel %vm383, %v368, 0
        %v421 = vsel %vm383, %v370, 0
        %v424 = vsel %vm383, %v372, 0
        %v427 = vsel %vm383, %v374, 0
        %v430 = vsel %vm383, %v376, 0
        %vm432 = vcmask 1045504
        %v434 = vsel %vm432, %v382, 0
        %436 = vmatpush.bf16.msra.mxu0 0
        %437 = vmatpush.bf16.msra.mxu0 0
        %438 = vmatpush.bf16.msra.mxu0 0
        %439 = vmatpush.bf16.msra.mxu0 0
        %440 = vmatpush.bf16.msra.mxu0 0
        %441 = vmatpush.bf16.msra.mxu0 0
        %442 = vmatpush.bf16.msra.mxu0 0
        %443 = vmatpush.bf16.msra.mxu0 %v434
        %444 = vmatmul.bf16.gmra.mxu0 %v385
        %v445 = vpop.f32.mrf.mxu0
        %v446 = vadd.f32 0.0, %v445
        %v447 = vpop.f32.mrf.mxu0
        %v448 = vadd.f32 0.0, %v447
        %449 = vmatmul.bf16.gmra.mxu0 %v388
        %v450 = vpop.f32.mrf.mxu0
        %v451 = vadd.f32 0.0, %v450
        %v452 = vpop.f32.mrf.mxu0
        %v453 = vadd.f32 0.0, %v452
        %454 = vmatmul.bf16.gmra.mxu0 %v391
        %v455 = vpop.f32.mrf.mxu0
        %v456 = vadd.f32 0.0, %v455
        %v457 = vpop.f32.mrf.mxu0
        %v458 = vadd.f32 0.0, %v457
        %459 = vmatmul.bf16.gmra.mxu0 %v394
        %v460 = vpop.f32.mrf.mxu0
        %v461 = vadd.f32 0.0, %v460
        %v462 = vpop.f32.mrf.mxu0
        %v463 = vadd.f32 0.0, %v462
        %464 = vmatmul.bf16.gmra.mxu0 %v397
        %v465 = vpop.f32.mrf.mxu0
        %v466 = vadd.f32 0.0, %v465
        %v467 = vpop.f32.mrf.mxu0
        %v468 = vadd.f32 0.0, %v467
        %469 = vmatmul.bf16.gmra.mxu0 %v400
        %v470 = vpop.f32.mrf.mxu0
        %v471 = vadd.f32 0.0, %v470
        %v472 = vpop.f32.mrf.mxu0
        %v473 = vadd.f32 0.0, %v472
        %474 = vmatmul.bf16.gmra.mxu0 %v403
        %v475 = vpop.f32.mrf.mxu0
        %v476 = vadd.f32 0.0, %v475
        %v477 = vpop.f32.mrf.mxu0
        %v478 = vadd.f32 0.0, %v477
        %479 = vmatmul.bf16.gmra.mxu0 %v406
        %v480 = vpop.f32.mrf.mxu0
        %v481 = vadd.f32 0.0, %v480
        %v482 = vpop.f32.mrf.mxu0
        %v483 = vadd.f32 0.0, %v482
        %484 = vmatmul.bf16.gmra.mxu0 %v409
        %v485 = vpop.f32.mrf.mxu0
        %v486 = vadd.f32 0.0, %v485
        %v487 = vpop.f32.mrf.mxu0
        %v488 = vadd.f32 0.0, %v487
        %489 = vmatmul.bf16.gmra.mxu0 %v412
        %v490 = vpop.f32.mrf.mxu0
        %v491 = vadd.f32 0.0, %v490
        %v492 = vpop.f32.mrf.mxu0
        %v493 = vadd.f32 0.0, %v492
        %494 = vmatmul.bf16.gmra.mxu0 %v415
        %v495 = vpop.f32.mrf.mxu0
        %v496 = vadd.f32 0.0, %v495
        %v497 = vpop.f32.mrf.mxu0
        %v498 = vadd.f32 0.0, %v497
        %499 = vmatmul.bf16.gmra.mxu0 %v418
        %v500 = vpop.f32.mrf.mxu0
        %v501 = vadd.f32 0.0, %v500
        %v502 = vpop.f32.mrf.mxu0
        %v503 = vadd.f32 0.0, %v502
        %504 = vmatmul.bf16.gmra.mxu0 %v421
        %v505 = vpop.f32.mrf.mxu0
        %v506 = vadd.f32 0.0, %v505
        %v507 = vpop.f32.mrf.mxu0
        %v508 = vadd.f32 0.0, %v507
        %509 = vmatmul.bf16.gmra.mxu0 %v424
        %v510 = vpop.f32.mrf.mxu0
        %v511 = vadd.f32 0.0, %v510
        %v512 = vpop.f32.mrf.mxu0
        %v513 = vadd.f32 0.0, %v512
        %514 = vmatmul.bf16.gmra.mxu0 %v427
        %v515 = vpop.f32.mrf.mxu0
        %v516 = vadd.f32 0.0, %v515
        %v517 = vpop.f32.mrf.mxu0
        %v518 = vadd.f32 0.0, %v517
        %519 = vmatmul.bf16.gmra.mxu0 %v430
        %v520 = vpop.f32.mrf.mxu0
        %v521 = vadd.f32 0.0, %v520
        %v522 = vpop.f32.mrf.mxu0
        %v523 = vadd.f32 0.0, %v522
        %524 = vdwg.mxu0
        %v527 = vunpack.c.l.b16 %v227
        %v528 = vunpack.c.l.b16 %v228
        %v529 = vpack.c.b16 %v528, %v527
        %530 = vrot.lane.b32.xlu0 %v529, 120
        %v531 = vpop.permute.xlu0 %530
        %v534 = vunpack.c.l.b16 %v259
        %v535 = vunpack.c.l.b16 %v260
        %v536 = vpack.c.b16 %v535, %v534
        %v538 = vsel %vm383, %v531, 0
        %v541 = vsel %vm432, %v536, 0
        %543 = vmatpush.bf16.msra.mxu0 0
        %544 = vmatpush.bf16.msra.mxu0 0
        %545 = vmatpush.bf16.msra.mxu0 0
        %546 = vmatpush.bf16.msra.mxu0 0
        %547 = vmatpush.bf16.msra.mxu0 0
        %548 = vmatpush.bf16.msra.mxu0 0
        %549 = vmatpush.bf16.msra.mxu0 0
        %550 = vmatpush.bf16.msra.mxu0 %v541
        %551 = vmatmul.bf16.gmra.mxu0 %v538
        %v552 = vpop.f32.mrf.mxu0
        %v553 = vadd.f32 %v446, %v552
        %v554 = vpop.f32.mrf.mxu0
        %v555 = vadd.f32 %v448, %v554
        %556 = vmatmul.bf16.gmra.mxu0 %v385
        %v557 = vpop.f32.mrf.mxu0
        %v558 = vadd.f32 %v451, %v557
        %v559 = vpop.f32.mrf.mxu0
        %v560 = vadd.f32 %v453, %v559
        %561 = vmatmul.bf16.gmra.mxu0 %v388
        %v562 = vpop.f32.mrf.mxu0
        %v563 = vadd.f32 %v456, %v562
        %v564 = vpop.f32.mrf.mxu0
        %v565 = vadd.f32 %v458, %v564
        %566 = vmatmul.bf16.gmra.mxu0 %v391
        %v567 = vpop.f32.mrf.mxu0
        %v568 = vadd.f32 %v461, %v567
        %v569 = vpop.f32.mrf.mxu0
        %v570 = vadd.f32 %v463, %v569
        %571 = vmatmul.bf16.gmra.mxu0 %v394
        %v572 = vpop.f32.mrf.mxu0
        %v573 = vadd.f32 %v466, %v572
        %v574 = vpop.f32.mrf.mxu0
        %v575 = vadd.f32 %v468, %v574
        %576 = vmatmul.bf16.gmra.mxu0 %v397
        %v577 = vpop.f32.mrf.mxu0
        %v578 = vadd.f32 %v471, %v577
        %v579 = vpop.f32.mrf.mxu0
        %v580 = vadd.f32 %v473, %v579
        %581 = vmatmul.bf16.gmra.mxu0 %v400
        %v582 = vpop.f32.mrf.mxu0
        %v583 = vadd.f32 %v476, %v582
        %v584 = vpop.f32.mrf.mxu0
        %v585 = vadd.f32 %v478, %v584
        %586 = vmatmul.bf16.gmra.mxu0 %v403
        %v587 = vpop.f32.mrf.mxu0
        %v588 = vadd.f32 %v481, %v587
        %v589 = vpop.f32.mrf.mxu0
        %v590 = vadd.f32 %v483, %v589
        %591 = vmatmul.bf16.gmra.mxu0 %v406
        %v592 = vpop.f32.mrf.mxu0
        %v593 = vadd.f32 %v486, %v592
        %v594 = vpop.f32.mrf.mxu0
        %v595 = vadd.f32 %v488, %v594
        %596 = vmatmul.bf16.gmra.mxu0 %v409
        %v597 = vpop.f32.mrf.mxu0
        %v598 = vadd.f32 %v491, %v597
        %v599 = vpop.f32.mrf.mxu0
        %v600 = vadd.f32 %v493, %v599
        %601 = vmatmul.bf16.gmra.mxu0 %v412
        %v602 = vpop.f32.mrf.mxu0
        %v603 = vadd.f32 %v496, %v602
        %v604 = vpop.f32.mrf.mxu0
        %v605 = vadd.f32 %v498, %v604
        %606 = vmatmul.bf16.gmra.mxu0 %v415
        %v607 = vpop.f32.mrf.mxu0
        %v608 = vadd.f32 %v501, %v607
        %v609 = vpop.f32.mrf.mxu0
        %v610 = vadd.f32 %v503, %v609
        %611 = vmatmul.bf16.gmra.mxu0 %v418
        %v612 = vpop.f32.mrf.mxu0
        %v613 = vadd.f32 %v506, %v612
        %v614 = vpop.f32.mrf.mxu0
        %v615 = vadd.f32 %v508, %v614
        %616 = vmatmul.bf16.gmra.mxu0 %v421
        %v617 = vpop.f32.mrf.mxu0
        %v618 = vadd.f32 %v511, %v617
        %v619 = vpop.f32.mrf.mxu0
        %v620 = vadd.f32 %v513, %v619
        %621 = vmatmul.bf16.gmra.mxu0 %v424
        %v622 = vpop.f32.mrf.mxu0
        %v623 = vadd.f32 %v516, %v622
        %v624 = vpop.f32.mrf.mxu0
        %v625 = vadd.f32 %v518, %v624
        %626 = vmatmul.bf16.gmra.mxu0 %v427
        %v627 = vpop.f32.mrf.mxu0
        %v628 = vadd.f32 %v521, %v627
        %v629 = vpop.f32.mrf.mxu0
        %v630 = vadd.f32 %v523, %v629
        %631 = vdwg.mxu0
        %v632 = vld [vmem:[%s223 + $0x20] sm:$0xf]
        %v633 = vld [vmem:[%s223 + $0x24] sm:$0xf]
        %v634 = vld [vmem:[%s223 + $0x28] sm:$0xf]
        %v635 = vld [vmem:[%s223 + $0x2c] sm:$0xf]
        %v636 = vld [vmem:[%s223 + $0x30] sm:$0xf]
        %v637 = vld [vmem:[%s223 + $0x34] sm:$0xf]
        %v638 = vld [vmem:[%s223 + $0x38] sm:$0xf]
        %v639 = vld [vmem:[%s223 + $0x3c] sm:$0xf]
        %v640 = vld [vmem:[%s223 + $0x40] sm:$0xf]
        %v641 = vld [vmem:[%s223 + $0x44] sm:$0xf]
        %v642 = vld [vmem:[%s223 + $0x48] sm:$0xf]
        %v643 = vld [vmem:[%s223 + $0x4c] sm:$0xf]
        %v644 = vld [vmem:[%s223 + $0x50] sm:$0xf]
        %v645 = vld [vmem:[%s223 + $0x54] sm:$0xf]
        %v646 = vld [vmem:[%s223 + $0x58] sm:$0xf]
        %v647 = vld [vmem:[%s223 + $0x5c] sm:$0xf]
        %v648 = vld [vmem:[%s223 + $0x60] sm:$0xf]
        %v649 = vld [vmem:[%s223 + $0x64] sm:$0xf]
        %v650 = vld [vmem:[%s223 + $0x68] sm:$0xf]
        %v651 = vld [vmem:[%s223 + $0x6c] sm:$0xf]
        %v652 = vld [vmem:[%s223 + $0x70] sm:$0xf]
        %v653 = vld [vmem:[%s223 + $0x74] sm:$0xf]
        %v654 = vld [vmem:[%s223 + $0x78] sm:$0xf]
        %v655 = vld [vmem:[%s223 + $0x7c] sm:$0xf]
        %v656 = vld [vmem:[%s223 + $0x80] sm:$0xf]
        %v657 = vld [vmem:[%s223 + $0x84] sm:$0xf]
        %v658 = vld [vmem:[%s223 + $0x88] sm:$0xf]
        %v659 = vld [vmem:[%s223 + $0x8c] sm:$0xf]
        %v660 = vld [vmem:[%s223 + $0x90] sm:$0xf]
        %v661 = vld [vmem:[%s223 + $0x94] sm:$0xf]
        %v662 = vld [vmem:[%s223 + $0x98] sm:$0xf]
        %v663 = vld [vmem:[%s223 + $0x9c] sm:$0xf]
        %v664 = vld [vmem:[%s1 + $0xc] sm:$0xf]
        %v665 = vld [vmem:[%s1 + $0x10] sm:$0x3]
        %v698 = vunpack.c.l.b16 %v632
        %v699 = vunpack.c.l.b16 %v633
        %v700 = vunpack.c.l.b16 %v634
        %v701 = vunpack.c.l.b16 %v635
        %v702 = vunpack.c.l.b16 %v636
        %v703 = vunpack.c.l.b16 %v637
        %v704 = vunpack.c.l.b16 %v638
        %v705 = vunpack.c.l.b16 %v639
        %v706 = vunpack.c.l.b16 %v640
        %v707 = vunpack.c.l.b16 %v641
        %v708 = vunpack.c.l.b16 %v642
        %v709 = vunpack.c.l.b16 %v643
        %v710 = vunpack.c.l.b16 %v644
        %v711 = vunpack.c.l.b16 %v645
        %v712 = vunpack.c.l.b16 %v646
        %v713 = vunpack.c.l.b16 %v647
        %v714 = vunpack.c.l.b16 %v648
        %v715 = vunpack.c.l.b16 %v649
        %v716 = vunpack.c.l.b16 %v650
        %v717 = vunpack.c.l.b16 %v651
        %v718 = vunpack.c.l.b16 %v652
        %v719 = vunpack.c.l.b16 %v653
        %v720 = vunpack.c.l.b16 %v654
        %v721 = vunpack.c.l.b16 %v655
        %v722 = vunpack.c.l.b16 %v656
        %v723 = vunpack.c.l.b16 %v657
        %v724 = vunpack.c.l.b16 %v658
        %v725 = vunpack.c.l.b16 %v659
        %v726 = vunpack.c.l.b16 %v660
        %v727 = vunpack.c.l.b16 %v661
        %v728 = vunpack.c.l.b16 %v662
        %v729 = vunpack.c.l.b16 %v663
        %v730 = vpack.c.b16 %v699, %v698
        %v731 = vpack.c.b16 %v701, %v700
        %v732 = vpack.c.b16 %v703, %v702
        %v733 = vpack.c.b16 %v705, %v704
        %v734 = vpack.c.b16 %v707, %v706
        %v735 = vpack.c.b16 %v709, %v708
        %v736 = vpack.c.b16 %v711, %v710
        %v737 = vpack.c.b16 %v713, %v712
        %v738 = vpack.c.b16 %v715, %v714
        %v739 = vpack.c.b16 %v717, %v716
        %v740 = vpack.c.b16 %v719, %v718
        %v741 = vpack.c.b16 %v721, %v720
        %v742 = vpack.c.b16 %v723, %v722
        %v743 = vpack.c.b16 %v725, %v724
        %v744 = vpack.c.b16 %v727, %v726
        %v745 = vpack.c.b16 %v729, %v728
        %746 = vrot.lane.b32.xlu0 %v730, 120
        %v747 = vpop.permute.xlu0 %746
        %748 = vrot.lane.b32.xlu0 %v731, 120
        %v749 = vpop.permute.xlu0 %748
        %750 = vrot.lane.b32.xlu0 %v732, 120
        %v751 = vpop.permute.xlu0 %750
        %752 = vrot.lane.b32.xlu0 %v733, 120
        %v753 = vpop.permute.xlu0 %752
        %754 = vrot.lane.b32.xlu0 %v734, 120
        %v755 = vpop.permute.xlu0 %754
        %756 = vrot.lane.b32.xlu0 %v735, 120
        %v757 = vpop.permute.xlu0 %756
        %758 = vrot.lane.b32.xlu0 %v736, 120
        %v759 = vpop.permute.xlu0 %758
        %760 = vrot.lane.b32.xlu0 %v737, 120
        %v761 = vpop.permute.xlu0 %760
        %762 = vrot.lane.b32.xlu0 %v738, 120
        %v763 = vpop.permute.xlu0 %762
        %764 = vrot.lane.b32.xlu0 %v739, 120
        %v765 = vpop.permute.xlu0 %764
        %766 = vrot.lane.b32.xlu0 %v740, 120
        %v767 = vpop.permute.xlu0 %766
        %768 = vrot.lane.b32.xlu0 %v741, 120
        %v769 = vpop.permute.xlu0 %768
        %770 = vrot.lane.b32.xlu0 %v742, 120
        %v771 = vpop.permute.xlu0 %770
        %772 = vrot.lane.b32.xlu0 %v743, 120
        %v773 = vpop.permute.xlu0 %772
        %774 = vrot.lane.b32.xlu0 %v744, 120
        %v775 = vpop.permute.xlu0 %774
        %776 = vrot.lane.b32.xlu0 %v745, 120
        %v777 = vpop.permute.xlu0 %776
        %v780 = vunpack.c.l.b16 %v664
        %v781 = vunpack.c.l.b16 %v665
        %v782 = vpack.c.b16 %v781, %v780
        %v784 = vsel %vm383, %v747, 0
        %v787 = vsel %vm383, %v749, 0
        %v790 = vsel %vm383, %v751, 0
        %v793 = vsel %vm383, %v753, 0
        %v796 = vsel %vm383, %v755, 0
        %v799 = vsel %vm383, %v757, 0
        %v802 = vsel %vm383, %v759, 0
        %v805 = vsel %vm383, %v761, 0
        %v808 = vsel %vm383, %v763, 0
        %v811 = vsel %vm383, %v765, 0
        %v814 = vsel %vm383, %v767, 0
        %v817 = vsel %vm383, %v769, 0
        %v820 = vsel %vm383, %v771, 0
        %v823 = vsel %vm383, %v773, 0
        %v826 = vsel %vm383, %v775, 0
        %v829 = vsel %vm383, %v777, 0
        %v832 = vsel %vm432, %v782, 0
        %834 = vmatpush.bf16.msra.mxu0 0
        %835 = vmatpush.bf16.msra.mxu0 0
        %836 = vmatpush.bf16.msra.mxu0 0
        %837 = vmatpush.bf16.msra.mxu0 0
        %838 = vmatpush.bf16.msra.mxu0 0
        %839 = vmatpush.bf16.msra.mxu0 0
        %840 = vmatpush.bf16.msra.mxu0 0
        %841 = vmatpush.bf16.msra.mxu0 %v832
        %842 = vmatmul.bf16.gmra.mxu0 %v784
        %v843 = vpop.f32.mrf.mxu0
        %v844 = vadd.f32 0.0, %v843
        %v845 = vpop.f32.mrf.mxu0
        %v846 = vadd.f32 0.0, %v845
        %847 = vmatmul.bf16.gmra.mxu0 %v787
        %v848 = vpop.f32.mrf.mxu0
        %v849 = vadd.f32 0.0, %v848
        %v850 = vpop.f32.mrf.mxu0
        %v851 = vadd.f32 0.0, %v850
        %852 = vmatmul.bf16.gmra.mxu0 %v790
        %v853 = vpop.f32.mrf.mxu0
        %v854 = vadd.f32 0.0, %v853
        %v855 = vpop.f32.mrf.mxu0
        %v856 = vadd.f32 0.0, %v855
        %857 = vmatmul.bf16.gmra.mxu0 %v793
        %v858 = vpop.f32.mrf.mxu0
        %v859 = vadd.f32 0.0, %v858
        %v860 = vpop.f32.mrf.mxu0
        %v861 = vadd.f32 0.0, %v860
        %862 = vmatmul.bf16.gmra.mxu0 %v796
        %v863 = vpop.f32.mrf.mxu0
        %v864 = vadd.f32 0.0, %v863
        %v865 = vpop.f32.mrf.mxu0
        %v866 = vadd.f32 0.0, %v865
        %867 = vmatmul.bf16.gmra.mxu0 %v799
        %v868 = vpop.f32.mrf.mxu0
        %v869 = vadd.f32 0.0, %v868
        %v870 = vpop.f32.mrf.mxu0
        %v871 = vadd.f32 0.0, %v870
        %872 = vmatmul.bf16.gmra.mxu0 %v802
        %v873 = vpop.f32.mrf.mxu0
        %v874 = vadd.f32 0.0, %v873
        %v875 = vpop.f32.mrf.mxu0
        %v876 = vadd.f32 0.0, %v875
        %877 = vmatmul.bf16.gmra.mxu0 %v805
        %v878 = vpop.f32.mrf.mxu0
        %v879 = vadd.f32 0.0, %v878
        %v880 = vpop.f32.mrf.mxu0
        %v881 = vadd.f32 0.0, %v880
        %882 = vmatmul.bf16.gmra.mxu0 %v808
        %v883 = vpop.f32.mrf.mxu0
        %v884 = vadd.f32 0.0, %v883
        %v885 = vpop.f32.mrf.mxu0
        %v886 = vadd.f32 0.0, %v885
        %887 = vmatmul.bf16.gmra.mxu0 %v811
        %v888 = vpop.f32.mrf.mxu0
        %v889 = vadd.f32 0.0, %v888
        %v890 = vpop.f32.mrf.mxu0
        %v891 = vadd.f32 0.0, %v890
        %892 = vmatmul.bf16.gmra.mxu0 %v814
        %v893 = vpop.f32.mrf.mxu0
        %v894 = vadd.f32 0.0, %v893
        %v895 = vpop.f32.mrf.mxu0
        %v896 = vadd.f32 0.0, %v895
        %897 = vmatmul.bf16.gmra.mxu0 %v817
        %v898 = vpop.f32.mrf.mxu0
        %v899 = vadd.f32 0.0, %v898
        %v900 = vpop.f32.mrf.mxu0
        %v901 = vadd.f32 0.0, %v900
        %902 = vmatmul.bf16.gmra.mxu0 %v820
        %v903 = vpop.f32.mrf.mxu0
        %v904 = vadd.f32 0.0, %v903
        %v905 = vpop.f32.mrf.mxu0
        %v906 = vadd.f32 0.0, %v905
        %907 = vmatmul.bf16.gmra.mxu0 %v823
        %v908 = vpop.f32.mrf.mxu0
        %v909 = vadd.f32 0.0, %v908
        %v910 = vpop.f32.mrf.mxu0
        %v911 = vadd.f32 0.0, %v910
        %912 = vmatmul.bf16.gmra.mxu0 %v826
        %v913 = vpop.f32.mrf.mxu0
        %v914 = vadd.f32 0.0, %v913
        %v915 = vpop.f32.mrf.mxu0
        %v916 = vadd.f32 0.0, %v915
        %917 = vmatmul.bf16.gmra.mxu0 %v829
        %v918 = vpop.f32.mrf.mxu0
        %v919 = vadd.f32 0.0, %v918
        %v920 = vpop.f32.mrf.mxu0
        %v921 = vadd.f32 0.0, %v920
        %922 = vdwg.mxu0
        %v923 = vadd.f32 %v553, %v844
        %v924 = vadd.f32 %v555, %v846
        %v925 = vadd.f32 %v558, %v849
        %v926 = vadd.f32 %v560, %v851
        %v927 = vadd.f32 %v563, %v854
        %v928 = vadd.f32 %v565, %v856
        %v929 = vadd.f32 %v568, %v859
        %v930 = vadd.f32 %v570, %v861
        %v931 = vadd.f32 %v573, %v864
        %v932 = vadd.f32 %v575, %v866
        %v933 = vadd.f32 %v578, %v869
        %v934 = vadd.f32 %v580, %v871
        %v935 = vadd.f32 %v583, %v874
        %v936 = vadd.f32 %v585, %v876
        %v937 = vadd.f32 %v588, %v879
        %v938 = vadd.f32 %v590, %v881
        %v939 = vadd.f32 %v593, %v884
        %v940 = vadd.f32 %v595, %v886
        %v941 = vadd.f32 %v598, %v889
        %v942 = vadd.f32 %v600, %v891
        %v943 = vadd.f32 %v603, %v894
        %v944 = vadd.f32 %v605, %v896
        %v945 = vadd.f32 %v608, %v899
        %v946 = vadd.f32 %v610, %v901
        %v947 = vadd.f32 %v613, %v904
        %v948 = vadd.f32 %v615, %v906
        %v949 = vadd.f32 %v618, %v909
        %v950 = vadd.f32 %v620, %v911
        %v951 = vadd.f32 %v623, %v914
        %v952 = vadd.f32 %v625, %v916
        %v953 = vadd.f32 %v628, %v919
        %v954 = vadd.f32 %v630, %v921
        %v955 = vld [vmem:[%s4] sm:$0x1]
        %v957 = vperm.slane %v955, 0
        %v959 = vadd.f32 %v923, %v957
        %v960 = vadd.f32 %v924, %v957
        %v961 = vadd.f32 %v925, %v957
        %v962 = vadd.f32 %v926, %v957
        %v963 = vadd.f32 %v927, %v957
        %v964 = vadd.f32 %v928, %v957
        %v965 = vadd.f32 %v929, %v957
        %v966 = vadd.f32 %v930, %v957
        %v967 = vadd.f32 %v931, %v957
        %v968 = vadd.f32 %v932, %v957
        %v969 = vadd.f32 %v933, %v957
        %v970 = vadd.f32 %v934, %v957
        %v971 = vadd.f32 %v935, %v957
        %v972 = vadd.f32 %v936, %v957
        %v973 = vadd.f32 %v937, %v957
        %v974 = vadd.f32 %v938, %v957
        %v975 = vadd.f32 %v939, %v957
        %v976 = vadd.f32 %v940, %v957
        %v977 = vadd.f32 %v941, %v957
        %v978 = vadd.f32 %v942, %v957
        %v979 = vadd.f32 %v943, %v957
        %v980 = vadd.f32 %v944, %v957
        %v981 = vadd.f32 %v945, %v957
        %v982 = vadd.f32 %v946, %v957
        %v983 = vadd.f32 %v947, %v957
        %v984 = vadd.f32 %v948, %v957
        %v985 = vadd.f32 %v949, %v957
        %v986 = vadd.f32 %v950, %v957
        %v987 = vadd.f32 %v951, %v957
        %v988 = vadd.f32 %v952, %v957
        %v989 = vadd.f32 %v953, %v957
        %v990 = vadd.f32 %v954, %v957
        %v991 = vpack.c.bf16 %v959, %v959
        %v992 = vpack.c.bf16 %v960, %v960
        %v993 = vpack.c.bf16 %v961, %v961
        %v994 = vpack.c.bf16 %v962, %v962
        %v995 = vpack.c.bf16 %v963, %v963
        %v996 = vpack.c.bf16 %v964, %v964
        %v997 = vpack.c.bf16 %v965, %v965
        %v998 = vpack.c.bf16 %v966, %v966
        %v999 = vpack.c.bf16 %v967, %v967
        %v1000 = vpack.c.bf16 %v968, %v968
        %v1001 = vpack.c.bf16 %v969, %v969
        %v1002 = vpack.c.bf16 %v970, %v970
        %v1003 = vpack.c.bf16 %v971, %v971
        %v1004 = vpack.c.bf16 %v972, %v972
        %v1005 = vpack.c.bf16 %v973, %v973
        %v1006 = vpack.c.bf16 %v974, %v974
        %v1007 = vpack.c.bf16 %v975, %v975
        %v1008 = vpack.c.bf16 %v976, %v976
        %v1009 = vpack.c.bf16 %v977, %v977
        %v1010 = vpack.c.bf16 %v978, %v978
        %v1011 = vpack.c.bf16 %v979, %v979
        %v1012 = vpack.c.bf16 %v980, %v980
        %v1013 = vpack.c.bf16 %v981, %v981
        %v1014 = vpack.c.bf16 %v982, %v982
        %v1015 = vpack.c.bf16 %v983, %v983
        %v1016 = vpack.c.bf16 %v984, %v984
        %v1017 = vpack.c.bf16 %v985, %v985
        %v1018 = vpack.c.bf16 %v986, %v986
        %v1019 = vpack.c.bf16 %v987, %v987
        %v1020 = vpack.c.bf16 %v988, %v988
        %v1021 = vpack.c.bf16 %v989, %v989
        %v1022 = vpack.c.bf16 %v990, %v990
        %vm1023 = vcmask 60416
        %1024 = vst.msk [vmem:[%s218] sm:$0xf] %vm1023, %v991
        %1025 = vst.msk [vmem:[%s218 + $0x4] sm:$0xf] %vm1023, %v992
        %1026 = vst.msk [vmem:[%s218 + $0x8] sm:$0xf] %vm1023, %v993
        %1027 = vst.msk [vmem:[%s218 + $0xc] sm:$0xf] %vm1023, %v994
        %1028 = vst.msk [vmem:[%s218 + $0x10] sm:$0xf] %vm1023, %v995
        %1029 = vst.msk [vmem:[%s218 + $0x14] sm:$0xf] %vm1023, %v996
        %1030 = vst.msk [vmem:[%s218 + $0x18] sm:$0xf] %vm1023, %v997
        %1031 = vst.msk [vmem:[%s218 + $0x1c] sm:$0xf] %vm1023, %v998
        %1032 = vst.msk [vmem:[%s218 + $0x20] sm:$0xf] %vm1023, %v999
        %1033 = vst.msk [vmem:[%s218 + $0x24] sm:$0xf] %vm1023, %v1000
        %1034 = vst.msk [vmem:[%s218 + $0x28] sm:$0xf] %vm1023, %v1001
        %1035 = vst.msk [vmem:[%s218 + $0x2c] sm:$0xf] %vm1023, %v1002
        %1036 = vst.msk [vmem:[%s218 + $0x30] sm:$0xf] %vm1023, %v1003
        %1037 = vst.msk [vmem:[%s218 + $0x34] sm:$0xf] %vm1023, %v1004
        %1038 = vst.msk [vmem:[%s218 + $0x38] sm:$0xf] %vm1023, %v1005
        %1039 = vst.msk [vmem:[%s218 + $0x3c] sm:$0xf] %vm1023, %v1006
        %1040 = vst.msk [vmem:[%s218 + $0x40] sm:$0xf] %vm1023, %v1007
        %1041 = vst.msk [vmem:[%s218 + $0x44] sm:$0xf] %vm1023, %v1008
        %1042 = vst.msk [vmem:[%s218 + $0x48] sm:$0xf] %vm1023, %v1009
        %1043 = vst.msk [vmem:[%s218 + $0x4c] sm:$0xf] %vm1023, %v1010
        %1044 = vst.msk [vmem:[%s218 + $0x50] sm:$0xf] %vm1023, %v1011
        %1045 = vst.msk [vmem:[%s218 + $0x54] sm:$0xf] %vm1023, %v1012
        %1046 = vst.msk [vmem:[%s218 + $0x58] sm:$0xf] %vm1023, %v1013
        %1047 = vst.msk [vmem:[%s218 + $0x5c] sm:$0xf] %vm1023, %v1014
        %1048 = vst.msk [vmem:[%s218 + $0x60] sm:$0xf] %vm1023, %v1015
        %1049 = vst.msk [vmem:[%s218 + $0x64] sm:$0xf] %vm1023, %v1016
        %1050 = vst.msk [vmem:[%s218 + $0x68] sm:$0xf] %vm1023, %v1017
        %1051 = vst.msk [vmem:[%s218 + $0x6c] sm:$0xf] %vm1023, %v1018
        %1052 = vst.msk [vmem:[%s218 + $0x70] sm:$0xf] %vm1023, %v1019
        %1053 = vst.msk [vmem:[%s218 + $0x74] sm:$0xf] %vm1023, %v1020
        %1054 = vst.msk [vmem:[%s218 + $0x78] sm:$0xf] %vm1023, %v1021
        %1055 = vst.msk [vmem:[%s218 + $0x7c] sm:$0xf] %vm1023, %v1022
        %v1056 = vld [vmem:[%s223 + $0x8] sm:$0xf]
        %v1057 = vld [vmem:[%s223 + $0xc] sm:$0xf]
        %v1058 = vld [vmem:[%s223 + $0x10] sm:$0xf]
        %v1059 = vld [vmem:[%s223 + $0x14] sm:$0xf]
        %v1060 = vld [vmem:[%s223 + $0x18] sm:$0xf]
        %v1061 = vld [vmem:[%s223 + $0x1c] sm:$0xf]
        %v1062 = vld [vmem:[%s223 + $0x20] sm:$0xf]
        %v1063 = vld [vmem:[%s223 + $0x24] sm:$0xf]
        %v1064 = vld [vmem:[%s223 + $0x28] sm:$0xf]
        %v1065 = vld [vmem:[%s223 + $0x2c] sm:$0xf]
        %v1066 = vld [vmem:[%s223 + $0x30] sm:$0xf]
        %v1067 = vld [vmem:[%s223 + $0x34] sm:$0xf]
        %v1068 = vld [vmem:[%s223 + $0x38] sm:$0xf]
        %v1069 = vld [vmem:[%s223 + $0x3c] sm:$0xf]
        %v1070 = vld [vmem:[%s223 + $0x40] sm:$0xf]
        %v1071 = vld [vmem:[%s223 + $0x44] sm:$0xf]
        %v1072 = vld [vmem:[%s223 + $0x48] sm:$0xf]
        %v1073 = vld [vmem:[%s223 + $0x4c] sm:$0xf]
        %v1074 = vld [vmem:[%s223 + $0x50] sm:$0xf]
        %v1075 = vld [vmem:[%s223 + $0x54] sm:$0xf]
        %v1076 = vld [vmem:[%s223 + $0x58] sm:$0xf]
        %v1077 = vld [vmem:[%s223 + $0x5c] sm:$0xf]
        %v1078 = vld [vmem:[%s223 + $0x60] sm:$0xf]
        %v1079 = vld [vmem:[%s223 + $0x64] sm:$0xf]
        %v1080 = vld [vmem:[%s223 + $0x68] sm:$0xf]
        %v1081 = vld [vmem:[%s223 + $0x6c] sm:$0xf]
        %v1082 = vld [vmem:[%s223 + $0x70] sm:$0xf]
        %v1083 = vld [vmem:[%s223 + $0x74] sm:$0xf]
        %v1084 = vld [vmem:[%s223 + $0x78] sm:$0xf]
        %v1085 = vld [vmem:[%s223 + $0x7c] sm:$0xf]
        %v1086 = vld [vmem:[%s223 + $0x80] sm:$0xf]
        %v1087 = vld [vmem:[%s223 + $0x84] sm:$0xf]
        %v1088 = vld [vmem:[%s2] sm:$0xf]
        %v1089 = vld [vmem:[%s2 + $0x4] sm:$0xf]
        %v1090 = vld [vmem:[%s2 + $0x8] sm:$0x3]
        %v1091 = vld [vmem:[%s223 + $0x88] sm:$0xf]
        %v1092 = vld [vmem:[%s223 + $0x8c] sm:$0xf]
        %v1093 = vld [vmem:[%s2 + $0x8] sm:$0xc]
        %v1094 = vld [vmem:[%s2 + $0xc] sm:$0xf]
        %v1095 = vld [vmem:[%s2 + $0x10] sm:$0xf]
        %v1128 = vunpack.c.l.b16 %v1058
        %v1129 = vunpack.c.l.b16 %v1059
        %v1130 = vunpack.c.l.b16 %v1060
        %v1131 = vunpack.c.l.b16 %v1061
        %v1132 = vunpack.c.l.b16 %v1062
        %v1133 = vunpack.c.l.b16 %v1063
        %v1134 = vunpack.c.l.b16 %v1064
        %v1135 = vunpack.c.l.b16 %v1065
        %v1136 = vunpack.c.l.b16 %v1066
        %v1137 = vunpack.c.l.b16 %v1067
        %v1138 = vunpack.c.l.b16 %v1068
        %v1139 = vunpack.c.l.b16 %v1069
        %v1140 = vunpack.c.l.b16 %v1070
        %v1141 = vunpack.c.l.b16 %v1071
        %v1142 = vunpack.c.l.b16 %v1072
        %v1143 = vunpack.c.l.b16 %v1073
        %v1144 = vunpack.c.l.b16 %v1074
        %v1145 = vunpack.c.l.b16 %v1075
        %v1146 = vunpack.c.l.b16 %v1076
        %v1147 = vunpack.c.l.b16 %v1077
        %v1148 = vunpack.c.l.b16 %v1078
        %v1149 = vunpack.c.l.b16 %v1079
        %v1150 = vunpack.c.l.b16 %v1080
        %v1151 = vunpack.c.l.b16 %v1081
        %v1152 = vunpack.c.l.b16 %v1082
        %v1153 = vunpack.c.l.b16 %v1083
        %v1154 = vunpack.c.l.b16 %v1084
        %v1155 = vunpack.c.l.b16 %v1085
        %v1156 = vunpack.c.l.b16 %v1086
        %v1157 = vunpack.c.l.b16 %v1087
        %v1158 = vunpack.c.l.b16 %v1091
        %v1159 = vunpack.c.l.b16 %v1092
        %v1160 = vpack.c.b16 %v1129, %v1128
        %v1161 = vpack.c.b16 %v1131, %v1130
        %v1162 = vpack.c.b16 %v1133, %v1132
        %v1163 = vpack.c.b16 %v1135, %v1134
        %v1164 = vpack.c.b16 %v1137, %v1136
        %v1165 = vpack.c.b16 %v1139, %v1138
        %v1166 = vpack.c.b16 %v1141, %v1140
        %v1167 = vpack.c.b16 %v1143, %v1142
        %v1168 = vpack.c.b16 %v1145, %v1144
        %v1169 = vpack.c.b16 %v1147, %v1146
        %v1170 = vpack.c.b16 %v1149, %v1148
        %v1171 = vpack.c.b16 %v1151, %v1150
        %v1172 = vpack.c.b16 %v1153, %v1152
        %v1173 = vpack.c.b16 %v1155, %v1154
        %v1174 = vpack.c.b16 %v1157, %v1156
        %v1175 = vpack.c.b16 %v1159, %v1158
        %1176 = vrot.lane.b32.xlu0 %v1160, 124
        %v1177 = vpop.permute.xlu0 %1176
        %1178 = vrot.lane.b32.xlu0 %v1161, 124
        %v1179 = vpop.permute.xlu0 %1178
        %1180 = vrot.lane.b32.xlu0 %v1162, 124
        %v1181 = vpop.permute.xlu0 %1180
        %1182 = vrot.lane.b32.xlu0 %v1163, 124
        %v1183 = vpop.permute.xlu0 %1182
        %1184 = vrot.lane.b32.xlu0 %v1164, 124
        %v1185 = vpop.permute.xlu0 %1184
        %1186 = vrot.lane.b32.xlu0 %v1165, 124
        %v1187 = vpop.permute.xlu0 %1186
        %1188 = vrot.lane.b32.xlu0 %v1166, 124
        %v1189 = vpop.permute.xlu0 %1188
        %1190 = vrot.lane.b32.xlu0 %v1167, 124
        %v1191 = vpop.permute.xlu0 %1190
        %1192 = vrot.lane.b32.xlu0 %v1168, 124
        %v1193 = vpop.permute.xlu0 %1192
        %1194 = vrot.lane.b32.xlu0 %v1169, 124
        %v1195 = vpop.permute.xlu0 %1194
        %1196 = vrot.lane.b32.xlu0 %v1170, 124
        %v1197 = vpop.permute.xlu0 %1196
        %1198 = vrot.lane.b32.xlu0 %v1171, 124
        %v1199 = vpop.permute.xlu0 %1198
        %1200 = vrot.lane.b32.xlu0 %v1172, 124
        %v1201 = vpop.permute.xlu0 %1200
        %1202 = vrot.lane.b32.xlu0 %v1173, 124
        %v1203 = vpop.permute.xlu0 %1202
        %1204 = vrot.lane.b32.xlu0 %v1174, 124
        %v1205 = vpop.permute.xlu0 %1204
        %1206 = vrot.lane.b32.xlu0 %v1175, 124
        %v1207 = vpop.permute.xlu0 %1206
        %v1211 = vunpack.c.l.b16 %v1093
        %v1212 = vunpack.c.l.b16 %v1094
        %v1213 = vunpack.c.l.b16 %v1095
        %v1214 = vpack.c.b16 %v1212, %v1211
        %v1215 = vpack.c.b16 %v1213, %v1213
        %vm1216 = vcmask 1045504
        %v1217 = vrot.slane %v1214, 2
        %v1218 = vrot.slane %v1215, 2
        %v1219 = vsel %vm1216, %v1217, %v1218
        %vm1221 = vcmask 162816
        %v1223 = vsel %vm1221, %v1177, 0
        %v1226 = vsel %vm1221, %v1179, 0
        %v1229 = vsel %vm1221, %v1181, 0
        %v1232 = vsel %vm1221, %v1183, 0
        %v1235 = vsel %vm1221, %v1185, 0
        %v1238 = vsel %vm1221, %v1187, 0
        %v1241 = vsel %vm1221, %v1189, 0
        %v1244 = vsel %vm1221, %v1191, 0
        %v1247 = vsel %vm1221, %v1193, 0
        %v1250 = vsel %vm1221, %v1195, 0
        %v1253 = vsel %vm1221, %v1197, 0
        %v1256 = vsel %vm1221, %v1199, 0
        %v1259 = vsel %vm1221, %v1201, 0
        %v1262 = vsel %vm1221, %v1203, 0
        %v1265 = vsel %vm1221, %v1205, 0
        %v1268 = vsel %vm1221, %v1207, 0
        %vm1270 = vcmask 1041408
        %v1272 = vsel %vm1270, %v1218, 0
        %1274 = vmatpush.bf16.msra.mxu0 0
        %1275 = vmatpush.bf16.msra.mxu0 0
        %1276 = vmatpush.bf16.msra.mxu0 0
        %1277 = vmatpush.bf16.msra.mxu0 0
        %1278 = vmatpush.bf16.msra.mxu0 0
        %1279 = vmatpush.bf16.msra.mxu0 0
        %1280 = vmatpush.bf16.msra.mxu0 %v1272
        %1281 = vmatpush.bf16.msra.mxu0 %v1219
        %1282 = vmatmul.bf16.gmra.mxu0 %v1223
        %v1283 = vpop.f32.mrf.mxu0
        %v1284 = vadd.f32 0.0, %v1283
        %v1285 = vpop.f32.mrf.mxu0
        %v1286 = vadd.f32 0.0, %v1285
        %1287 = vmatmul.bf16.gmra.mxu0 %v1226
        %v1288 = vpop.f32.mrf.mxu0
        %v1289 = vadd.f32 0.0, %v1288
        %v1290 = vpop.f32.mrf.mxu0
        %v1291 = vadd.f32 0.0, %v1290
        %1292 = vmatmul.bf16.gmra.mxu0 %v1229
        %v1293 = vpop.f32.mrf.mxu0
        %v1294 = vadd.f32 0.0, %v1293
        %v1295 = vpop.f32.mrf.mxu0
        %v1296 = vadd.f32 0.0, %v1295
        %1297 = vmatmul.bf16.gmra.mxu0 %v1232
        %v1298 = vpop.f32.mrf.mxu0
        %v1299 = vadd.f32 0.0, %v1298
        %v1300 = vpop.f32.mrf.mxu0
        %v1301 = vadd.f32 0.0, %v1300
        %1302 = vmatmul.bf16.gmra.mxu0 %v1235
        %v1303 = vpop.f32.mrf.mxu0
        %v1304 = vadd.f32 0.0, %v1303
        %v1305 = vpop.f32.mrf.mxu0
        %v1306 = vadd.f32 0.0, %v1305
        %1307 = vmatmul.bf16.gmra.mxu0 %v1238
        %v1308 = vpop.f32.mrf.mxu0
        %v1309 = vadd.f32 0.0, %v1308
        %v1310 = vpop.f32.mrf.mxu0
        %v1311 = vadd.f32 0.0, %v1310
        %1312 = vmatmul.bf16.gmra.mxu0 %v1241
        %v1313 = vpop.f32.mrf.mxu0
        %v1314 = vadd.f32 0.0, %v1313
        %v1315 = vpop.f32.mrf.mxu0
        %v1316 = vadd.f32 0.0, %v1315
        %1317 = vmatmul.bf16.gmra.mxu0 %v1244
        %v1318 = vpop.f32.mrf.mxu0
        %v1319 = vadd.f32 0.0, %v1318
        %v1320 = vpop.f32.mrf.mxu0
        %v1321 = vadd.f32 0.0, %v1320
        %1322 = vmatmul.bf16.gmra.mxu0 %v1247
        %v1323 = vpop.f32.mrf.mxu0
        %v1324 = vadd.f32 0.0, %v1323
        %v1325 = vpop.f32.mrf.mxu0
        %v1326 = vadd.f32 0.0, %v1325
        %1327 = vmatmul.bf16.gmra.mxu0 %v1250
        %v1328 = vpop.f32.mrf.mxu0
        %v1329 = vadd.f32 0.0, %v1328
        %v1330 = vpop.f32.mrf.mxu0
        %v1331 = vadd.f32 0.0, %v1330
        %1332 = vmatmul.bf16.gmra.mxu0 %v1253
        %v1333 = vpop.f32.mrf.mxu0
        %v1334 = vadd.f32 0.0, %v1333
        %v1335 = vpop.f32.mrf.mxu0
        %v1336 = vadd.f32 0.0, %v1335
        %1337 = vmatmul.bf16.gmra.mxu0 %v1256
        %v1338 = vpop.f32.mrf.mxu0
        %v1339 = vadd.f32 0.0, %v1338
        %v1340 = vpop.f32.mrf.mxu0
        %v1341 = vadd.f32 0.0, %v1340
        %1342 = vmatmul.bf16.gmra.mxu0 %v1259
        %v1343 = vpop.f32.mrf.mxu0
        %v1344 = vadd.f32 0.0, %v1343
        %v1345 = vpop.f32.mrf.mxu0
        %v1346 = vadd.f32 0.0, %v1345
        %1347 = vmatmul.bf16.gmra.mxu0 %v1262
        %v1348 = vpop.f32.mrf.mxu0
        %v1349 = vadd.f32 0.0, %v1348
        %v1350 = vpop.f32.mrf.mxu0
        %v1351 = vadd.f32 0.0, %v1350
        %1352 = vmatmul.bf16.gmra.mxu0 %v1265
        %v1353 = vpop.f32.mrf.mxu0
        %v1354 = vadd.f32 0.0, %v1353
        %v1355 = vpop.f32.mrf.mxu0
        %v1356 = vadd.f32 0.0, %v1355
        %1357 = vmatmul.bf16.gmra.mxu0 %v1268
        %v1358 = vpop.f32.mrf.mxu0
        %v1359 = vadd.f32 0.0, %v1358
        %v1360 = vpop.f32.mrf.mxu0
        %v1361 = vadd.f32 0.0, %v1360
        %1362 = vdwg.mxu0
        %v1365 = vunpack.c.l.b16 %v1056
        %v1366 = vunpack.c.l.b16 %v1057
        %v1367 = vpack.c.b16 %v1366, %v1365
        %1368 = vrot.lane.b32.xlu0 %v1367, 124
        %v1369 = vpop.permute.xlu0 %1368
        %v1373 = vunpack.c.l.b16 %v1088
        %v1374 = vunpack.c.l.b16 %v1089
        %v1375 = vunpack.c.l.b16 %v1090
        %v1376 = vpack.c.b16 %v1374, %v1373
        %v1377 = vpack.c.b16 %v1375, %v1375
        %v1380 = vsel %vm1221, %v1369, 0
        %v1383 = vsel %vm1270, %v1377, 0
        %1385 = vmatpush.bf16.msra.mxu0 0
        %1386 = vmatpush.bf16.msra.mxu0 0
        %1387 = vmatpush.bf16.msra.mxu0 0
        %1388 = vmatpush.bf16.msra.mxu0 0
        %1389 = vmatpush.bf16.msra.mxu0 0
        %1390 = vmatpush.bf16.msra.mxu0 0
        %1391 = vmatpush.bf16.msra.mxu0 %v1383
        %1392 = vmatpush.bf16.msra.mxu0 %v1376
        %1393 = vmatmul.bf16.gmra.mxu0 %v1380
        %v1394 = vpop.f32.mrf.mxu0
        %v1395 = vadd.f32 %v1284, %v1394
        %v1396 = vpop.f32.mrf.mxu0
        %v1397 = vadd.f32 %v1286, %v1396
        %1398 = vmatmul.bf16.gmra.mxu0 %v1223
        %v1399 = vpop.f32.mrf.mxu0
        %v1400 = vadd.f32 %v1289, %v1399
        %v1401 = vpop.f32.mrf.mxu0
        %v1402 = vadd.f32 %v1291, %v1401
        %1403 = vmatmul.bf16.gmra.mxu0 %v1226
        %v1404 = vpop.f32.mrf.mxu0
        %v1405 = vadd.f32 %v1294, %v1404
        %v1406 = vpop.f32.mrf.mxu0
        %v1407 = vadd.f32 %v1296, %v1406
        %1408 = vmatmul.bf16.gmra.mxu0 %v1229
        %v1409 = vpop.f32.mrf.mxu0
        %v1410 = vadd.f32 %v1299, %v1409
        %v1411 = vpop.f32.mrf.mxu0
        %v1412 = vadd.f32 %v1301, %v1411
        %1413 = vmatmul.bf16.gmra.mxu0 %v1232
        %v1414 = vpop.f32.mrf.mxu0
        %v1415 = vadd.f32 %v1304, %v1414
        %v1416 = vpop.f32.mrf.mxu0
        %v1417 = vadd.f32 %v1306, %v1416
        %1418 = vmatmul.bf16.gmra.mxu0 %v1235
        %v1419 = vpop.f32.mrf.mxu0
        %v1420 = vadd.f32 %v1309, %v1419
        %v1421 = vpop.f32.mrf.mxu0
        %v1422 = vadd.f32 %v1311, %v1421
        %1423 = vmatmul.bf16.gmra.mxu0 %v1238
        %v1424 = vpop.f32.mrf.mxu0
        %v1425 = vadd.f32 %v1314, %v1424
        %v1426 = vpop.f32.mrf.mxu0
        %v1427 = vadd.f32 %v1316, %v1426
        %1428 = vmatmul.bf16.gmra.mxu0 %v1241
        %v1429 = vpop.f32.mrf.mxu0
        %v1430 = vadd.f32 %v1319, %v1429
        %v1431 = vpop.f32.mrf.mxu0
        %v1432 = vadd.f32 %v1321, %v1431
        %1433 = vmatmul.bf16.gmra.mxu0 %v1244
        %v1434 = vpop.f32.mrf.mxu0
        %v1435 = vadd.f32 %v1324, %v1434
        %v1436 = vpop.f32.mrf.mxu0
        %v1437 = vadd.f32 %v1326, %v1436
        %1438 = vmatmul.bf16.gmra.mxu0 %v1247
        %v1439 = vpop.f32.mrf.mxu0
        %v1440 = vadd.f32 %v1329, %v1439
        %v1441 = vpop.f32.mrf.mxu0
        %v1442 = vadd.f32 %v1331, %v1441
        %1443 = vmatmul.bf16.gmra.mxu0 %v1250
        %v1444 = vpop.f32.mrf.mxu0
        %v1445 = vadd.f32 %v1334, %v1444
        %v1446 = vpop.f32.mrf.mxu0
        %v1447 = vadd.f32 %v1336, %v1446
        %1448 = vmatmul.bf16.gmra.mxu0 %v1253
        %v1449 = vpop.f32.mrf.mxu0
        %v1450 = vadd.f32 %v1339, %v1449
        %v1451 = vpop.f32.mrf.mxu0
        %v1452 = vadd.f32 %v1341, %v1451
        %1453 = vmatmul.bf16.gmra.mxu0 %v1256
        %v1454 = vpop.f32.mrf.mxu0
        %v1455 = vadd.f32 %v1344, %v1454
        %v1456 = vpop.f32.mrf.mxu0
        %v1457 = vadd.f32 %v1346, %v1456
        %1458 = vmatmul.bf16.gmra.mxu0 %v1259
        %v1459 = vpop.f32.mrf.mxu0
        %v1460 = vadd.f32 %v1349, %v1459
        %v1461 = vpop.f32.mrf.mxu0
        %v1462 = vadd.f32 %v1351, %v1461
        %1463 = vmatmul.bf16.gmra.mxu0 %v1262
        %v1464 = vpop.f32.mrf.mxu0
        %v1465 = vadd.f32 %v1354, %v1464
        %v1466 = vpop.f32.mrf.mxu0
        %v1467 = vadd.f32 %v1356, %v1466
        %1468 = vmatmul.bf16.gmra.mxu0 %v1265
        %v1469 = vpop.f32.mrf.mxu0
        %v1470 = vadd.f32 %v1359, %v1469
        %v1471 = vpop.f32.mrf.mxu0
        %v1472 = vadd.f32 %v1361, %v1471
        %1473 = vdwg.mxu0
        %v1474 = vld [vmem:[%s223 + $0x18] sm:$0xf]
        %v1475 = vld [vmem:[%s223 + $0x1c] sm:$0xf]
        %v1476 = vld [vmem:[%s223 + $0x20] sm:$0xf]
        %v1477 = vld [vmem:[%s223 + $0x24] sm:$0xf]
        %v1478 = vld [vmem:[%s223 + $0x28] sm:$0xf]
        %v1479 = vld [vmem:[%s223 + $0x2c] sm:$0xf]
        %v1480 = vld [vmem:[%s223 + $0x30] sm:$0xf]
        %v1481 = vld [vmem:[%s223 + $0x34] sm:$0xf]
        %v1482 = vld [vmem:[%s223 + $0x38] sm:$0xf]
        %v1483 = vld [vmem:[%s223 + $0x3c] sm:$0xf]
        %v1484 = vld [vmem:[%s223 + $0x40] sm:$0xf]
        %v1485 = vld [vmem:[%s223 + $0x44] sm:$0xf]
        %v1486 = vld [vmem:[%s223 + $0x48] sm:$0xf]
        %v1487 = vld [vmem:[%s223 + $0x4c] sm:$0xf]
        %v1488 = vld [vmem:[%s223 + $0x50] sm:$0xf]
        %v1489 = vld [vmem:[%s223 + $0x54] sm:$0xf]
        %v1490 = vld [vmem:[%s223 + $0x58] sm:$0xf]
        %v1491 = vld [vmem:[%s223 + $0x5c] sm:$0xf]
        %v1492 = vld [vmem:[%s223 + $0x60] sm:$0xf]
        %v1493 = vld [vmem:[%s223 + $0x64] sm:$0xf]
        %v1494 = vld [vmem:[%s223 + $0x68] sm:$0xf]
        %v1495 = vld [vmem:[%s223 + $0x6c] sm:$0xf]
        %v1496 = vld [vmem:[%s223 + $0x70] sm:$0xf]
        %v1497 = vld [vmem:[%s223 + $0x74] sm:$0xf]
        %v1498 = vld [vmem:[%s223 + $0x78] sm:$0xf]
        %v1499 = vld [vmem:[%s223 + $0x7c] sm:$0xf]
        %v1500 = vld [vmem:[%s223 + $0x80] sm:$0xf]
        %v1501 = vld [vmem:[%s223 + $0x84] sm:$0xf]
        %v1502 = vld [vmem:[%s223 + $0x88] sm:$0xf]
        %v1503 = vld [vmem:[%s223 + $0x8c] sm:$0xf]
        %v1504 = vld [vmem:[%s223 + $0x90] sm:$0xf]
        %v1505 = vld [vmem:[%s223 + $0x94] sm:$0xf]
        %v1506 = vld [vmem:[%s2 + $0x14] sm:$0xf]
        %v1507 = vld [vmem:[%s2 + $0x18] sm:$0xf]
        %v1508 = vld [vmem:[%s2 + $0x1c] sm:$0x3]
        %v1541 = vunpack.c.l.b16 %v1474
        %v1542 = vunpack.c.l.b16 %v1475
        %v1543 = vunpack.c.l.b16 %v1476
        %v1544 = vunpack.c.l.b16 %v1477
        %v1545 = vunpack.c.l.b16 %v1478
        %v1546 = vunpack.c.l.b16 %v1479
        %v1547 = vunpack.c.l.b16 %v1480
        %v1548 = vunpack.c.l.b16 %v1481
        %v1549 = vunpack.c.l.b16 %v1482
        %v1550 = vunpack.c.l.b16 %v1483
        %v1551 = vunpack.c.l.b16 %v1484
        %v1552 = vunpack.c.l.b16 %v1485
        %v1553 = vunpack.c.l.b16 %v1486
        %v1554 = vunpack.c.l.b16 %v1487
        %v1555 = vunpack.c.l.b16 %v1488
        %v1556 = vunpack.c.l.b16 %v1489
        %v1557 = vunpack.c.l.b16 %v1490
        %v1558 = vunpack.c.l.b16 %v1491
        %v1559 = vunpack.c.l.b16 %v1492
        %v1560 = vunpack.c.l.b16 %v1493
        %v1561 = vunpack.c.l.b16 %v1494
        %v1562 = vunpack.c.l.b16 %v1495
        %v1563 = vunpack.c.l.b16 %v1496
        %v1564 = vunpack.c.l.b16 %v1497
        %v1565 = vunpack.c.l.b16 %v1498
        %v1566 = vunpack.c.l.b16 %v1499
        %v1567 = vunpack.c.l.b16 %v1500
        %v1568 = vunpack.c.l.b16 %v1501
        %v1569 = vunpack.c.l.b16 %v1502
        %v1570 = vunpack.c.l.b16 %v1503
        %v1571 = vunpack.c.l.b16 %v1504
        %v1572 = vunpack.c.l.b16 %v1505
        %v1573 = vpack.c.b16 %v1542, %v1541
        %v1574 = vpack.c.b16 %v1544, %v1543
        %v1575 = vpack.c.b16 %v1546, %v1545
        %v1576 = vpack.c.b16 %v1548, %v1547
        %v1577 = vpack.c.b16 %v1550, %v1549
        %v1578 = vpack.c.b16 %v1552, %v1551
        %v1579 = vpack.c.b16 %v1554, %v1553
        %v1580 = vpack.c.b16 %v1556, %v1555
        %v1581 = vpack.c.b16 %v1558, %v1557
        %v1582 = vpack.c.b16 %v1560, %v1559
        %v1583 = vpack.c.b16 %v1562, %v1561
        %v1584 = vpack.c.b16 %v1564, %v1563
        %v1585 = vpack.c.b16 %v1566, %v1565
        %v1586 = vpack.c.b16 %v1568, %v1567
        %v1587 = vpack.c.b16 %v1570, %v1569
        %v1588 = vpack.c.b16 %v1572, %v1571
        %1589 = vrot.lane.b32.xlu0 %v1573, 124
        %v1590 = vpop.permute.xlu0 %1589
        %1591 = vrot.lane.b32.xlu0 %v1574, 124
        %v1592 = vpop.permute.xlu0 %1591
        %1593 = vrot.lane.b32.xlu0 %v1575, 124
        %v1594 = vpop.permute.xlu0 %1593
        %1595 = vrot.lane.b32.xlu0 %v1576, 124
        %v1596 = vpop.permute.xlu0 %1595
        %1597 = vrot.lane.b32.xlu0 %v1577, 124
        %v1598 = vpop.permute.xlu0 %1597
        %1599 = vrot.lane.b32.xlu0 %v1578, 124
        %v1600 = vpop.permute.xlu0 %1599
        %1601 = vrot.lane.b32.xlu0 %v1579, 124
        %v1602 = vpop.permute.xlu0 %1601
        %1603 = vrot.lane.b32.xlu0 %v1580, 124
        %v1604 = vpop.permute.xlu0 %1603
        %1605 = vrot.lane.b32.xlu0 %v1581, 124
        %v1606 = vpop.permute.xlu0 %1605
        %1607 = vrot.lane.b32.xlu0 %v1582, 124
        %v1608 = vpop.permute.xlu0 %1607
        %1609 = vrot.lane.b32.xlu0 %v1583, 124
        %v1610 = vpop.permute.xlu0 %1609
        %1611 = vrot.lane.b32.xlu0 %v1584, 124
        %v1612 = vpop.permute.xlu0 %1611
        %1613 = vrot.lane.b32.xlu0 %v1585, 124
        %v1614 = vpop.permute.xlu0 %1613
        %1615 = vrot.lane.b32.xlu0 %v1586, 124
        %v1616 = vpop.permute.xlu0 %1615
        %1617 = vrot.lane.b32.xlu0 %v1587, 124
        %v1618 = vpop.permute.xlu0 %1617
        %1619 = vrot.lane.b32.xlu0 %v1588, 124
        %v1620 = vpop.permute.xlu0 %1619
        %v1624 = vunpack.c.l.b16 %v1506
        %v1625 = vunpack.c.l.b16 %v1507
        %v1626 = vunpack.c.l.b16 %v1508
        %v1627 = vpack.c.b16 %v1625, %v1624
        %v1628 = vpack.c.b16 %v1626, %v1626
        %v1631 = vsel %vm1221, %v1590, 0
        %v1634 = vsel %vm1221, %v1592, 0
        %v1637 = vsel %vm1221, %v1594, 0
        %v1640 = vsel %vm1221, %v1596, 0
        %v1643 = vsel %vm1221, %v1598, 0
        %v1646 = vsel %vm1221, %v1600, 0
        %v1649 = vsel %vm1221, %v1602, 0
        %v1652 = vsel %vm1221, %v1604, 0
        %v1655 = vsel %vm1221, %v1606, 0
        %v1658 = vsel %vm1221, %v1608, 0
        %v1661 = vsel %vm1221, %v1610, 0
        %v1664 = vsel %vm1221, %v1612, 0
        %v1667 = vsel %vm1221, %v1614, 0
        %v1670 = vsel %vm1221, %v1616, 0
        %v1673 = vsel %vm1221, %v1618, 0
        %v1676 = vsel %vm1221, %v1620, 0
        %v1679 = vsel %vm1270, %v1628, 0
        %1681 = vmatpush.bf16.msra.mxu0 0
        %1682 = vmatpush.bf16.msra.mxu0 0
        %1683 = vmatpush.bf16.msra.mxu0 0
        %1684 = vmatpush.bf16.msra.mxu0 0
        %1685 = vmatpush.bf16.msra.mxu0 0
        %1686 = vmatpush.bf16.msra.mxu0 0
        %1687 = vmatpush.bf16.msra.mxu0 %v1679
        %1688 = vmatpush.bf16.msra.mxu0 %v1627
        %1689 = vmatmul.bf16.gmra.mxu0 %v1631
        %v1690 = vpop.f32.mrf.mxu0
        %v1691 = vadd.f32 0.0, %v1690
        %v1692 = vpop.f32.mrf.mxu0
        %v1693 = vadd.f32 0.0, %v1692
        %1694 = vmatmul.bf16.gmra.mxu0 %v1634
        %v1695 = vpop.f32.mrf.mxu0
        %v1696 = vadd.f32 0.0, %v1695
        %v1697 = vpop.f32.mrf.mxu0
        %v1698 = vadd.f32 0.0, %v1697
        %1699 = vmatmul.bf16.gmra.mxu0 %v1637
        %v1700 = vpop.f32.mrf.mxu0
        %v1701 = vadd.f32 0.0, %v1700
        %v1702 = vpop.f32.mrf.mxu0
        %v1703 = vadd.f32 0.0, %v1702
        %1704 = vmatmul.bf16.gmra.mxu0 %v1640
        %v1705 = vpop.f32.mrf.mxu0
        %v1706 = vadd.f32 0.0, %v1705
        %v1707 = vpop.f32.mrf.mxu0
        %v1708 = vadd.f32 0.0, %v1707
        %1709 = vmatmul.bf16.gmra.mxu0 %v1643
        %v1710 = vpop.f32.mrf.mxu0
        %v1711 = vadd.f32 0.0, %v1710
        %v1712 = vpop.f32.mrf.mxu0
        %v1713 = vadd.f32 0.0, %v1712
        %1714 = vmatmul.bf16.gmra.mxu0 %v1646
        %v1715 = vpop.f32.mrf.mxu0
        %v1716 = vadd.f32 0.0, %v1715
        %v1717 = vpop.f32.mrf.mxu0
        %v1718 = vadd.f32 0.0, %v1717
        %1719 = vmatmul.bf16.gmra.mxu0 %v1649
        %v1720 = vpop.f32.mrf.mxu0
        %v1721 = vadd.f32 0.0, %v1720
        %v1722 = vpop.f32.mrf.mxu0
        %v1723 = vadd.f32 0.0, %v1722
        %1724 = vmatmul.bf16.gmra.mxu0 %v1652
        %v1725 = vpop.f32.mrf.mxu0
        %v1726 = vadd.f32 0.0, %v1725
        %v1727 = vpop.f32.mrf.mxu0
        %v1728 = vadd.f32 0.0, %v1727
        %1729 = vmatmul.bf16.gmra.mxu0 %v1655
        %v1730 = vpop.f32.mrf.mxu0
        %v1731 = vadd.f32 0.0, %v1730
        %v1732 = vpop.f32.mrf.mxu0
        %v1733 = vadd.f32 0.0, %v1732
        %1734 = vmatmul.bf16.gmra.mxu0 %v1658
        %v1735 = vpop.f32.mrf.mxu0
        %v1736 = vadd.f32 0.0, %v1735
        %v1737 = vpop.f32.mrf.mxu0
        %v1738 = vadd.f32 0.0, %v1737
        %1739 = vmatmul.bf16.gmra.mxu0 %v1661
        %v1740 = vpop.f32.mrf.mxu0
        %v1741 = vadd.f32 0.0, %v1740
        %v1742 = vpop.f32.mrf.mxu0
        %v1743 = vadd.f32 0.0, %v1742
        %1744 = vmatmul.bf16.gmra.mxu0 %v1664
        %v1745 = vpop.f32.mrf.mxu0
        %v1746 = vadd.f32 0.0, %v1745
        %v1747 = vpop.f32.mrf.mxu0
        %v1748 = vadd.f32 0.0, %v1747
        %1749 = vmatmul.bf16.gmra.mxu0 %v1667
        %v1750 = vpop.f32.mrf.mxu0
        %v1751 = vadd.f32 0.0, %v1750
        %v1752 = vpop.f32.mrf.mxu0
        %v1753 = vadd.f32 0.0, %v1752
        %1754 = vmatmul.bf16.gmra.mxu0 %v1670
        %v1755 = vpop.f32.mrf.mxu0
        %v1756 = vadd.f32 0.0, %v1755
        %v1757 = vpop.f32.mrf.mxu0
        %v1758 = vadd.f32 0.0, %v1757
        %1759 = vmatmul.bf16.gmra.mxu0 %v1673
        %v1760 = vpop.f32.mrf.mxu0
        %v1761 = vadd.f32 0.0, %v1760
        %v1762 = vpop.f32.mrf.mxu0
        %v1763 = vadd.f32 0.0, %v1762
        %1764 = vmatmul.bf16.gmra.mxu0 %v1676
        %v1765 = vpop.f32.mrf.mxu0
        %v1766 = vadd.f32 0.0, %v1765
        %v1767 = vpop.f32.mrf.mxu0
        %v1768 = vadd.f32 0.0, %v1767
        %1769 = vdwg.mxu0
        %v1770 = vadd.f32 %v1395, %v1691
        %v1771 = vadd.f32 %v1397, %v1693
        %v1772 = vadd.f32 %v1400, %v1696
        %v1773 = vadd.f32 %v1402, %v1698
        %v1774 = vadd.f32 %v1405, %v1701
        %v1775 = vadd.f32 %v1407, %v1703
        %v1776 = vadd.f32 %v1410, %v1706
        %v1777 = vadd.f32 %v1412, %v1708
        %v1778 = vadd.f32 %v1415, %v1711
        %v1779 = vadd.f32 %v1417, %v1713
        %v1780 = vadd.f32 %v1420, %v1716
        %v1781 = vadd.f32 %v1422, %v1718
        %v1782 = vadd.f32 %v1425, %v1721
        %v1783 = vadd.f32 %v1427, %v1723
        %v1784 = vadd.f32 %v1430, %v1726
        %v1785 = vadd.f32 %v1432, %v1728
        %v1786 = vadd.f32 %v1435, %v1731
        %v1787 = vadd.f32 %v1437, %v1733
        %v1788 = vadd.f32 %v1440, %v1736
        %v1789 = vadd.f32 %v1442, %v1738
        %v1790 = vadd.f32 %v1445, %v1741
        %v1791 = vadd.f32 %v1447, %v1743
        %v1792 = vadd.f32 %v1450, %v1746
        %v1793 = vadd.f32 %v1452, %v1748
        %v1794 = vadd.f32 %v1455, %v1751
        %v1795 = vadd.f32 %v1457, %v1753
        %v1796 = vadd.f32 %v1460, %v1756
        %v1797 = vadd.f32 %v1462, %v1758
        %v1798 = vadd.f32 %v1465, %v1761
        %v1799 = vadd.f32 %v1467, %v1763
        %v1800 = vadd.f32 %v1470, %v1766
        %v1801 = vadd.f32 %v1472, %v1768
        %v1802 = vld [vmem:[%s223 + $0x20] sm:$0xf]
        %v1803 = vld [vmem:[%s223 + $0x24] sm:$0xf]
        %v1804 = vld [vmem:[%s223 + $0x28] sm:$0xf]
        %v1805 = vld [vmem:[%s223 + $0x2c] sm:$0xf]
        %v1806 = vld [vmem:[%s223 + $0x30] sm:$0xf]
        %v1807 = vld [vmem:[%s223 + $0x34] sm:$0xf]
        %v1808 = vld [vmem:[%s223 + $0x38] sm:$0xf]
        %v1809 = vld [vmem:[%s223 + $0x3c] sm:$0xf]
        %v1810 = vld [vmem:[%s223 + $0x40] sm:$0xf]
        %v1811 = vld [vmem:[%s223 + $0x44] sm:$0xf]
        %v1812 = vld [vmem:[%s223 + $0x48] sm:$0xf]
        %v1813 = vld [vmem:[%s223 + $0x4c] sm:$0xf]
        %v1814 = vld [vmem:[%s223 + $0x50] sm:$0xf]
        %v1815 = vld [vmem:[%s223 + $0x54] sm:$0xf]
        %v1816 = vld [vmem:[%s223 + $0x58] sm:$0xf]
        %v1817 = vld [vmem:[%s223 + $0x5c] sm:$0xf]
        %v1818 = vld [vmem:[%s223 + $0x60] sm:$0xf]
        %v1819 = vld [vmem:[%s223 + $0x64] sm:$0xf]
        %v1820 = vld [vmem:[%s223 + $0x68] sm:$0xf]
        %v1821 = vld [vmem:[%s223 + $0x6c] sm:$0xf]
        %v1822 = vld [vmem:[%s223 + $0x70] sm:$0xf]
        %v1823 = vld [vmem:[%s223 + $0x74] sm:$0xf]
        %v1824 = vld [vmem:[%s223 + $0x78] sm:$0xf]
        %v1825 = vld [vmem:[%s223 + $0x7c] sm:$0xf]
        %v1826 = vld [vmem:[%s223 + $0x80] sm:$0xf]
        %v1827 = vld [vmem:[%s223 + $0x84] sm:$0xf]
        %v1828 = vld [vmem:[%s223 + $0x88] sm:$0xf]
        %v1829 = vld [vmem:[%s223 + $0x8c] sm:$0xf]
        %v1830 = vld [vmem:[%s223 + $0x90] sm:$0xf]
        %v1831 = vld [vmem:[%s223 + $0x94] sm:$0xf]
        %v1832 = vld [vmem:[%s223 + $0x98] sm:$0xf]
        %v1833 = vld [vmem:[%s223 + $0x9c] sm:$0xf]
        %v1834 = vld [vmem:[%s2 + $0x1c] sm:$0xc]
        %v1835 = vld [vmem:[%s2 + $0x20] sm:$0xf]
        %v1836 = vld [vmem:[%s2 + $0x24] sm:$0xf]
        %v1869 = vunpack.c.l.b16 %v1802
        %v1870 = vunpack.c.l.b16 %v1803
        %v1871 = vunpack.c.l.b16 %v1804
        %v1872 = vunpack.c.l.b16 %v1805
        %v1873 = vunpack.c.l.b16 %v1806
        %v1874 = vunpack.c.l.b16 %v1807
        %v1875 = vunpack.c.l.b16 %v1808
        %v1876 = vunpack.c.l.b16 %v1809
        %v1877 = vunpack.c.l.b16 %v1810
        %v1878 = vunpack.c.l.b16 %v1811
        %v1879 = vunpack.c.l.b16 %v1812
        %v1880 = vunpack.c.l.b16 %v1813
        %v1881 = vunpack.c.l.b16 %v1814
        %v1882 = vunpack.c.l.b16 %v1815
        %v1883 = vunpack.c.l.b16 %v1816
        %v1884 = vunpack.c.l.b16 %v1817
        %v1885 = vunpack.c.l.b16 %v1818
        %v1886 = vunpack.c.l.b16 %v1819
        %v1887 = vunpack.c.l.b16 %v1820
        %v1888 = vunpack.c.l.b16 %v1821
        %v1889 = vunpack.c.l.b16 %v1822
        %v1890 = vunpack.c.l.b16 %v1823
        %v1891 = vunpack.c.l.b16 %v1824
        %v1892 = vunpack.c.l.b16 %v1825
        %v1893 = vunpack.c.l.b16 %v1826
        %v1894 = vunpack.c.l.b16 %v1827
        %v1895 = vunpack.c.l.b16 %v1828
        %v1896 = vunpack.c.l.b16 %v1829
        %v1897 = vunpack.c.l.b16 %v1830
        %v1898 = vunpack.c.l.b16 %v1831
        %v1899 = vunpack.c.l.b16 %v1832
        %v1900 = vunpack.c.l.b16 %v1833
        %v1901 = vpack.c.b16 %v1870, %v1869
        %v1902 = vpack.c.b16 %v1872, %v1871
        %v1903 = vpack.c.b16 %v1874, %v1873
        %v1904 = vpack.c.b16 %v1876, %v1875
        %v1905 = vpack.c.b16 %v1878, %v1877
        %v1906 = vpack.c.b16 %v1880, %v1879
        %v1907 = vpack.c.b16 %v1882, %v1881
        %v1908 = vpack.c.b16 %v1884, %v1883
        %v1909 = vpack.c.b16 %v1886, %v1885
        %v1910 = vpack.c.b16 %v1888, %v1887
        %v1911 = vpack.c.b16 %v1890, %v1889
        %v1912 = vpack.c.b16 %v1892, %v1891
        %v1913 = vpack.c.b16 %v1894, %v1893
        %v1914 = vpack.c.b16 %v1896, %v1895
        %v1915 = vpack.c.b16 %v1898, %v1897
        %v1916 = vpack.c.b16 %v1900, %v1899
        %1917 = vrot.lane.b32.xlu0 %v1901, 124
        %v1918 = vpop.permute.xlu0 %1917
        %1919 = vrot.lane.b32.xlu0 %v1902, 124
        %v1920 = vpop.permute.xlu0 %1919
        %1921 = vrot.lane.b32.xlu0 %v1903, 124
        %v1922 = vpop.permute.xlu0 %1921
        %1923 = vrot.lane.b32.xlu0 %v1904, 124
        %v1924 = vpop.permute.xlu0 %1923
        %1925 = vrot.lane.b32.xlu0 %v1905, 124
        %v1926 = vpop.permute.xlu0 %1925
        %1927 = vrot.lane.b32.xlu0 %v1906, 124
        %v1928 = vpop.permute.xlu0 %1927
        %1929 = vrot.lane.b32.xlu0 %v1907, 124
        %v1930 = vpop.permute.xlu0 %1929
        %1931 = vrot.lane.b32.xlu0 %v1908, 124
        %v1932 = vpop.permute.xlu0 %1931
        %1933 = vrot.lane.b32.xlu0 %v1909, 124
        %v1934 = vpop.permute.xlu0 %1933
        %1935 = vrot.lane.b32.xlu0 %v1910, 124
        %v1936 = vpop.permute.xlu0 %1935
        %1937 = vrot.lane.b32.xlu0 %v1911, 124
        %v1938 = vpop.permute.xlu0 %1937
        %1939 = vrot.lane.b32.xlu0 %v1912, 124
        %v1940 = vpop.permute.xlu0 %1939
        %1941 = vrot.lane.b32.xlu0 %v1913, 124
        %v1942 = vpop.permute.xlu0 %1941
        %1943 = vrot.lane.b32.xlu0 %v1914, 124
        %v1944 = vpop.permute.xlu0 %1943
        %1945 = vrot.lane.b32.xlu0 %v1915, 124
        %v1946 = vpop.permute.xlu0 %1945
        %1947 = vrot.lane.b32.xlu0 %v1916, 124
        %v1948 = vpop.permute.xlu0 %1947
        %v1952 = vunpack.c.l.b16 %v1834
        %v1953 = vunpack.c.l.b16 %v1835
        %v1954 = vunpack.c.l.b16 %v1836
        %v1955 = vpack.c.b16 %v1953, %v1952
        %v1956 = vpack.c.b16 %v1954, %v1954
        %v1957 = vrot.slane %v1955, 2
        %v1958 = vrot.slane %v1956, 2
        %v1959 = vsel %vm1216, %v1957, %v1958
        %v1962 = vsel %vm1221, %v1918, 0
        %v1965 = vsel %vm1221, %v1920, 0
        %v1968 = vsel %vm1221, %v1922, 0
        %v1971 = vsel %vm1221, %v1924, 0
        %v1974 = vsel %vm1221, %v1926, 0
        %v1977 = vsel %vm1221, %v1928, 0
        %v1980 = vsel %vm1221, %v1930, 0
        %v1983 = vsel %vm1221, %v1932, 0
        %v1986 = vsel %vm1221, %v1934, 0
        %v1989 = vsel %vm1221, %v1936, 0
        %v1992 = vsel %vm1221, %v1938, 0
        %v1995 = vsel %vm1221, %v1940, 0
        %v1998 = vsel %vm1221, %v1942, 0
        %v2001 = vsel %vm1221, %v1944, 0
        %v2004 = vsel %vm1221, %v1946, 0
        %v2007 = vsel %vm1221, %v1948, 0
        %v2010 = vsel %vm1270, %v1958, 0
        %2012 = vmatpush.bf16.msra.mxu0 0
        %2013 = vmatpush.bf16.msra.mxu0 0
        %2014 = vmatpush.bf16.msra.mxu0 0
        %2015 = vmatpush.bf16.msra.mxu0 0
        %2016 = vmatpush.bf16.msra.mxu0 0
        %2017 = vmatpush.bf16.msra.mxu0 0
        %2018 = vmatpush.bf16.msra.mxu0 %v2010
        %2019 = vmatpush.bf16.msra.mxu0 %v1959
        %2020 = vmatmul.bf16.gmra.mxu0 %v1962
        %v2021 = vpop.f32.mrf.mxu0
        %v2022 = vadd.f32 0.0, %v2021
        %v2023 = vpop.f32.mrf.mxu0
        %v2024 = vadd.f32 0.0, %v2023
        %2025 = vmatmul.bf16.gmra.mxu0 %v1965
        %v2026 = vpop.f32.mrf.mxu0
        %v2027 = vadd.f32 0.0, %v2026
        %v2028 = vpop.f32.mrf.mxu0
        %v2029 = vadd.f32 0.0, %v2028
        %2030 = vmatmul.bf16.gmra.mxu0 %v1968
        %v2031 = vpop.f32.mrf.mxu0
        %v2032 = vadd.f32 0.0, %v2031
        %v2033 = vpop.f32.mrf.mxu0
        %v2034 = vadd.f32 0.0, %v2033
        %2035 = vmatmul.bf16.gmra.mxu0 %v1971
        %v2036 = vpop.f32.mrf.mxu0
        %v2037 = vadd.f32 0.0, %v2036
        %v2038 = vpop.f32.mrf.mxu0
        %v2039 = vadd.f32 0.0, %v2038
        %2040 = vmatmul.bf16.gmra.mxu0 %v1974
        %v2041 = vpop.f32.mrf.mxu0
        %v2042 = vadd.f32 0.0, %v2041
        %v2043 = vpop.f32.mrf.mxu0
        %v2044 = vadd.f32 0.0, %v2043
        %2045 = vmatmul.bf16.gmra.mxu0 %v1977
        %v2046 = vpop.f32.mrf.mxu0
        %v2047 = vadd.f32 0.0, %v2046
        %v2048 = vpop.f32.mrf.mxu0
        %v2049 = vadd.f32 0.0, %v2048
        %2050 = vmatmul.bf16.gmra.mxu0 %v1980
        %v2051 = vpop.f32.mrf.mxu0
        %v2052 = vadd.f32 0.0, %v2051
        %v2053 = vpop.f32.mrf.mxu0
        %v2054 = vadd.f32 0.0, %v2053
        %2055 = vmatmul.bf16.gmra.mxu0 %v1983
        %v2056 = vpop.f32.mrf.mxu0
        %v2057 = vadd.f32 0.0, %v2056
        %v2058 = vpop.f32.mrf.mxu0
        %v2059 = vadd.f32 0.0, %v2058
        %2060 = vmatmul.bf16.gmra.mxu0 %v1986
        %v2061 = vpop.f32.mrf.mxu0
        %v2062 = vadd.f32 0.0, %v2061
        %v2063 = vpop.f32.mrf.mxu0
        %v2064 = vadd.f32 0.0, %v2063
        %2065 = vmatmul.bf16.gmra.mxu0 %v1989
        %v2066 = vpop.f32.mrf.mxu0
        %v2067 = vadd.f32 0.0, %v2066
        %v2068 = vpop.f32.mrf.mxu0
        %v2069 = vadd.f32 0.0, %v2068
        %2070 = vmatmul.bf16.gmra.mxu0 %v1992
        %v2071 = vpop.f32.mrf.mxu0
        %v2072 = vadd.f32 0.0, %v2071
        %v2073 = vpop.f32.mrf.mxu0
        %v2074 = vadd.f32 0.0, %v2073
        %2075 = vmatmul.bf16.gmra.mxu0 %v1995
        %v2076 = vpop.f32.mrf.mxu0
        %v2077 = vadd.f32 0.0, %v2076
        %v2078 = vpop.f32.mrf.mxu0
        %v2079 = vadd.f32 0.0, %v2078
        %2080 = vmatmul.bf16.gmra.mxu0 %v1998
        %v2081 = vpop.f32.mrf.mxu0
        %v2082 = vadd.f32 0.0, %v2081
        %v2083 = vpop.f32.mrf.mxu0
        %v2084 = vadd.f32 0.0, %v2083
        %2085 = vmatmul.bf16.gmra.mxu0 %v2001
        %v2086 = vpop.f32.mrf.mxu0
        %v2087 = vadd.f32 0.0, %v2086
        %v2088 = vpop.f32.mrf.mxu0
        %v2089 = vadd.f32 0.0, %v2088
        %2090 = vmatmul.bf16.gmra.mxu0 %v2004
        %v2091 = vpop.f32.mrf.mxu0
        %v2092 = vadd.f32 0.0, %v2091
        %v2093 = vpop.f32.mrf.mxu0
        %v2094 = vadd.f32 0.0, %v2093
        %2095 = vmatmul.bf16.gmra.mxu0 %v2007
        %v2096 = vpop.f32.mrf.mxu0
        %v2097 = vadd.f32 0.0, %v2096
        %v2098 = vpop.f32.mrf.mxu0
        %v2099 = vadd.f32 0.0, %v2098
        %2100 = vdwg.mxu0
        %v2101 = vadd.f32 %v1770, %v2022
        %v2102 = vadd.f32 %v1771, %v2024
        %v2103 = vadd.f32 %v1772, %v2027
        %v2104 = vadd.f32 %v1773, %v2029
        %v2105 = vadd.f32 %v1774, %v2032
        %v2106 = vadd.f32 %v1775, %v2034
        %v2107 = vadd.f32 %v1776, %v2037
        %v2108 = vadd.f32 %v1777, %v2039
        %v2109 = vadd.f32 %v1778, %v2042
        %v2110 = vadd.f32 %v1779, %v2044
        %v2111 = vadd.f32 %v1780, %v2047
        %v2112 = vadd.f32 %v1781, %v2049
        %v2113 = vadd.f32 %v1782, %v2052
        %v2114 = vadd.f32 %v1783, %v2054
        %v2115 = vadd.f32 %v1784, %v2057
        %v2116 = vadd.f32 %v1785, %v2059
        %v2117 = vadd.f32 %v1786, %v2062
        %v2118 = vadd.f32 %v1787, %v2064
        %v2119 = vadd.f32 %v1788, %v2067
        %v2120 = vadd.f32 %v1789, %v2069
        %v2121 = vadd.f32 %v1790, %v2072
        %v2122 = vadd.f32 %v1791, %v2074
        %v2123 = vadd.f32 %v1792, %v2077
        %v2124 = vadd.f32 %v1793, %v2079
        %v2125 = vadd.f32 %v1794, %v2082
        %v2126 = vadd.f32 %v1795, %v2084
        %v2127 = vadd.f32 %v1796, %v2087
        %v2128 = vadd.f32 %v1797, %v2089
        %v2129 = vadd.f32 %v1798, %v2092
        %v2130 = vadd.f32 %v1799, %v2094
        %v2131 = vadd.f32 %v1800, %v2097
        %v2132 = vadd.f32 %v1801, %v2099
        %v2133 = vld [vmem:[%s223 + $0x28] sm:$0xf]
        %v2134 = vld [vmem:[%s223 + $0x2c] sm:$0xf]
        %v2135 = vld [vmem:[%s223 + $0x30] sm:$0xf]
        %v2136 = vld [vmem:[%s223 + $0x34] sm:$0xf]
        %v2137 = vld [vmem:[%s223 + $0x38] sm:$0xf]
        %v2138 = vld [vmem:[%s223 + $0x3c] sm:$0xf]
        %v2139 = vld [vmem:[%s223 + $0x40] sm:$0xf]
        %v2140 = vld [vmem:[%s223 + $0x44] sm:$0xf]
        %v2141 = vld [vmem:[%s223 + $0x48] sm:$0xf]
        %v2142 = vld [vmem:[%s223 + $0x4c] sm:$0xf]
        %v2143 = vld [vmem:[%s223 + $0x50] sm:$0xf]
        %v2144 = vld [vmem:[%s223 + $0x54] sm:$0xf]
        %v2145 = vld [vmem:[%s223 + $0x58] sm:$0xf]
        %v2146 = vld [vmem:[%s223 + $0x5c] sm:$0xf]
        %v2147 = vld [vmem:[%s223 + $0x60] sm:$0xf]
        %v2148 = vld [vmem:[%s223 + $0x64] sm:$0xf]
        %v2149 = vld [vmem:[%s223 + $0x68] sm:$0xf]
        %v2150 = vld [vmem:[%s223 + $0x6c] sm:$0xf]
        %v2151 = vld [vmem:[%s223 + $0x70] sm:$0xf]
        %v2152 = vld [vmem:[%s223 + $0x74] sm:$0xf]
        %v2153 = vld [vmem:[%s223 + $0x78] sm:$0xf]
        %v2154 = vld [vmem:[%s223 + $0x7c] sm:$0xf]
        %v2155 = vld [vmem:[%s223 + $0x80] sm:$0xf]
        %v2156 = vld [vmem:[%s223 + $0x84] sm:$0xf]
        %v2157 = vld [vmem:[%s223 + $0x88] sm:$0xf]
        %v2158 = vld [vmem:[%s223 + $0x8c] sm:$0xf]
        %v2159 = vld [vmem:[%s223 + $0x90] sm:$0xf]
        %v2160 = vld [vmem:[%s223 + $0x94] sm:$0xf]
        %v2161 = vld [vmem:[%s223 + $0x98] sm:$0xf]
        %v2162 = vld [vmem:[%s223 + $0x9c] sm:$0xf]
        %v2163 = vld [vmem:[%s223 + $0xa0] sm:$0xf]
        %v2164 = vld [vmem:[%s223 + $0xa4] sm:$0xf]
        %v2165 = vld [vmem:[%s2 + $0x28] sm:$0xf]
        %v2166 = vld [vmem:[%s2 + $0x2c] sm:$0xf]
        %v2167 = vld [vmem:[%s2 + $0x30] sm:$0x3]
        %v2200 = vunpack.c.l.b16 %v2133
        %v2201 = vunpack.c.l.b16 %v2134
        %v2202 = vunpack.c.l.b16 %v2135
        %v2203 = vunpack.c.l.b16 %v2136
        %v2204 = vunpack.c.l.b16 %v2137
        %v2205 = vunpack.c.l.b16 %v2138
        %v2206 = vunpack.c.l.b16 %v2139
        %v2207 = vunpack.c.l.b16 %v2140
        %v2208 = vunpack.c.l.b16 %v2141
        %v2209 = vunpack.c.l.b16 %v2142
        %v2210 = vunpack.c.l.b16 %v2143
        %v2211 = vunpack.c.l.b16 %v2144
        %v2212 = vunpack.c.l.b16 %v2145
        %v2213 = vunpack.c.l.b16 %v2146
        %v2214 = vunpack.c.l.b16 %v2147
        %v2215 = vunpack.c.l.b16 %v2148
        %v2216 = vunpack.c.l.b16 %v2149
        %v2217 = vunpack.c.l.b16 %v2150
        %v2218 = vunpack.c.l.b16 %v2151
        %v2219 = vunpack.c.l.b16 %v2152
        %v2220 = vunpack.c.l.b16 %v2153
        %v2221 = vunpack.c.l.b16 %v2154
        %v2222 = vunpack.c.l.b16 %v2155
        %v2223 = vunpack.c.l.b16 %v2156
        %v2224 = vunpack.c.l.b16 %v2157
        %v2225 = vunpack.c.l.b16 %v2158
        %v2226 = vunpack.c.l.b16 %v2159
        %v2227 = vunpack.c.l.b16 %v2160
        %v2228 = vunpack.c.l.b16 %v2161
        %v2229 = vunpack.c.l.b16 %v2162
        %v2230 = vunpack.c.l.b16 %v2163
        %v2231 = vunpack.c.l.b16 %v2164
        %v2232 = vpack.c.b16 %v2201, %v2200
        %v2233 = vpack.c.b16 %v2203, %v2202
        %v2234 = vpack.c.b16 %v2205, %v2204
        %v2235 = vpack.c.b16 %v2207, %v2206
        %v2236 = vpack.c.b16 %v2209, %v2208
        %v2237 = vpack.c.b16 %v2211, %v2210
        %v2238 = vpack.c.b16 %v2213, %v2212
        %v2239 = vpack.c.b16 %v2215, %v2214
        %v2240 = vpack.c.b16 %v2217, %v2216
        %v2241 = vpack.c.b16 %v2219, %v2218
        %v2242 = vpack.c.b16 %v2221, %v2220
        %v2243 = vpack.c.b16 %v2223, %v2222
        %v2244 = vpack.c.b16 %v2225, %v2224
        %v2245 = vpack.c.b16 %v2227, %v2226
        %v2246 = vpack.c.b16 %v2229, %v2228
        %v2247 = vpack.c.b16 %v2231, %v2230
        %2248 = vrot.lane.b32.xlu0 %v2232, 124
        %v2249 = vpop.permute.xlu0 %2248
        %2250 = vrot.lane.b32.xlu0 %v2233, 124
        %v2251 = vpop.permute.xlu0 %2250
        %2252 = vrot.lane.b32.xlu0 %v2234, 124
        %v2253 = vpop.permute.xlu0 %2252
        %2254 = vrot.lane.b32.xlu0 %v2235, 124
        %v2255 = vpop.permute.xlu0 %2254
        %2256 = vrot.lane.b32.xlu0 %v2236, 124
        %v2257 = vpop.permute.xlu0 %2256
        %2258 = vrot.lane.b32.xlu0 %v2237, 124
        %v2259 = vpop.permute.xlu0 %2258
        %2260 = vrot.lane.b32.xlu0 %v2238, 124
        %v2261 = vpop.permute.xlu0 %2260
        %2262 = vrot.lane.b32.xlu0 %v2239, 124
        %v2263 = vpop.permute.xlu0 %2262
        %2264 = vrot.lane.b32.xlu0 %v2240, 124
        %v2265 = vpop.permute.xlu0 %2264
        %2266 = vrot.lane.b32.xlu0 %v2241, 124
        %v2267 = vpop.permute.xlu0 %2266
        %2268 = vrot.lane.b32.xlu0 %v2242, 124
        %v2269 = vpop.permute.xlu0 %2268
        %2270 = vrot.lane.b32.xlu0 %v2243, 124
        %v2271 = vpop.permute.xlu0 %2270
        %2272 = vrot.lane.b32.xlu0 %v2244, 124
        %v2273 = vpop.permute.xlu0 %2272
        %2274 = vrot.lane.b32.xlu0 %v2245, 124
        %v2275 = vpop.permute.xlu0 %2274
        %2276 = vrot.lane.b32.xlu0 %v2246, 124
        %v2277 = vpop.permute.xlu0 %2276
        %2278 = vrot.lane.b32.xlu0 %v2247, 124
        %v2279 = vpop.permute.xlu0 %2278
        %v2283 = vunpack.c.l.b16 %v2165
        %v2284 = vunpack.c.l.b16 %v2166
        %v2285 = vunpack.c.l.b16 %v2167
        %v2286 = vpack.c.b16 %v2284, %v2283
        %v2287 = vpack.c.b16 %v2285, %v2285
        %v2290 = vsel %vm1221, %v2249, 0
        %v2293 = vsel %vm1221, %v2251, 0
        %v2296 = vsel %vm1221, %v2253, 0
        %v2299 = vsel %vm1221, %v2255, 0
        %v2302 = vsel %vm1221, %v2257, 0
        %v2305 = vsel %vm1221, %v2259, 0
        %v2308 = vsel %vm1221, %v2261, 0
        %v2311 = vsel %vm1221, %v2263, 0
        %v2314 = vsel %vm1221, %v2265, 0
        %v2317 = vsel %vm1221, %v2267, 0
        %v2320 = vsel %vm1221, %v2269, 0
        %v2323 = vsel %vm1221, %v2271, 0
        %v2326 = vsel %vm1221, %v2273, 0
        %v2329 = vsel %vm1221, %v2275, 0
        %v2332 = vsel %vm1221, %v2277, 0
        %v2335 = vsel %vm1221, %v2279, 0
        %v2338 = vsel %vm1270, %v2287, 0
        %2340 = vmatpush.bf16.msra.mxu0 0
        %2341 = vmatpush.bf16.msra.mxu0 0
        %2342 = vmatpush.bf16.msra.mxu0 0
        %2343 = vmatpush.bf16.msra.mxu0 0
        %2344 = vmatpush.bf16.msra.mxu0 0
        %2345 = vmatpush.bf16.msra.mxu0 0
        %2346 = vmatpush.bf16.msra.mxu0 %v2338
        %2347 = vmatpush.bf16.msra.mxu0 %v2286
        %2348 = vmatmul.bf16.gmra.mxu0 %v2290
        %v2349 = vpop.f32.mrf.mxu0
        %v2350 = vadd.f32 0.0, %v2349
        %v2351 = vpop.f32.mrf.mxu0
        %v2352 = vadd.f32 0.0, %v2351
        %2353 = vmatmul.bf16.gmra.mxu0 %v2293
        %v2354 = vpop.f32.mrf.mxu0
        %v2355 = vadd.f32 0.0, %v2354
        %v2356 = vpop.f32.mrf.mxu0
        %v2357 = vadd.f32 0.0, %v2356
        %2358 = vmatmul.bf16.gmra.mxu0 %v2296
        %v2359 = vpop.f32.mrf.mxu0
        %v2360 = vadd.f32 0.0, %v2359
        %v2361 = vpop.f32.mrf.mxu0
        %v2362 = vadd.f32 0.0, %v2361
        %2363 = vmatmul.bf16.gmra.mxu0 %v2299
        %v2364 = vpop.f32.mrf.mxu0
        %v2365 = vadd.f32 0.0, %v2364
        %v2366 = vpop.f32.mrf.mxu0
        %v2367 = vadd.f32 0.0, %v2366
        %2368 = vmatmul.bf16.gmra.mxu0 %v2302
        %v2369 = vpop.f32.mrf.mxu0
        %v2370 = vadd.f32 0.0, %v2369
        %v2371 = vpop.f32.mrf.mxu0
        %v2372 = vadd.f32 0.0, %v2371
        %2373 = vmatmul.bf16.gmra.mxu0 %v2305
        %v2374 = vpop.f32.mrf.mxu0
        %v2375 = vadd.f32 0.0, %v2374
        %v2376 = vpop.f32.mrf.mxu0
        %v2377 = vadd.f32 0.0, %v2376
        %2378 = vmatmul.bf16.gmra.mxu0 %v2308
        %v2379 = vpop.f32.mrf.mxu0
        %v2380 = vadd.f32 0.0, %v2379
        %v2381 = vpop.f32.mrf.mxu0
        %v2382 = vadd.f32 0.0, %v2381
        %2383 = vmatmul.bf16.gmra.mxu0 %v2311
        %v2384 = vpop.f32.mrf.mxu0
        %v2385 = vadd.f32 0.0, %v2384
        %v2386 = vpop.f32.mrf.mxu0
        %v2387 = vadd.f32 0.0, %v2386
        %2388 = vmatmul.bf16.gmra.mxu0 %v2314
        %v2389 = vpop.f32.mrf.mxu0
        %v2390 = vadd.f32 0.0, %v2389
        %v2391 = vpop.f32.mrf.mxu0
        %v2392 = vadd.f32 0.0, %v2391
        %2393 = vmatmul.bf16.gmra.mxu0 %v2317
        %v2394 = vpop.f32.mrf.mxu0
        %v2395 = vadd.f32 0.0, %v2394
        %v2396 = vpop.f32.mrf.mxu0
        %v2397 = vadd.f32 0.0, %v2396
        %2398 = vmatmul.bf16.gmra.mxu0 %v2320
        %v2399 = vpop.f32.mrf.mxu0
        %v2400 = vadd.f32 0.0, %v2399
        %v2401 = vpop.f32.mrf.mxu0
        %v2402 = vadd.f32 0.0, %v2401
        %2403 = vmatmul.bf16.gmra.mxu0 %v2323
        %v2404 = vpop.f32.mrf.mxu0
        %v2405 = vadd.f32 0.0, %v2404
        %v2406 = vpop.f32.mrf.mxu0
        %v2407 = vadd.f32 0.0, %v2406
        %2408 = vmatmul.bf16.gmra.mxu0 %v2326
        %v2409 = vpop.f32.mrf.mxu0
        %v2410 = vadd.f32 0.0, %v2409
        %v2411 = vpop.f32.mrf.mxu0
        %v2412 = vadd.f32 0.0, %v2411
        %2413 = vmatmul.bf16.gmra.mxu0 %v2329
        %v2414 = vpop.f32.mrf.mxu0
        %v2415 = vadd.f32 0.0, %v2414
        %v2416 = vpop.f32.mrf.mxu0
        %v2417 = vadd.f32 0.0, %v2416
        %2418 = vmatmul.bf16.gmra.mxu0 %v2332
        %v2419 = vpop.f32.mrf.mxu0
        %v2420 = vadd.f32 0.0, %v2419
        %v2421 = vpop.f32.mrf.mxu0
        %v2422 = vadd.f32 0.0, %v2421
        %2423 = vmatmul.bf16.gmra.mxu0 %v2335
        %v2424 = vpop.f32.mrf.mxu0
        %v2425 = vadd.f32 0.0, %v2424
        %v2426 = vpop.f32.mrf.mxu0
        %v2427 = vadd.f32 0.0, %v2426
        %2428 = vdwg.mxu0
        %v2429 = vadd.f32 %v2101, %v2350
        %v2430 = vadd.f32 %v2102, %v2352
        %v2431 = vadd.f32 %v2103, %v2355
        %v2432 = vadd.f32 %v2104, %v2357
        %v2433 = vadd.f32 %v2105, %v2360
        %v2434 = vadd.f32 %v2106, %v2362
        %v2435 = vadd.f32 %v2107, %v2365
        %v2436 = vadd.f32 %v2108, %v2367
        %v2437 = vadd.f32 %v2109, %v2370
        %v2438 = vadd.f32 %v2110, %v2372
        %v2439 = vadd.f32 %v2111, %v2375
        %v2440 = vadd.f32 %v2112, %v2377
        %v2441 = vadd.f32 %v2113, %v2380
        %v2442 = vadd.f32 %v2114, %v2382
        %v2443 = vadd.f32 %v2115, %v2385
        %v2444 = vadd.f32 %v2116, %v2387
        %v2445 = vadd.f32 %v2117, %v2390
        %v2446 = vadd.f32 %v2118, %v2392
        %v2447 = vadd.f32 %v2119, %v2395
        %v2448 = vadd.f32 %v2120, %v2397
        %v2449 = vadd.f32 %v2121, %v2400
        %v2450 = vadd.f32 %v2122, %v2402
        %v2451 = vadd.f32 %v2123, %v2405
        %v2452 = vadd.f32 %v2124, %v2407
        %v2453 = vadd.f32 %v2125, %v2410
        %v2454 = vadd.f32 %v2126, %v2412
        %v2455 = vadd.f32 %v2127, %v2415
        %v2456 = vadd.f32 %v2128, %v2417
        %v2457 = vadd.f32 %v2129, %v2420
        %v2458 = vadd.f32 %v2130, %v2422
        %v2459 = vadd.f32 %v2131, %v2425
        %v2460 = vadd.f32 %v2132, %v2427
        %v2461 = vld [vmem:[%s4] sm:$0x1]
        %v2463 = vperm.slane %v2461, 0
        %2464 = vrot.lane.b32.xlu0 %v2463, 120
        %v2465 = vpop.permute.xlu0 %2464
        %v2467 = vadd.f32 %v2429, %v2465
        %v2468 = vadd.f32 %v2430, %v2465
        %v2469 = vadd.f32 %v2431, %v2465
        %v2470 = vadd.f32 %v2432, %v2465
        %v2471 = vadd.f32 %v2433, %v2465
        %v2472 = vadd.f32 %v2434, %v2465
        %v2473 = vadd.f32 %v2435, %v2465
        %v2474 = vadd.f32 %v2436, %v2465
        %v2475 = vadd.f32 %v2437, %v2465
        %v2476 = vadd.f32 %v2438, %v2465
        %v2477 = vadd.f32 %v2439, %v2465
        %v2478 = vadd.f32 %v2440, %v2465
        %v2479 = vadd.f32 %v2441, %v2465
        %v2480 = vadd.f32 %v2442, %v2465
        %v2481 = vadd.f32 %v2443, %v2465
        %v2482 = vadd.f32 %v2444, %v2465
        %v2483 = vadd.f32 %v2445, %v2465
        %v2484 = vadd.f32 %v2446, %v2465
        %v2485 = vadd.f32 %v2447, %v2465
        %v2486 = vadd.f32 %v2448, %v2465
        %v2487 = vadd.f32 %v2449, %v2465
        %v2488 = vadd.f32 %v2450, %v2465
        %v2489 = vadd.f32 %v2451, %v2465
        %v2490 = vadd.f32 %v2452, %v2465
        %v2491 = vadd.f32 %v2453, %v2465
        %v2492 = vadd.f32 %v2454, %v2465
        %v2493 = vadd.f32 %v2455, %v2465
        %v2494 = vadd.f32 %v2456, %v2465
        %v2495 = vadd.f32 %v2457, %v2465
        %v2496 = vadd.f32 %v2458, %v2465
        %v2497 = vadd.f32 %v2459, %v2465
        %v2498 = vadd.f32 %v2460, %v2465
        %v2499 = vpack.c.bf16 %v2467, %v2467
        %v2500 = vpack.c.bf16 %v2468, %v2468
        %v2501 = vpack.c.bf16 %v2469, %v2469
        %v2502 = vpack.c.bf16 %v2470, %v2470
        %v2503 = vpack.c.bf16 %v2471, %v2471
        %v2504 = vpack.c.bf16 %v2472, %v2472
        %v2505 = vpack.c.bf16 %v2473, %v2473
        %v2506 = vpack.c.bf16 %v2474, %v2474
        %v2507 = vpack.c.bf16 %v2475, %v2475
        %v2508 = vpack.c.bf16 %v2476, %v2476
        %v2509 = vpack.c.bf16 %v2477, %v2477
        %v2510 = vpack.c.bf16 %v2478, %v2478
        %v2511 = vpack.c.bf16 %v2479, %v2479
        %v2512 = vpack.c.bf16 %v2480, %v2480
        %v2513 = vpack.c.bf16 %v2481, %v2481
        %v2514 = vpack.c.bf16 %v2482, %v2482
        %v2515 = vpack.c.bf16 %v2483, %v2483
        %v2516 = vpack.c.bf16 %v2484, %v2484
        %v2517 = vpack.c.bf16 %v2485, %v2485
        %v2518 = vpack.c.bf16 %v2486, %v2486
        %v2519 = vpack.c.bf16 %v2487, %v2487
        %v2520 = vpack.c.bf16 %v2488, %v2488
        %v2521 = vpack.c.bf16 %v2489, %v2489
        %v2522 = vpack.c.bf16 %v2490, %v2490
        %v2523 = vpack.c.bf16 %v2491, %v2491
        %v2524 = vpack.c.bf16 %v2492, %v2492
        %v2525 = vpack.c.bf16 %v2493, %v2493
        %v2526 = vpack.c.bf16 %v2494, %v2494
        %v2527 = vpack.c.bf16 %v2495, %v2495
        %v2528 = vpack.c.bf16 %v2496, %v2496
        %v2529 = vpack.c.bf16 %v2497, %v2497
        %v2530 = vpack.c.bf16 %v2498, %v2498
        %2563 = vrot.lane.b32.xlu0 %v2499, 8
        %v2564 = vpop.permute.xlu0 %2563
        %2565 = vrot.lane.b32.xlu0 %v2500, 8
        %v2566 = vpop.permute.xlu0 %2565
        %2567 = vrot.lane.b32.xlu0 %v2501, 8
        %v2568 = vpop.permute.xlu0 %2567
        %2569 = vrot.lane.b32.xlu0 %v2502, 8
        %v2570 = vpop.permute.xlu0 %2569
        %2571 = vrot.lane.b32.xlu0 %v2503, 8
        %v2572 = vpop.permute.xlu0 %2571
        %2573 = vrot.lane.b32.xlu0 %v2504, 8
        %v2574 = vpop.permute.xlu0 %2573
        %2575 = vrot.lane.b32.xlu0 %v2505, 8
        %v2576 = vpop.permute.xlu0 %2575
        %2577 = vrot.lane.b32.xlu0 %v2506, 8
        %v2578 = vpop.permute.xlu0 %2577
        %2579 = vrot.lane.b32.xlu0 %v2507, 8
        %v2580 = vpop.permute.xlu0 %2579
        %2581 = vrot.lane.b32.xlu0 %v2508, 8
        %v2582 = vpop.permute.xlu0 %2581
        %2583 = vrot.lane.b32.xlu0 %v2509, 8
        %v2584 = vpop.permute.xlu0 %2583
        %2585 = vrot.lane.b32.xlu0 %v2510, 8
        %v2586 = vpop.permute.xlu0 %2585
        %2587 = vrot.lane.b32.xlu0 %v2511, 8
        %v2588 = vpop.permute.xlu0 %2587
        %2589 = vrot.lane.b32.xlu0 %v2512, 8
        %v2590 = vpop.permute.xlu0 %2589
        %2591 = vrot.lane.b32.xlu0 %v2513, 8
        %v2592 = vpop.permute.xlu0 %2591
        %2593 = vrot.lane.b32.xlu0 %v2514, 8
        %v2594 = vpop.permute.xlu0 %2593
        %2595 = vrot.lane.b32.xlu0 %v2515, 8
        %v2596 = vpop.permute.xlu0 %2595
        %2597 = vrot.lane.b32.xlu0 %v2516, 8
        %v2598 = vpop.permute.xlu0 %2597
        %2599 = vrot.lane.b32.xlu0 %v2517, 8
        %v2600 = vpop.permute.xlu0 %2599
        %2601 = vrot.lane.b32.xlu0 %v2518, 8
        %v2602 = vpop.permute.xlu0 %2601
        %2603 = vrot.lane.b32.xlu0 %v2519, 8
        %v2604 = vpop.permute.xlu0 %2603
        %2605 = vrot.lane.b32.xlu0 %v2520, 8
        %v2606 = vpop.permute.xlu0 %2605
        %2607 = vrot.lane.b32.xlu0 %v2521, 8
        %v2608 = vpop.permute.xlu0 %2607
        %2609 = vrot.lane.b32.xlu0 %v2522, 8
        %v2610 = vpop.permute.xlu0 %2609
        %2611 = vrot.lane.b32.xlu0 %v2523, 8
        %v2612 = vpop.permute.xlu0 %2611
        %2613 = vrot.lane.b32.xlu0 %v2524, 8
        %v2614 = vpop.permute.xlu0 %2613
        %2615 = vrot.lane.b32.xlu0 %v2525, 8
        %v2616 = vpop.permute.xlu0 %2615
        %2617 = vrot.lane.b32.xlu0 %v2526, 8
        %v2618 = vpop.permute.xlu0 %2617
        %2619 = vrot.lane.b32.xlu0 %v2527, 8
        %v2620 = vpop.permute.xlu0 %2619
        %2621 = vrot.lane.b32.xlu0 %v2528, 8
        %v2622 = vpop.permute.xlu0 %2621
        %2623 = vrot.lane.b32.xlu0 %v2529, 8
        %v2624 = vpop.permute.xlu0 %2623
        %2625 = vrot.lane.b32.xlu0 %v2530, 8
        %v2626 = vpop.permute.xlu0 %2625
        %vm2659 = vcmask 126016
        %2660 = vst.msk [vmem:[%s218] sm:$0xf] %vm2659, %v2564
        %2661 = vst.msk [vmem:[%s218 + $0x4] sm:$0xf] %vm2659, %v2566
        %2662 = vst.msk [vmem:[%s218 + $0x8] sm:$0xf] %vm2659, %v2568
        %2663 = vst.msk [vmem:[%s218 + $0xc] sm:$0xf] %vm2659, %v2570
        %2664 = vst.msk [vmem:[%s218 + $0x10] sm:$0xf] %vm2659, %v2572
        %2665 = vst.msk [vmem:[%s218 + $0x14] sm:$0xf] %vm2659, %v2574
        %2666 = vst.msk [vmem:[%s218 + $0x18] sm:$0xf] %vm2659, %v2576
        %2667 = vst.msk [vmem:[%s218 + $0x1c] sm:$0xf] %vm2659, %v2578
        %2668 = vst.msk [vmem:[%s218 + $0x20] sm:$0xf] %vm2659, %v2580
        %2669 = vst.msk [vmem:[%s218 + $0x24] sm:$0xf] %vm2659, %v2582
        %2670 = vst.msk [vmem:[%s218 + $0x28] sm:$0xf] %vm2659, %v2584
        %2671 = vst.msk [vmem:[%s218 + $0x2c] sm:$0xf] %vm2659, %v2586
        %2672 = vst.msk [vmem:[%s218 + $0x30] sm:$0xf] %vm2659, %v2588
        %2673 = vst.msk [vmem:[%s218 + $0x34] sm:$0xf] %vm2659, %v2590
        %2674 = vst.msk [vmem:[%s218 + $0x38] sm:$0xf] %vm2659, %v2592
        %2675 = vst.msk [vmem:[%s218 + $0x3c] sm:$0xf] %vm2659, %v2594
        %2676 = vst.msk [vmem:[%s218 + $0x40] sm:$0xf] %vm2659, %v2596
        %2677 = vst.msk [vmem:[%s218 + $0x44] sm:$0xf] %vm2659, %v2598
        %2678 = vst.msk [vmem:[%s218 + $0x48] sm:$0xf] %vm2659, %v2600
        %2679 = vst.msk [vmem:[%s218 + $0x4c] sm:$0xf] %vm2659, %v2602
        %2680 = vst.msk [vmem:[%s218 + $0x50] sm:$0xf] %vm2659, %v2604
        %2681 = vst.msk [vmem:[%s218 + $0x54] sm:$0xf] %vm2659, %v2606
        %2682 = vst.msk [vmem:[%s218 + $0x58] sm:$0xf] %vm2659, %v2608
        %2683 = vst.msk [vmem:[%s218 + $0x5c] sm:$0xf] %vm2659, %v2610
        %2684 = vst.msk [vmem:[%s218 + $0x60] sm:$0xf] %vm2659, %v2612
        %2685 = vst.msk [vmem:[%s218 + $0x64] sm:$0xf] %vm2659, %v2614
        %2686 = vst.msk [vmem:[%s218 + $0x68] sm:$0xf] %vm2659, %v2616
        %2687 = vst.msk [vmem:[%s218 + $0x6c] sm:$0xf] %vm2659, %v2618
        %2688 = vst.msk [vmem:[%s218 + $0x70] sm:$0xf] %vm2659, %v2620
        %2689 = vst.msk [vmem:[%s218 + $0x74] sm:$0xf] %vm2659, %v2622
        %2690 = vst.msk [vmem:[%s218 + $0x78] sm:$0xf] %vm2659, %v2624
        %2691 = vst.msk [vmem:[%s218 + $0x7c] sm:$0xf] %vm2659, %v2626
        %v2692 = vld [vmem:[%s223] sm:$0xf]
        %v2693 = vld [vmem:[%s223 + $0x4] sm:$0xf]
        %v2694 = vld [vmem:[%s223 + $0x8] sm:$0xf]
        %v2695 = vld [vmem:[%s223 + $0xc] sm:$0xf]
        %v2696 = vld [vmem:[%s223 + $0x10] sm:$0xf]
        %v2697 = vld [vmem:[%s223 + $0x14] sm:$0xf]
        %v2698 = vld [vmem:[%s223 + $0x18] sm:$0xf]
        %v2699 = vld [vmem:[%s223 + $0x1c] sm:$0xf]
        %v2700 = vld [vmem:[%s223 + $0x20] sm:$0xf]
        %v2701 = vld [vmem:[%s223 + $0x24] sm:$0xf]
        %v2702 = vld [vmem:[%s223 + $0x28] sm:$0xf]
        %v2703 = vld [vmem:[%s223 + $0x2c] sm:$0xf]
        %v2704 = vld [vmem:[%s223 + $0x30] sm:$0xf]
        %v2705 = vld [vmem:[%s223 + $0x34] sm:$0xf]
        %v2706 = vld [vmem:[%s223 + $0x38] sm:$0xf]
        %v2707 = vld [vmem:[%s223 + $0x3c] sm:$0xf]
        %v2708 = vld [vmem:[%s223 + $0x40] sm:$0xf]
        %v2709 = vld [vmem:[%s223 + $0x44] sm:$0xf]
        %v2710 = vld [vmem:[%s223 + $0x48] sm:$0xf]
        %v2711 = vld [vmem:[%s223 + $0x4c] sm:$0xf]
        %v2712 = vld [vmem:[%s223 + $0x50] sm:$0xf]
        %v2713 = vld [vmem:[%s223 + $0x54] sm:$0xf]
        %v2714 = vld [vmem:[%s223 + $0x58] sm:$0xf]
        %v2715 = vld [vmem:[%s223 + $0x5c] sm:$0xf]
        %v2716 = vld [vmem:[%s223 + $0x60] sm:$0xf]
        %v2717 = vld [vmem:[%s223 + $0x64] sm:$0xf]
        %v2718 = vld [vmem:[%s223 + $0x68] sm:$0xf]
        %v2719 = vld [vmem:[%s223 + $0x6c] sm:$0xf]
        %v2720 = vld [vmem:[%s223 + $0x70] sm:$0xf]
        %v2721 = vld [vmem:[%s223 + $0x74] sm:$0xf]
        %v2722 = vld [vmem:[%s223 + $0x78] sm:$0xf]
        %v2723 = vld [vmem:[%s223 + $0x7c] sm:$0xf]
        %v2724 = vld [vmem:[%s3] sm:$0xf]
        %v2725 = vld [vmem:[%s3 + $0x4] sm:$0xf]
        %v2726 = vld [vmem:[%s3 + $0x8] sm:$0xf]
        %v2727 = vld [vmem:[%s3 + $0xc] sm:$0x3]
        %v2728 = vld [vmem:[%s223 + $0x80] sm:$0xf]
        %v2729 = vld [vmem:[%s223 + $0x84] sm:$0xf]
        %v2730 = vld [vmem:[%s3 + $0xc] sm:$0xc]
        %v2731 = vld [vmem:[%s3 + $0x10] sm:$0xf]
        %v2732 = vld [vmem:[%s3 + $0x14] sm:$0xf]
        %v2733 = vld [vmem:[%s3 + $0x18] sm:$0xf]
        %v2766 = vunpack.c.l.b16 %v2694
        %v2767 = vunpack.c.l.b16 %v2695
        %v2768 = vunpack.c.l.b16 %v2696
        %v2769 = vunpack.c.l.b16 %v2697
        %v2770 = vunpack.c.l.b16 %v2698
        %v2771 = vunpack.c.l.b16 %v2699
        %v2772 = vunpack.c.l.b16 %v2700
        %v2773 = vunpack.c.l.b16 %v2701
        %v2774 = vunpack.c.l.b16 %v2702
        %v2775 = vunpack.c.l.b16 %v2703
        %v2776 = vunpack.c.l.b16 %v2704
        %v2777 = vunpack.c.l.b16 %v2705
        %v2778 = vunpack.c.l.b16 %v2706
        %v2779 = vunpack.c.l.b16 %v2707
        %v2780 = vunpack.c.l.b16 %v2708
        %v2781 = vunpack.c.l.b16 %v2709
        %v2782 = vunpack.c.l.b16 %v2710
        %v2783 = vunpack.c.l.b16 %v2711
        %v2784 = vunpack.c.l.b16 %v2712
        %v2785 = vunpack.c.l.b16 %v2713
        %v2786 = vunpack.c.l.b16 %v2714
        %v2787 = vunpack.c.l.b16 %v2715
        %v2788 = vunpack.c.l.b16 %v2716
        %v2789 = vunpack.c.l.b16 %v2717
        %v2790 = vunpack.c.l.b16 %v2718
        %v2791 = vunpack.c.l.b16 %v2719
        %v2792 = vunpack.c.l.b16 %v2720
        %v2793 = vunpack.c.l.b16 %v2721
        %v2794 = vunpack.c.l.b16 %v2722
        %v2795 = vunpack.c.l.b16 %v2723
        %v2796 = vunpack.c.l.b16 %v2728
        %v2797 = vunpack.c.l.b16 %v2729
        %v2798 = vpack.c.b16 %v2767, %v2766
        %v2799 = vpack.c.b16 %v2769, %v2768
        %v2800 = vpack.c.b16 %v2771, %v2770
        %v2801 = vpack.c.b16 %v2773, %v2772
        %v2802 = vpack.c.b16 %v2775, %v2774
        %v2803 = vpack.c.b16 %v2777, %v2776
        %v2804 = vpack.c.b16 %v2779, %v2778
        %v2805 = vpack.c.b16 %v2781, %v2780
        %v2806 = vpack.c.b16 %v2783, %v2782
        %v2807 = vpack.c.b16 %v2785, %v2784
        %v2808 = vpack.c.b16 %v2787, %v2786
        %v2809 = vpack.c.b16 %v2789, %v2788
        %v2810 = vpack.c.b16 %v2791, %v2790
        %v2811 = vpack.c.b16 %v2793, %v2792
        %v2812 = vpack.c.b16 %v2795, %v2794
        %v2813 = vpack.c.b16 %v2797, %v2796
        %v2818 = vunpack.c.l.b16 %v2730
        %v2819 = vunpack.c.l.b16 %v2731
        %v2820 = vunpack.c.l.b16 %v2732
        %v2821 = vunpack.c.l.b16 %v2733
        %v2822 = vpack.c.b16 %v2819, %v2818
        %v2823 = vpack.c.b16 %v2821, %v2820
        %v2824 = vrot.slane %v2822, 2
        %v2825 = vrot.slane %v2823, 2
        %v2826 = vsel %vm1216, %v2824, %v2825
        %vm2828 = vcmask 228352
        %v2830 = vsel %vm2828, %v2798, 0
        %v2833 = vsel %vm2828, %v2799, 0
        %v2836 = vsel %vm2828, %v2800, 0
        %v2839 = vsel %vm2828, %v2801, 0
        %v2842 = vsel %vm2828, %v2802, 0
        %v2845 = vsel %vm2828, %v2803, 0
        %v2848 = vsel %vm2828, %v2804, 0
        %v2851 = vsel %vm2828, %v2805, 0
        %v2854 = vsel %vm2828, %v2806, 0
        %v2857 = vsel %vm2828, %v2807, 0
        %v2860 = vsel %vm2828, %v2808, 0
        %v2863 = vsel %vm2828, %v2809, 0
        %v2866 = vsel %vm2828, %v2810, 0
        %v2869 = vsel %vm2828, %v2811, 0
        %v2872 = vsel %vm2828, %v2812, 0
        %v2875 = vsel %vm2828, %v2813, 0
        %v2878 = vsel %vm432, %v2825, 0
        %2880 = vmatpush.bf16.msra.mxu0 0
        %2881 = vmatpush.bf16.msra.mxu0 0
        %2882 = vmatpush.bf16.msra.mxu0 0
        %2883 = vmatpush.bf16.msra.mxu0 0
        %2884 = vmatpush.bf16.msra.mxu0 0
        %2885 = vmatpush.bf16.msra.mxu0 0
        %2886 = vmatpush.bf16.msra.mxu0 %v2878
        %2887 = vmatpush.bf16.msra.mxu0 %v2826
        %2888 = vmatmul.bf16.gmra.mxu0 %v2830
        %v2889 = vpop.f32.mrf.mxu0
        %v2890 = vadd.f32 0.0, %v2889
        %v2891 = vpop.f32.mrf.mxu0
        %v2892 = vadd.f32 0.0, %v2891
        %2893 = vmatmul.bf16.gmra.mxu0 %v2833
        %v2894 = vpop.f32.mrf.mxu0
        %v2895 = vadd.f32 0.0, %v2894
        %v2896 = vpop.f32.mrf.mxu0
        %v2897 = vadd.f32 0.0, %v2896
        %2898 = vmatmul.bf16.gmra.mxu0 %v2836
        %v2899 = vpop.f32.mrf.mxu0
        %v2900 = vadd.f32 0.0, %v2899
        %v2901 = vpop.f32.mrf.mxu0
        %v2902 = vadd.f32 0.0, %v2901
        %2903 = vmatmul.bf16.gmra.mxu0 %v2839
        %v2904 = vpop.f32.mrf.mxu0
        %v2905 = vadd.f32 0.0, %v2904
        %v2906 = vpop.f32.mrf.mxu0
        %v2907 = vadd.f32 0.0, %v2906
        %2908 = vmatmul.bf16.gmra.mxu0 %v2842
        %v2909 = vpop.f32.mrf.mxu0
        %v2910 = vadd.f32 0.0, %v2909
        %v2911 = vpop.f32.mrf.mxu0
        %v2912 = vadd.f32 0.0, %v2911
        %2913 = vmatmul.bf16.gmra.mxu0 %v2845
        %v2914 = vpop.f32.mrf.mxu0
        %v2915 = vadd.f32 0.0, %v2914
        %v2916 = vpop.f32.mrf.mxu0
        %v2917 = vadd.f32 0.0, %v2916
        %2918 = vmatmul.bf16.gmra.mxu0 %v2848
        %v2919 = vpop.f32.mrf.mxu0
        %v2920 = vadd.f32 0.0, %v2919
        %v2921 = vpop.f32.mrf.mxu0
        %v2922 = vadd.f32 0.0, %v2921
        %2923 = vmatmul.bf16.gmra.mxu0 %v2851
        %v2924 = vpop.f32.mrf.mxu0
        %v2925 = vadd.f32 0.0, %v2924
        %v2926 = vpop.f32.mrf.mxu0
        %v2927 = vadd.f32 0.0, %v2926
        %2928 = vmatmul.bf16.gmra.mxu0 %v2854
        %v2929 = vpop.f32.mrf.mxu0
        %v2930 = vadd.f32 0.0, %v2929
        %v2931 = vpop.f32.mrf.mxu0
        %v2932 = vadd.f32 0.0, %v2931
        %2933 = vmatmul.bf16.gmra.mxu0 %v2857
        %v2934 = vpop.f32.mrf.mxu0
        %v2935 = vadd.f32 0.0, %v2934
        %v2936 = vpop.f32.mrf.mxu0
        %v2937 = vadd.f32 0.0, %v2936
        %2938 = vmatmul.bf16.gmra.mxu0 %v2860
        %v2939 = vpop.f32.mrf.mxu0
        %v2940 = vadd.f32 0.0, %v2939
        %v2941 = vpop.f32.mrf.mxu0
        %v2942 = vadd.f32 0.0, %v2941
        %2943 = vmatmul.bf16.gmra.mxu0 %v2863
        %v2944 = vpop.f32.mrf.mxu0
        %v2945 = vadd.f32 0.0, %v2944
        %v2946 = vpop.f32.mrf.mxu0
        %v2947 = vadd.f32 0.0, %v2946
        %2948 = vmatmul.bf16.gmra.mxu0 %v2866
        %v2949 = vpop.f32.mrf.mxu0
        %v2950 = vadd.f32 0.0, %v2949
        %v2951 = vpop.f32.mrf.mxu0
        %v2952 = vadd.f32 0.0, %v2951
        %2953 = vmatmul.bf16.gmra.mxu0 %v2869
        %v2954 = vpop.f32.mrf.mxu0
        %v2955 = vadd.f32 0.0, %v2954
        %v2956 = vpop.f32.mrf.mxu0
        %v2957 = vadd.f32 0.0, %v2956
        %2958 = vmatmul.bf16.gmra.mxu0 %v2872
        %v2959 = vpop.f32.mrf.mxu0
        %v2960 = vadd.f32 0.0, %v2959
        %v2961 = vpop.f32.mrf.mxu0
        %v2962 = vadd.f32 0.0, %v2961
        %2963 = vmatmul.bf16.gmra.mxu0 %v2875
        %v2964 = vpop.f32.mrf.mxu0
        %v2965 = vadd.f32 0.0, %v2964
        %v2966 = vpop.f32.mrf.mxu0
        %v2967 = vadd.f32 0.0, %v2966
        %2968 = vdwg.mxu0
        %v2971 = vunpack.c.l.b16 %v2692
        %v2972 = vunpack.c.l.b16 %v2693
        %v2973 = vpack.c.b16 %v2972, %v2971
        %v2978 = vunpack.c.l.b16 %v2724
        %v2979 = vunpack.c.l.b16 %v2725
        %v2980 = vunpack.c.l.b16 %v2726
        %v2981 = vunpack.c.l.b16 %v2727
        %v2982 = vpack.c.b16 %v2979, %v2978
        %v2983 = vpack.c.b16 %v2981, %v2980
        %v2986 = vsel %vm2828, %v2973, 0
        %v2989 = vsel %vm432, %v2983, 0
        %2991 = vmatpush.bf16.msra.mxu0 0
        %2992 = vmatpush.bf16.msra.mxu0 0
        %2993 = vmatpush.bf16.msra.mxu0 0
        %2994 = vmatpush.bf16.msra.mxu0 0
        %2995 = vmatpush.bf16.msra.mxu0 0
        %2996 = vmatpush.bf16.msra.mxu0 0
        %2997 = vmatpush.bf16.msra.mxu0 %v2989
        %2998 = vmatpush.bf16.msra.mxu0 %v2982
        %2999 = vmatmul.bf16.gmra.mxu0 %v2986
        %v3000 = vpop.f32.mrf.mxu0
        %v3001 = vadd.f32 %v2890, %v3000
        %v3002 = vpop.f32.mrf.mxu0
        %v3003 = vadd.f32 %v2892, %v3002
        %3004 = vmatmul.bf16.gmra.mxu0 %v2830
        %v3005 = vpop.f32.mrf.mxu0
        %v3006 = vadd.f32 %v2895, %v3005
        %v3007 = vpop.f32.mrf.mxu0
        %v3008 = vadd.f32 %v2897, %v3007
        %3009 = vmatmul.bf16.gmra.mxu0 %v2833
        %v3010 = vpop.f32.mrf.mxu0
        %v3011 = vadd.f32 %v2900, %v3010
        %v3012 = vpop.f32.mrf.mxu0
        %v3013 = vadd.f32 %v2902, %v3012
        %3014 = vmatmul.bf16.gmra.mxu0 %v2836
        %v3015 = vpop.f32.mrf.mxu0
        %v3016 = vadd.f32 %v2905, %v3015
        %v3017 = vpop.f32.mrf.mxu0
        %v3018 = vadd.f32 %v2907, %v3017
        %3019 = vmatmul.bf16.gmra.mxu0 %v2839
        %v3020 = vpop.f32.mrf.mxu0
        %v3021 = vadd.f32 %v2910, %v3020
        %v3022 = vpop.f32.mrf.mxu0
        %v3023 = vadd.f32 %v2912, %v3022
        %3024 = vmatmul.bf16.gmra.mxu0 %v2842
        %v3025 = vpop.f32.mrf.mxu0
        %v3026 = vadd.f32 %v2915, %v3025
        %v3027 = vpop.f32.mrf.mxu0
        %v3028 = vadd.f32 %v2917, %v3027
        %3029 = vmatmul.bf16.gmra.mxu0 %v2845
        %v3030 = vpop.f32.mrf.mxu0
        %v3031 = vadd.f32 %v2920, %v3030
        %v3032 = vpop.f32.mrf.mxu0
        %v3033 = vadd.f32 %v2922, %v3032
        %3034 = vmatmul.bf16.gmra.mxu0 %v2848
        %v3035 = vpop.f32.mrf.mxu0
        %v3036 = vadd.f32 %v2925, %v3035
        %v3037 = vpop.f32.mrf.mxu0
        %v3038 = vadd.f32 %v2927, %v3037
        %3039 = vmatmul.bf16.gmra.mxu0 %v2851
        %v3040 = vpop.f32.mrf.mxu0
        %v3041 = vadd.f32 %v2930, %v3040
        %v3042 = vpop.f32.mrf.mxu0
        %v3043 = vadd.f32 %v2932, %v3042
        %3044 = vmatmul.bf16.gmra.mxu0 %v2854
        %v3045 = vpop.f32.mrf.mxu0
        %v3046 = vadd.f32 %v2935, %v3045
        %v3047 = vpop.f32.mrf.mxu0
        %v3048 = vadd.f32 %v2937, %v3047
        %3049 = vmatmul.bf16.gmra.mxu0 %v2857
        %v3050 = vpop.f32.mrf.mxu0
        %v3051 = vadd.f32 %v2940, %v3050
        %v3052 = vpop.f32.mrf.mxu0
        %v3053 = vadd.f32 %v2942, %v3052
        %3054 = vmatmul.bf16.gmra.mxu0 %v2860
        %v3055 = vpop.f32.mrf.mxu0
        %v3056 = vadd.f32 %v2945, %v3055
        %v3057 = vpop.f32.mrf.mxu0
        %v3058 = vadd.f32 %v2947, %v3057
        %3059 = vmatmul.bf16.gmra.mxu0 %v2863
        %v3060 = vpop.f32.mrf.mxu0
        %v3061 = vadd.f32 %v2950, %v3060
        %v3062 = vpop.f32.mrf.mxu0
        %v3063 = vadd.f32 %v2952, %v3062
        %3064 = vmatmul.bf16.gmra.mxu0 %v2866
        %v3065 = vpop.f32.mrf.mxu0
        %v3066 = vadd.f32 %v2955, %v3065
        %v3067 = vpop.f32.mrf.mxu0
        %v3068 = vadd.f32 %v2957, %v3067
        %3069 = vmatmul.bf16.gmra.mxu0 %v2869
        %v3070 = vpop.f32.mrf.mxu0
        %v3071 = vadd.f32 %v2960, %v3070
        %v3072 = vpop.f32.mrf.mxu0
        %v3073 = vadd.f32 %v2962, %v3072
        %3074 = vmatmul.bf16.gmra.mxu0 %v2872
        %v3075 = vpop.f32.mrf.mxu0
        %v3076 = vadd.f32 %v2965, %v3075
        %v3077 = vpop.f32.mrf.mxu0
        %v3078 = vadd.f32 %v2967, %v3077
        %3079 = vdwg.mxu0
        %v3080 = vld [vmem:[%s223 + $0x10] sm:$0xf]
        %v3081 = vld [vmem:[%s223 + $0x14] sm:$0xf]
        %v3082 = vld [vmem:[%s223 + $0x18] sm:$0xf]
        %v3083 = vld [vmem:[%s223 + $0x1c] sm:$0xf]
        %v3084 = vld [vmem:[%s223 + $0x20] sm:$0xf]
        %v3085 = vld [vmem:[%s223 + $0x24] sm:$0xf]
        %v3086 = vld [vmem:[%s223 + $0x28] sm:$0xf]
        %v3087 = vld [vmem:[%s223 + $0x2c] sm:$0xf]
        %v3088 = vld [vmem:[%s223 + $0x30] sm:$0xf]
        %v3089 = vld [vmem:[%s223 + $0x34] sm:$0xf]
        %v3090 = vld [vmem:[%s223 + $0x38] sm:$0xf]
        %v3091 = vld [vmem:[%s223 + $0x3c] sm:$0xf]
        %v3092 = vld [vmem:[%s223 + $0x40] sm:$0xf]
        %v3093 = vld [vmem:[%s223 + $0x44] sm:$0xf]
        %v3094 = vld [vmem:[%s223 + $0x48] sm:$0xf]
        %v3095 = vld [vmem:[%s223 + $0x4c] sm:$0xf]
        %v3096 = vld [vmem:[%s223 + $0x50] sm:$0xf]
        %v3097 = vld [vmem:[%s223 + $0x54] sm:$0xf]
        %v3098 = vld [vmem:[%s223 + $0x58] sm:$0xf]
        %v3099 = vld [vmem:[%s223 + $0x5c] sm:$0xf]
        %v3100 = vld [vmem:[%s223 + $0x60] sm:$0xf]
        %v3101 = vld [vmem:[%s223 + $0x64] sm:$0xf]
        %v3102 = vld [vmem:[%s223 + $0x68] sm:$0xf]
        %v3103 = vld [vmem:[%s223 + $0x6c] sm:$0xf]
        %v3104 = vld [vmem:[%s223 + $0x70] sm:$0xf]
        %v3105 = vld [vmem:[%s223 + $0x74] sm:$0xf]
        %v3106 = vld [vmem:[%s223 + $0x78] sm:$0xf]
        %v3107 = vld [vmem:[%s223 + $0x7c] sm:$0xf]
        %v3108 = vld [vmem:[%s223 + $0x80] sm:$0xf]
        %v3109 = vld [vmem:[%s223 + $0x84] sm:$0xf]
        %v3110 = vld [vmem:[%s223 + $0x88] sm:$0xf]
        %v3111 = vld [vmem:[%s223 + $0x8c] sm:$0xf]
        %v3112 = vld [vmem:[%s3 + $0x1c] sm:$0xf]
        %v3113 = vld [vmem:[%s3 + $0x20] sm:$0xf]
        %v3114 = vld [vmem:[%s3 + $0x24] sm:$0xf]
        %v3115 = vld [vmem:[%s3 + $0x28] sm:$0x3]
        %v3148 = vunpack.c.l.b16 %v3080
        %v3149 = vunpack.c.l.b16 %v3081
        %v3150 = vunpack.c.l.b16 %v3082
        %v3151 = vunpack.c.l.b16 %v3083
        %v3152 = vunpack.c.l.b16 %v3084
        %v3153 = vunpack.c.l.b16 %v3085
        %v3154 = vunpack.c.l.b16 %v3086
        %v3155 = vunpack.c.l.b16 %v3087
        %v3156 = vunpack.c.l.b16 %v3088
        %v3157 = vunpack.c.l.b16 %v3089
        %v3158 = vunpack.c.l.b16 %v3090
        %v3159 = vunpack.c.l.b16 %v3091
        %v3160 = vunpack.c.l.b16 %v3092
        %v3161 = vunpack.c.l.b16 %v3093
        %v3162 = vunpack.c.l.b16 %v3094
        %v3163 = vunpack.c.l.b16 %v3095
        %v3164 = vunpack.c.l.b16 %v3096
        %v3165 = vunpack.c.l.b16 %v3097
        %v3166 = vunpack.c.l.b16 %v3098
        %v3167 = vunpack.c.l.b16 %v3099
        %v3168 = vunpack.c.l.b16 %v3100
        %v3169 = vunpack.c.l.b16 %v3101
        %v3170 = vunpack.c.l.b16 %v3102
        %v3171 = vunpack.c.l.b16 %v3103
        %v3172 = vunpack.c.l.b16 %v3104
        %v3173 = vunpack.c.l.b16 %v3105
        %v3174 = vunpack.c.l.b16 %v3106
        %v3175 = vunpack.c.l.b16 %v3107
        %v3176 = vunpack.c.l.b16 %v3108
        %v3177 = vunpack.c.l.b16 %v3109
        %v3178 = vunpack.c.l.b16 %v3110
        %v3179 = vunpack.c.l.b16 %v3111
        %v3180 = vpack.c.b16 %v3149, %v3148
        %v3181 = vpack.c.b16 %v3151, %v3150
        %v3182 = vpack.c.b16 %v3153, %v3152
        %v3183 = vpack.c.b16 %v3155, %v3154
        %v3184 = vpack.c.b16 %v3157, %v3156
        %v3185 = vpack.c.b16 %v3159, %v3158
        %v3186 = vpack.c.b16 %v3161, %v3160
        %v3187 = vpack.c.b16 %v3163, %v3162
        %v3188 = vpack.c.b16 %v3165, %v3164
        %v3189 = vpack.c.b16 %v3167, %v3166
        %v3190 = vpack.c.b16 %v3169, %v3168
        %v3191 = vpack.c.b16 %v3171, %v3170
        %v3192 = vpack.c.b16 %v3173, %v3172
        %v3193 = vpack.c.b16 %v3175, %v3174
        %v3194 = vpack.c.b16 %v3177, %v3176
        %v3195 = vpack.c.b16 %v3179, %v3178
        %v3200 = vunpack.c.l.b16 %v3112
        %v3201 = vunpack.c.l.b16 %v3113
        %v3202 = vunpack.c.l.b16 %v3114
        %v3203 = vunpack.c.l.b16 %v3115
        %v3204 = vpack.c.b16 %v3201, %v3200
        %v3205 = vpack.c.b16 %v3203, %v3202
        %v3208 = vsel %vm2828, %v3180, 0
        %v3211 = vsel %vm2828, %v3181, 0
        %v3214 = vsel %vm2828, %v3182, 0
        %v3217 = vsel %vm2828, %v3183, 0
        %v3220 = vsel %vm2828, %v3184, 0
        %v3223 = vsel %vm2828, %v3185, 0
        %v3226 = vsel %vm2828, %v3186, 0
        %v3229 = vsel %vm2828, %v3187, 0
        %v3232 = vsel %vm2828, %v3188, 0
        %v3235 = vsel %vm2828, %v3189, 0
        %v3238 = vsel %vm2828, %v3190, 0
        %v3241 = vsel %vm2828, %v3191, 0
        %v3244 = vsel %vm2828, %v3192, 0
        %v3247 = vsel %vm2828, %v3193, 0
        %v3250 = vsel %vm2828, %v3194, 0
        %v3253 = vsel %vm2828, %v3195, 0
        %v3256 = vsel %vm432, %v3205, 0
        %3258 = vmatpush.bf16.msra.mxu0 0
        %3259 = vmatpush.bf16.msra.mxu0 0
        %3260 = vmatpush.bf16.msra.mxu0 0
        %3261 = vmatpush.bf16.msra.mxu0 0
        %3262 = vmatpush.bf16.msra.mxu0 0
        %3263 = vmatpush.bf16.msra.mxu0 0
        %3264 = vmatpush.bf16.msra.mxu0 %v3256
        %3265 = vmatpush.bf16.msra.mxu0 %v3204
        %3266 = vmatmul.bf16.gmra.mxu0 %v3208
        %v3267 = vpop.f32.mrf.mxu0
        %v3268 = vadd.f32 0.0, %v3267
        %v3269 = vpop.f32.mrf.mxu0
        %v3270 = vadd.f32 0.0, %v3269
        %3271 = vmatmul.bf16.gmra.mxu0 %v3211
        %v3272 = vpop.f32.mrf.mxu0
        %v3273 = vadd.f32 0.0, %v3272
        %v3274 = vpop.f32.mrf.mxu0
        %v3275 = vadd.f32 0.0, %v3274
        %3276 = vmatmul.bf16.gmra.mxu0 %v3214
        %v3277 = vpop.f32.mrf.mxu0
        %v3278 = vadd.f32 0.0, %v3277
        %v3279 = vpop.f32.mrf.mxu0
        %v3280 = vadd.f32 0.0, %v3279
        %3281 = vmatmul.bf16.gmra.mxu0 %v3217
        %v3282 = vpop.f32.mrf.mxu0
        %v3283 = vadd.f32 0.0, %v3282
        %v3284 = vpop.f32.mrf.mxu0
        %v3285 = vadd.f32 0.0, %v3284
        %3286 = vmatmul.bf16.gmra.mxu0 %v3220
        %v3287 = vpop.f32.mrf.mxu0
        %v3288 = vadd.f32 0.0, %v3287
        %v3289 = vpop.f32.mrf.mxu0
        %v3290 = vadd.f32 0.0, %v3289
        %3291 = vmatmul.bf16.gmra.mxu0 %v3223
        %v3292 = vpop.f32.mrf.mxu0
        %v3293 = vadd.f32 0.0, %v3292
        %v3294 = vpop.f32.mrf.mxu0
        %v3295 = vadd.f32 0.0, %v3294
        %3296 = vmatmul.bf16.gmra.mxu0 %v3226
        %v3297 = vpop.f32.mrf.mxu0
        %v3298 = vadd.f32 0.0, %v3297
        %v3299 = vpop.f32.mrf.mxu0
        %v3300 = vadd.f32 0.0, %v3299
        %3301 = vmatmul.bf16.gmra.mxu0 %v3229
        %v3302 = vpop.f32.mrf.mxu0
        %v3303 = vadd.f32 0.0, %v3302
        %v3304 = vpop.f32.mrf.mxu0
        %v3305 = vadd.f32 0.0, %v3304
        %3306 = vmatmul.bf16.gmra.mxu0 %v3232
        %v3307 = vpop.f32.mrf.mxu0
        %v3308 = vadd.f32 0.0, %v3307
        %v3309 = vpop.f32.mrf.mxu0
        %v3310 = vadd.f32 0.0, %v3309
        %3311 = vmatmul.bf16.gmra.mxu0 %v3235
        %v3312 = vpop.f32.mrf.mxu0
        %v3313 = vadd.f32 0.0, %v3312
        %v3314 = vpop.f32.mrf.mxu0
        %v3315 = vadd.f32 0.0, %v3314
        %3316 = vmatmul.bf16.gmra.mxu0 %v3238
        %v3317 = vpop.f32.mrf.mxu0
        %v3318 = vadd.f32 0.0, %v3317
        %v3319 = vpop.f32.mrf.mxu0
        %v3320 = vadd.f32 0.0, %v3319
        %3321 = vmatmul.bf16.gmra.mxu0 %v3241
        %v3322 = vpop.f32.mrf.mxu0
        %v3323 = vadd.f32 0.0, %v3322
        %v3324 = vpop.f32.mrf.mxu0
        %v3325 = vadd.f32 0.0, %v3324
        %3326 = vmatmul.bf16.gmra.mxu0 %v3244
        %v3327 = vpop.f32.mrf.mxu0
        %v3328 = vadd.f32 0.0, %v3327
        %v3329 = vpop.f32.mrf.mxu0
        %v3330 = vadd.f32 0.0, %v3329
        %3331 = vmatmul.bf16.gmra.mxu0 %v3247
        %v3332 = vpop.f32.mrf.mxu0
        %v3333 = vadd.f32 0.0, %v3332
        %v3334 = vpop.f32.mrf.mxu0
        %v3335 = vadd.f32 0.0, %v3334
        %3336 = vmatmul.bf16.gmra.mxu0 %v3250
        %v3337 = vpop.f32.mrf.mxu0
        %v3338 = vadd.f32 0.0, %v3337
        %v3339 = vpop.f32.mrf.mxu0
        %v3340 = vadd.f32 0.0, %v3339
        %3341 = vmatmul.bf16.gmra.mxu0 %v3253
        %v3342 = vpop.f32.mrf.mxu0
        %v3343 = vadd.f32 0.0, %v3342
        %v3344 = vpop.f32.mrf.mxu0
        %v3345 = vadd.f32 0.0, %v3344
        %3346 = vdwg.mxu0
        %v3347 = vadd.f32 %v3001, %v3268
        %v3348 = vadd.f32 %v3003, %v3270
        %v3349 = vadd.f32 %v3006, %v3273
        %v3350 = vadd.f32 %v3008, %v3275
        %v3351 = vadd.f32 %v3011, %v3278
        %v3352 = vadd.f32 %v3013, %v3280
        %v3353 = vadd.f32 %v3016, %v3283
        %v3354 = vadd.f32 %v3018, %v3285
        %v3355 = vadd.f32 %v3021, %v3288
        %v3356 = vadd.f32 %v3023, %v3290
        %v3357 = vadd.f32 %v3026, %v3293
        %v3358 = vadd.f32 %v3028, %v3295
        %v3359 = vadd.f32 %v3031, %v3298
        %v3360 = vadd.f32 %v3033, %v3300
        %v3361 = vadd.f32 %v3036, %v3303
        %v3362 = vadd.f32 %v3038, %v3305
        %v3363 = vadd.f32 %v3041, %v3308
        %v3364 = vadd.f32 %v3043, %v3310
        %v3365 = vadd.f32 %v3046, %v3313
        %v3366 = vadd.f32 %v3048, %v3315
        %v3367 = vadd.f32 %v3051, %v3318
        %v3368 = vadd.f32 %v3053, %v3320
        %v3369 = vadd.f32 %v3056, %v3323
        %v3370 = vadd.f32 %v3058, %v3325
        %v3371 = vadd.f32 %v3061, %v3328
        %v3372 = vadd.f32 %v3063, %v3330
        %v3373 = vadd.f32 %v3066, %v3333
        %v3374 = vadd.f32 %v3068, %v3335
        %v3375 = vadd.f32 %v3071, %v3338
        %v3376 = vadd.f32 %v3073, %v3340
        %v3377 = vadd.f32 %v3076, %v3343
        %v3378 = vadd.f32 %v3078, %v3345
        %v3379 = vld [vmem:[%s223 + $0x18] sm:$0xf]
        %v3380 = vld [vmem:[%s223 + $0x1c] sm:$0xf]
        %v3381 = vld [vmem:[%s223 + $0x20] sm:$0xf]
        %v3382 = vld [vmem:[%s223 + $0x24] sm:$0xf]
        %v3383 = vld [vmem:[%s223 + $0x28] sm:$0xf]
        %v3384 = vld [vmem:[%s223 + $0x2c] sm:$0xf]
        %v3385 = vld [vmem:[%s223 + $0x30] sm:$0xf]
        %v3386 = vld [vmem:[%s223 + $0x34] sm:$0xf]
        %v3387 = vld [vmem:[%s223 + $0x38] sm:$0xf]
        %v3388 = vld [vmem:[%s223 + $0x3c] sm:$0xf]
        %v3389 = vld [vmem:[%s223 + $0x40] sm:$0xf]
        %v3390 = vld [vmem:[%s223 + $0x44] sm:$0xf]
        %v3391 = vld [vmem:[%s223 + $0x48] sm:$0xf]
        %v3392 = vld [vmem:[%s223 + $0x4c] sm:$0xf]
        %v3393 = vld [vmem:[%s223 + $0x50] sm:$0xf]
        %v3394 = vld [vmem:[%s223 + $0x54] sm:$0xf]
        %v3395 = vld [vmem:[%s223 + $0x58] sm:$0xf]
        %v3396 = vld [vmem:[%s223 + $0x5c] sm:$0xf]
        %v3397 = vld [vmem:[%s223 + $0x60] sm:$0xf]
        %v3398 = vld [vmem:[%s223 + $0x64] sm:$0xf]
        %v3399 = vld [vmem:[%s223 + $0x68] sm:$0xf]
        %v3400 = vld [vmem:[%s223 + $0x6c] sm:$0xf]
        %v3401 = vld [vmem:[%s223 + $0x70] sm:$0xf]
        %v3402 = vld [vmem:[%s223 + $0x74] sm:$0xf]
        %v3403 = vld [vmem:[%s223 + $0x78] sm:$0xf]
        %v3404 = vld [vmem:[%s223 + $0x7c] sm:$0xf]
        %v3405 = vld [vmem:[%s223 + $0x80] sm:$0xf]
        %v3406 = vld [vmem:[%s223 + $0x84] sm:$0xf]
        %v3407 = vld [vmem:[%s223 + $0x88] sm:$0xf]
        %v3408 = vld [vmem:[%s223 + $0x8c] sm:$0xf]
        %v3409 = vld [vmem:[%s223 + $0x90] sm:$0xf]
        %v3410 = vld [vmem:[%s223 + $0x94] sm:$0xf]
        %v3411 = vld [vmem:[%s3 + $0x28] sm:$0xc]
        %v3412 = vld [vmem:[%s3 + $0x2c] sm:$0xf]
        %v3413 = vld [vmem:[%s3 + $0x30] sm:$0xf]
        %v3414 = vld [vmem:[%s3 + $0x34] sm:$0xf]
        %v3447 = vunpack.c.l.b16 %v3379
        %v3448 = vunpack.c.l.b16 %v3380
        %v3449 = vunpack.c.l.b16 %v3381
        %v3450 = vunpack.c.l.b16 %v3382
        %v3451 = vunpack.c.l.b16 %v3383
        %v3452 = vunpack.c.l.b16 %v3384
        %v3453 = vunpack.c.l.b16 %v3385
        %v3454 = vunpack.c.l.b16 %v3386
        %v3455 = vunpack.c.l.b16 %v3387
        %v3456 = vunpack.c.l.b16 %v3388
        %v3457 = vunpack.c.l.b16 %v3389
        %v3458 = vunpack.c.l.b16 %v3390
        %v3459 = vunpack.c.l.b16 %v3391
        %v3460 = vunpack.c.l.b16 %v3392
        %v3461 = vunpack.c.l.b16 %v3393
        %v3462 = vunpack.c.l.b16 %v3394
        %v3463 = vunpack.c.l.b16 %v3395
        %v3464 = vunpack.c.l.b16 %v3396
        %v3465 = vunpack.c.l.b16 %v3397
        %v3466 = vunpack.c.l.b16 %v3398
        %v3467 = vunpack.c.l.b16 %v3399
        %v3468 = vunpack.c.l.b16 %v3400
        %v3469 = vunpack.c.l.b16 %v3401
        %v3470 = vunpack.c.l.b16 %v3402
        %v3471 = vunpack.c.l.b16 %v3403
        %v3472 = vunpack.c.l.b16 %v3404
        %v3473 = vunpack.c.l.b16 %v3405
        %v3474 = vunpack.c.l.b16 %v3406
        %v3475 = vunpack.c.l.b16 %v3407
        %v3476 = vunpack.c.l.b16 %v3408
        %v3477 = vunpack.c.l.b16 %v3409
        %v3478 = vunpack.c.l.b16 %v3410
        %v3479 = vpack.c.b16 %v3448, %v3447
        %v3480 = vpack.c.b16 %v3450, %v3449
        %v3481 = vpack.c.b16 %v3452, %v3451
        %v3482 = vpack.c.b16 %v3454, %v3453
        %v3483 = vpack.c.b16 %v3456, %v3455
        %v3484 = vpack.c.b16 %v3458, %v3457
        %v3485 = vpack.c.b16 %v3460, %v3459
        %v3486 = vpack.c.b16 %v3462, %v3461
        %v3487 = vpack.c.b16 %v3464, %v3463
        %v3488 = vpack.c.b16 %v3466, %v3465
        %v3489 = vpack.c.b16 %v3468, %v3467
        %v3490 = vpack.c.b16 %v3470, %v3469
        %v3491 = vpack.c.b16 %v3472, %v3471
        %v3492 = vpack.c.b16 %v3474, %v3473
        %v3493 = vpack.c.b16 %v3476, %v3475
        %v3494 = vpack.c.b16 %v3478, %v3477
        %v3499 = vunpack.c.l.b16 %v3411
        %v3500 = vunpack.c.l.b16 %v3412
        %v3501 = vunpack.c.l.b16 %v3413
        %v3502 = vunpack.c.l.b16 %v3414
        %v3503 = vpack.c.b16 %v3500, %v3499
        %v3504 = vpack.c.b16 %v3502, %v3501
        %v3505 = vrot.slane %v3503, 2
        %v3506 = vrot.slane %v3504, 2
        %v3507 = vsel %vm1216, %v3505, %v3506
        %v3510 = vsel %vm2828, %v3479, 0
        %v3513 = vsel %vm2828, %v3480, 0
        %v3516 = vsel %vm2828, %v3481, 0
        %v3519 = vsel %vm2828, %v3482, 0
        %v3522 = vsel %vm2828, %v3483, 0
        %v3525 = vsel %vm2828, %v3484, 0
        %v3528 = vsel %vm2828, %v3485, 0
        %v3531 = vsel %vm2828, %v3486, 0
        %v3534 = vsel %vm2828, %v3487, 0
        %v3537 = vsel %vm2828, %v3488, 0
        %v3540 = vsel %vm2828, %v3489, 0
        %v3543 = vsel %vm2828, %v3490, 0
        %v3546 = vsel %vm2828, %v3491, 0
        %v3549 = vsel %vm2828, %v3492, 0
        %v3552 = vsel %vm2828, %v3493, 0
        %v3555 = vsel %vm2828, %v3494, 0
        %v3558 = vsel %vm432, %v3506, 0
        %3560 = vmatpush.bf16.msra.mxu0 0
        %3561 = vmatpush.bf16.msra.mxu0 0
        %3562 = vmatpush.bf16.msra.mxu0 0
        %3563 = vmatpush.bf16.msra.mxu0 0
        %3564 = vmatpush.bf16.msra.mxu0 0
        %3565 = vmatpush.bf16.msra.mxu0 0
        %3566 = vmatpush.bf16.msra.mxu0 %v3558
        %3567 = vmatpush.bf16.msra.mxu0 %v3507
        %3568 = vmatmul.bf16.gmra.mxu0 %v3510
        %v3569 = vpop.f32.mrf.mxu0
        %v3570 = vadd.f32 0.0, %v3569
        %v3571 = vpop.f32.mrf.mxu0
        %v3572 = vadd.f32 0.0, %v3571
        %3573 = vmatmul.bf16.gmra.mxu0 %v3513
        %v3574 = vpop.f32.mrf.mxu0
        %v3575 = vadd.f32 0.0, %v3574
        %v3576 = vpop.f32.mrf.mxu0
        %v3577 = vadd.f32 0.0, %v3576
        %3578 = vmatmul.bf16.gmra.mxu0 %v3516
        %v3579 = vpop.f32.mrf.mxu0
        %v3580 = vadd.f32 0.0, %v3579
        %v3581 = vpop.f32.mrf.mxu0
        %v3582 = vadd.f32 0.0, %v3581
        %3583 = vmatmul.bf16.gmra.mxu0 %v3519
        %v3584 = vpop.f32.mrf.mxu0
        %v3585 = vadd.f32 0.0, %v3584
        %v3586 = vpop.f32.mrf.mxu0
        %v3587 = vadd.f32 0.0, %v3586
        %3588 = vmatmul.bf16.gmra.mxu0 %v3522
        %v3589 = vpop.f32.mrf.mxu0
        %v3590 = vadd.f32 0.0, %v3589
        %v3591 = vpop.f32.mrf.mxu0
        %v3592 = vadd.f32 0.0, %v3591
        %3593 = vmatmul.bf16.gmra.mxu0 %v3525
        %v3594 = vpop.f32.mrf.mxu0
        %v3595 = vadd.f32 0.0, %v3594
        %v3596 = vpop.f32.mrf.mxu0
        %v3597 = vadd.f32 0.0, %v3596
        %3598 = vmatmul.bf16.gmra.mxu0 %v3528
        %v3599 = vpop.f32.mrf.mxu0
        %v3600 = vadd.f32 0.0, %v3599
        %v3601 = vpop.f32.mrf.mxu0
        %v3602 = vadd.f32 0.0, %v3601
        %3603 = vmatmul.bf16.gmra.mxu0 %v3531
        %v3604 = vpop.f32.mrf.mxu0
        %v3605 = vadd.f32 0.0, %v3604
        %v3606 = vpop.f32.mrf.mxu0
        %v3607 = vadd.f32 0.0, %v3606
        %3608 = vmatmul.bf16.gmra.mxu0 %v3534
        %v3609 = vpop.f32.mrf.mxu0
        %v3610 = vadd.f32 0.0, %v3609
        %v3611 = vpop.f32.mrf.mxu0
        %v3612 = vadd.f32 0.0, %v3611
        %3613 = vmatmul.bf16.gmra.mxu0 %v3537
        %v3614 = vpop.f32.mrf.mxu0
        %v3615 = vadd.f32 0.0, %v3614
        %v3616 = vpop.f32.mrf.mxu0
        %v3617 = vadd.f32 0.0, %v3616
        %3618 = vmatmul.bf16.gmra.mxu0 %v3540
        %v3619 = vpop.f32.mrf.mxu0
        %v3620 = vadd.f32 0.0, %v3619
        %v3621 = vpop.f32.mrf.mxu0
        %v3622 = vadd.f32 0.0, %v3621
        %3623 = vmatmul.bf16.gmra.mxu0 %v3543
        %v3624 = vpop.f32.mrf.mxu0
        %v3625 = vadd.f32 0.0, %v3624
        %v3626 = vpop.f32.mrf.mxu0
        %v3627 = vadd.f32 0.0, %v3626
        %3628 = vmatmul.bf16.gmra.mxu0 %v3546
        %v3629 = vpop.f32.mrf.mxu0
        %v3630 = vadd.f32 0.0, %v3629
        %v3631 = vpop.f32.mrf.mxu0
        %v3632 = vadd.f32 0.0, %v3631
        %3633 = vmatmul.bf16.gmra.mxu0 %v3549
        %v3634 = vpop.f32.mrf.mxu0
        %v3635 = vadd.f32 0.0, %v3634
        %v3636 = vpop.f32.mrf.mxu0
        %v3637 = vadd.f32 0.0, %v3636
        %3638 = vmatmul.bf16.gmra.mxu0 %v3552
        %v3639 = vpop.f32.mrf.mxu0
        %v3640 = vadd.f32 0.0, %v3639
        %v3641 = vpop.f32.mrf.mxu0
        %v3642 = vadd.f32 0.0, %v3641
        %3643 = vmatmul.bf16.gmra.mxu0 %v3555
        %v3644 = vpop.f32.mrf.mxu0
        %v3645 = vadd.f32 0.0, %v3644
        %v3646 = vpop.f32.mrf.mxu0
        %v3647 = vadd.f32 0.0, %v3646
        %3648 = vdwg.mxu0
        %v3649 = vadd.f32 %v3347, %v3570
        %v3650 = vadd.f32 %v3348, %v3572
        %v3651 = vadd.f32 %v3349, %v3575
        %v3652 = vadd.f32 %v3350, %v3577
        %v3653 = vadd.f32 %v3351, %v3580
        %v3654 = vadd.f32 %v3352, %v3582
        %v3655 = vadd.f32 %v3353, %v3585
        %v3656 = vadd.f32 %v3354, %v3587
        %v3657 = vadd.f32 %v3355, %v3590
        %v3658 = vadd.f32 %v3356, %v3592
        %v3659 = vadd.f32 %v3357, %v3595
        %v3660 = vadd.f32 %v3358, %v3597
        %v3661 = vadd.f32 %v3359, %v3600
        %v3662 = vadd.f32 %v3360, %v3602
        %v3663 = vadd.f32 %v3361, %v3605
        %v3664 = vadd.f32 %v3362, %v3607
        %v3665 = vadd.f32 %v3363, %v3610
        %v3666 = vadd.f32 %v3364, %v3612
        %v3667 = vadd.f32 %v3365, %v3615
        %v3668 = vadd.f32 %v3366, %v3617
        %v3669 = vadd.f32 %v3367, %v3620
        %v3670 = vadd.f32 %v3368, %v3622
        %v3671 = vadd.f32 %v3369, %v3625
        %v3672 = vadd.f32 %v3370, %v3627
        %v3673 = vadd.f32 %v3371, %v3630
        %v3674 = vadd.f32 %v3372, %v3632
        %v3675 = vadd.f32 %v3373, %v3635
        %v3676 = vadd.f32 %v3374, %v3637
        %v3677 = vadd.f32 %v3375, %v3640
        %v3678 = vadd.f32 %v3376, %v3642
        %v3679 = vadd.f32 %v3377, %v3645
        %v3680 = vadd.f32 %v3378, %v3647
        %v3681 = vld [vmem:[%s223 + $0x20] sm:$0xf]
        %v3682 = vld [vmem:[%s223 + $0x24] sm:$0xf]
        %v3683 = vld [vmem:[%s223 + $0x28] sm:$0xf]
        %v3684 = vld [vmem:[%s223 + $0x2c] sm:$0xf]
        %v3685 = vld [vmem:[%s223 + $0x30] sm:$0xf]
        %v3686 = vld [vmem:[%s223 + $0x34] sm:$0xf]
        %v3687 = vld [vmem:[%s223 + $0x38] sm:$0xf]
        %v3688 = vld [vmem:[%s223 + $0x3c] sm:$0xf]
        %v3689 = vld [vmem:[%s223 + $0x40] sm:$0xf]
        %v3690 = vld [vmem:[%s223 + $0x44] sm:$0xf]
        %v3691 = vld [vmem:[%s223 + $0x48] sm:$0xf]
        %v3692 = vld [vmem:[%s223 + $0x4c] sm:$0xf]
        %v3693 = vld [vmem:[%s223 + $0x50] sm:$0xf]
        %v3694 = vld [vmem:[%s223 + $0x54] sm:$0xf]
        %v3695 = vld [vmem:[%s223 + $0x58] sm:$0xf]
        %v3696 = vld [vmem:[%s223 + $0x5c] sm:$0xf]
        %v3697 = vld [vmem:[%s223 + $0x60] sm:$0xf]
        %v3698 = vld [vmem:[%s223 + $0x64] sm:$0xf]
        %v3699 = vld [vmem:[%s223 + $0x68] sm:$0xf]
        %v3700 = vld [vmem:[%s223 + $0x6c] sm:$0xf]
        %v3701 = vld [vmem:[%s223 + $0x70] sm:$0xf]
        %v3702 = vld [vmem:[%s223 + $0x74] sm:$0xf]
        %v3703 = vld [vmem:[%s223 + $0x78] sm:$0xf]
        %v3704 = vld [vmem:[%s223 + $0x7c] sm:$0xf]
        %v3705 = vld [vmem:[%s223 + $0x80] sm:$0xf]
        %v3706 = vld [vmem:[%s223 + $0x84] sm:$0xf]
        %v3707 = vld [vmem:[%s223 + $0x88] sm:$0xf]
        %v3708 = vld [vmem:[%s223 + $0x8c] sm:$0xf]
        %v3709 = vld [vmem:[%s223 + $0x90] sm:$0xf]
        %v3710 = vld [vmem:[%s223 + $0x94] sm:$0xf]
        %v3711 = vld [vmem:[%s223 + $0x98] sm:$0xf]
        %v3712 = vld [vmem:[%s223 + $0x9c] sm:$0xf]
        %v3713 = vld [vmem:[%s3 + $0x38] sm:$0xf]
        %v3714 = vld [vmem:[%s3 + $0x3c] sm:$0xf]
        %v3715 = vld [vmem:[%s3 + $0x40] sm:$0xf]
        %v3716 = vld [vmem:[%s3 + $0x44] sm:$0x3]
        %v3749 = vunpack.c.l.b16 %v3681
        %v3750 = vunpack.c.l.b16 %v3682
        %v3751 = vunpack.c.l.b16 %v3683
        %v3752 = vunpack.c.l.b16 %v3684
        %v3753 = vunpack.c.l.b16 %v3685
        %v3754 = vunpack.c.l.b16 %v3686
        %v3755 = vunpack.c.l.b16 %v3687
        %v3756 = vunpack.c.l.b16 %v3688
        %v3757 = vunpack.c.l.b16 %v3689
        %v3758 = vunpack.c.l.b16 %v3690
        %v3759 = vunpack.c.l.b16 %v3691
        %v3760 = vunpack.c.l.b16 %v3692
        %v3761 = vunpack.c.l.b16 %v3693
        %v3762 = vunpack.c.l.b16 %v3694
        %v3763 = vunpack.c.l.b16 %v3695
        %v3764 = vunpack.c.l.b16 %v3696
        %v3765 = vunpack.c.l.b16 %v3697
        %v3766 = vunpack.c.l.b16 %v3698
        %v3767 = vunpack.c.l.b16 %v3699
        %v3768 = vunpack.c.l.b16 %v3700
        %v3769 = vunpack.c.l.b16 %v3701
        %v3770 = vunpack.c.l.b16 %v3702
        %v3771 = vunpack.c.l.b16 %v3703
        %v3772 = vunpack.c.l.b16 %v3704
        %v3773 = vunpack.c.l.b16 %v3705
        %v3774 = vunpack.c.l.b16 %v3706
        %v3775 = vunpack.c.l.b16 %v3707
        %v3776 = vunpack.c.l.b16 %v3708
        %v3777 = vunpack.c.l.b16 %v3709
        %v3778 = vunpack.c.l.b16 %v3710
        %v3779 = vunpack.c.l.b16 %v3711
        %v3780 = vunpack.c.l.b16 %v3712
        %v3781 = vpack.c.b16 %v3750, %v3749
        %v3782 = vpack.c.b16 %v3752, %v3751
        %v3783 = vpack.c.b16 %v3754, %v3753
        %v3784 = vpack.c.b16 %v3756, %v3755
        %v3785 = vpack.c.b16 %v3758, %v3757
        %v3786 = vpack.c.b16 %v3760, %v3759
        %v3787 = vpack.c.b16 %v3762, %v3761
        %v3788 = vpack.c.b16 %v3764, %v3763
        %v3789 = vpack.c.b16 %v3766, %v3765
        %v3790 = vpack.c.b16 %v3768, %v3767
        %v3791 = vpack.c.b16 %v3770, %v3769
        %v3792 = vpack.c.b16 %v3772, %v3771
        %v3793 = vpack.c.b16 %v3774, %v3773
        %v3794 = vpack.c.b16 %v3776, %v3775
        %v3795 = vpack.c.b16 %v3778, %v3777
        %v3796 = vpack.c.b16 %v3780, %v3779
        %v3801 = vunpack.c.l.b16 %v3713
        %v3802 = vunpack.c.l.b16 %v3714
        %v3803 = vunpack.c.l.b16 %v3715
        %v3804 = vunpack.c.l.b16 %v3716
        %v3805 = vpack.c.b16 %v3802, %v3801
        %v3806 = vpack.c.b16 %v3804, %v3803
        %v3809 = vsel %vm2828, %v3781, 0
        %v3812 = vsel %vm2828, %v3782, 0
        %v3815 = vsel %vm2828, %v3783, 0
        %v3818 = vsel %vm2828, %v3784, 0
        %v3821 = vsel %vm2828, %v3785, 0
        %v3824 = vsel %vm2828, %v3786, 0
        %v3827 = vsel %vm2828, %v3787, 0
        %v3830 = vsel %vm2828, %v3788, 0
        %v3833 = vsel %vm2828, %v3789, 0
        %v3836 = vsel %vm2828, %v3790, 0
        %v3839 = vsel %vm2828, %v3791, 0
        %v3842 = vsel %vm2828, %v3792, 0
        %v3845 = vsel %vm2828, %v3793, 0
        %v3848 = vsel %vm2828, %v3794, 0
        %v3851 = vsel %vm2828, %v3795, 0
        %v3854 = vsel %vm2828, %v3796, 0
        %v3857 = vsel %vm432, %v3806, 0
        %3859 = vmatpush.bf16.msra.mxu0 0
        %3860 = vmatpush.bf16.msra.mxu0 0
        %3861 = vmatpush.bf16.msra.mxu0 0
        %3862 = vmatpush.bf16.msra.mxu0 0
        %3863 = vmatpush.bf16.msra.mxu0 0
        %3864 = vmatpush.bf16.msra.mxu0 0
        %3865 = vmatpush.bf16.msra.mxu0 %v3857
        %3866 = vmatpush.bf16.msra.mxu0 %v3805
        %3867 = vmatmul.bf16.gmra.mxu0 %v3809
        %v3868 = vpop.f32.mrf.mxu0
        %v3869 = vadd.f32 0.0, %v3868
        %v3870 = vpop.f32.mrf.mxu0
        %v3871 = vadd.f32 0.0, %v3870
        %3872 = vmatmul.bf16.gmra.mxu0 %v3812
        %v3873 = vpop.f32.mrf.mxu0
        %v3874 = vadd.f32 0.0, %v3873
        %v3875 = vpop.f32.mrf.mxu0
        %v3876 = vadd.f32 0.0, %v3875
        %3877 = vmatmul.bf16.gmra.mxu0 %v3815
        %v3878 = vpop.f32.mrf.mxu0
        %v3879 = vadd.f32 0.0, %v3878
        %v3880 = vpop.f32.mrf.mxu0
        %v3881 = vadd.f32 0.0, %v3880
        %3882 = vmatmul.bf16.gmra.mxu0 %v3818
        %v3883 = vpop.f32.mrf.mxu0
        %v3884 = vadd.f32 0.0, %v3883
        %v3885 = vpop.f32.mrf.mxu0
        %v3886 = vadd.f32 0.0, %v3885
        %3887 = vmatmul.bf16.gmra.mxu0 %v3821
        %v3888 = vpop.f32.mrf.mxu0
        %v3889 = vadd.f32 0.0, %v3888
        %v3890 = vpop.f32.mrf.mxu0
        %v3891 = vadd.f32 0.0, %v3890
        %3892 = vmatmul.bf16.gmra.mxu0 %v3824
        %v3893 = vpop.f32.mrf.mxu0
        %v3894 = vadd.f32 0.0, %v3893
        %v3895 = vpop.f32.mrf.mxu0
        %v3896 = vadd.f32 0.0, %v3895
        %3897 = vmatmul.bf16.gmra.mxu0 %v3827
        %v3898 = vpop.f32.mrf.mxu0
        %v3899 = vadd.f32 0.0, %v3898
        %v3900 = vpop.f32.mrf.mxu0
        %v3901 = vadd.f32 0.0, %v3900
        %3902 = vmatmul.bf16.gmra.mxu0 %v3830
        %v3903 = vpop.f32.mrf.mxu0
        %v3904 = vadd.f32 0.0, %v3903
        %v3905 = vpop.f32.mrf.mxu0
        %v3906 = vadd.f32 0.0, %v3905
        %3907 = vmatmul.bf16.gmra.mxu0 %v3833
        %v3908 = vpop.f32.mrf.mxu0
        %v3909 = vadd.f32 0.0, %v3908
        %v3910 = vpop.f32.mrf.mxu0
        %v3911 = vadd.f32 0.0, %v3910
        %3912 = vmatmul.bf16.gmra.mxu0 %v3836
        %v3913 = vpop.f32.mrf.mxu0
        %v3914 = vadd.f32 0.0, %v3913
        %v3915 = vpop.f32.mrf.mxu0
        %v3916 = vadd.f32 0.0, %v3915
        %3917 = vmatmul.bf16.gmra.mxu0 %v3839
        %v3918 = vpop.f32.mrf.mxu0
        %v3919 = vadd.f32 0.0, %v3918
        %v3920 = vpop.f32.mrf.mxu0
        %v3921 = vadd.f32 0.0, %v3920
        %3922 = vmatmul.bf16.gmra.mxu0 %v3842
        %v3923 = vpop.f32.mrf.mxu0
        %v3924 = vadd.f32 0.0, %v3923
        %v3925 = vpop.f32.mrf.mxu0
        %v3926 = vadd.f32 0.0, %v3925
        %3927 = vmatmul.bf16.gmra.mxu0 %v3845
        %v3928 = vpop.f32.mrf.mxu0
        %v3929 = vadd.f32 0.0, %v3928
        %v3930 = vpop.f32.mrf.mxu0
        %v3931 = vadd.f32 0.0, %v3930
        %3932 = vmatmul.bf16.gmra.mxu0 %v3848
        %v3933 = vpop.f32.mrf.mxu0
        %v3934 = vadd.f32 0.0, %v3933
        %v3935 = vpop.f32.mrf.mxu0
        %v3936 = vadd.f32 0.0, %v3935
        %3937 = vmatmul.bf16.gmra.mxu0 %v3851
        %v3938 = vpop.f32.mrf.mxu0
        %v3939 = vadd.f32 0.0, %v3938
        %v3940 = vpop.f32.mrf.mxu0
        %v3941 = vadd.f32 0.0, %v3940
        %3942 = vmatmul.bf16.gmra.mxu0 %v3854
        %v3943 = vpop.f32.mrf.mxu0
        %v3944 = vadd.f32 0.0, %v3943
        %v3945 = vpop.f32.mrf.mxu0
        %v3946 = vadd.f32 0.0, %v3945
        %3947 = vdwg.mxu0
        %v3948 = vadd.f32 %v3649, %v3869
        %v3949 = vadd.f32 %v3650, %v3871
        %v3950 = vadd.f32 %v3651, %v3874
        %v3951 = vadd.f32 %v3652, %v3876
        %v3952 = vadd.f32 %v3653, %v3879
        %v3953 = vadd.f32 %v3654, %v3881
        %v3954 = vadd.f32 %v3655, %v3884
        %v3955 = vadd.f32 %v3656, %v3886
        %v3956 = vadd.f32 %v3657, %v3889
        %v3957 = vadd.f32 %v3658, %v3891
        %v3958 = vadd.f32 %v3659, %v3894
        %v3959 = vadd.f32 %v3660, %v3896
        %v3960 = vadd.f32 %v3661, %v3899
        %v3961 = vadd.f32 %v3662, %v3901
        %v3962 = vadd.f32 %v3663, %v3904
        %v3963 = vadd.f32 %v3664, %v3906
        %v3964 = vadd.f32 %v3665, %v3909
        %v3965 = vadd.f32 %v3666, %v3911
        %v3966 = vadd.f32 %v3667, %v3914
        %v3967 = vadd.f32 %v3668, %v3916
        %v3968 = vadd.f32 %v3669, %v3919
        %v3969 = vadd.f32 %v3670, %v3921
        %v3970 = vadd.f32 %v3671, %v3924
        %v3971 = vadd.f32 %v3672, %v3926
        %v3972 = vadd.f32 %v3673, %v3929
        %v3973 = vadd.f32 %v3674, %v3931
        %v3974 = vadd.f32 %v3675, %v3934
        %v3975 = vadd.f32 %v3676, %v3936
        %v3976 = vadd.f32 %v3677, %v3939
        %v3977 = vadd.f32 %v3678, %v3941
        %v3978 = vadd.f32 %v3679, %v3944
        %v3979 = vadd.f32 %v3680, %v3946
        %v3980 = vld [vmem:[%s223 + $0x28] sm:$0xf]
        %v3981 = vld [vmem:[%s223 + $0x2c] sm:$0xf]
        %v3982 = vld [vmem:[%s223 + $0x30] sm:$0xf]
        %v3983 = vld [vmem:[%s223 + $0x34] sm:$0xf]
        %v3984 = vld [vmem:[%s223 + $0x38] sm:$0xf]
        %v3985 = vld [vmem:[%s223 + $0x3c] sm:$0xf]
        %v3986 = vld [vmem:[%s223 + $0x40] sm:$0xf]
        %v3987 = vld [vmem:[%s223 + $0x44] sm:$0xf]
        %v3988 = vld [vmem:[%s223 + $0x48] sm:$0xf]
        %v3989 = vld [vmem:[%s223 + $0x4c] sm:$0xf]
        %v3990 = vld [vmem:[%s223 + $0x50] sm:$0xf]
        %v3991 = vld [vmem:[%s223 + $0x54] sm:$0xf]
        %v3992 = vld [vmem:[%s223 + $0x58] sm:$0xf]
        %v3993 = vld [vmem:[%s223 + $0x5c] sm:$0xf]
        %v3994 = vld [vmem:[%s223 + $0x60] sm:$0xf]
        %v3995 = vld [vmem:[%s223 + $0x64] sm:$0xf]
        %v3996 = vld [vmem:[%s223 + $0x68] sm:$0xf]
        %v3997 = vld [vmem:[%s223 + $0x6c] sm:$0xf]
        %v3998 = vld [vmem:[%s223 + $0x70] sm:$0xf]
        %v3999 = vld [vmem:[%s223 + $0x74] sm:$0xf]
        %v4000 = vld [vmem:[%s223 + $0x78] sm:$0xf]
        %v4001 = vld [vmem:[%s223 + $0x7c] sm:$0xf]
        %v4002 = vld [vmem:[%s223 + $0x80] sm:$0xf]
        %v4003 = vld [vmem:[%s223 + $0x84] sm:$0xf]
        %v4004 = vld [vmem:[%s223 + $0x88] sm:$0xf]
        %v4005 = vld [vmem:[%s223 + $0x8c] sm:$0xf]
        %v4006 = vld [vmem:[%s223 + $0x90] sm:$0xf]
        %v4007 = vld [vmem:[%s223 + $0x94] sm:$0xf]
        %v4008 = vld [vmem:[%s223 + $0x98] sm:$0xf]
        %v4009 = vld [vmem:[%s223 + $0x9c] sm:$0xf]
        %v4010 = vld [vmem:[%s223 + $0xa0] sm:$0xf]
        %v4011 = vld [vmem:[%s223 + $0xa4] sm:$0xf]
        %v4012 = vld [vmem:[%s3 + $0x44] sm:$0xc]
        %v4013 = vld [vmem:[%s3 + $0x48] sm:$0xf]
        %v4014 = vld [vmem:[%s3 + $0x4c] sm:$0xf]
        %v4015 = vld [vmem:[%s3 + $0x50] sm:$0xf]
        %v4048 = vunpack.c.l.b16 %v3980
        %v4049 = vunpack.c.l.b16 %v3981
        %v4050 = vunpack.c.l.b16 %v3982
        %v4051 = vunpack.c.l.b16 %v3983
        %v4052 = vunpack.c.l.b16 %v3984
        %v4053 = vunpack.c.l.b16 %v3985
        %v4054 = vunpack.c.l.b16 %v3986
        %v4055 = vunpack.c.l.b16 %v3987
        %v4056 = vunpack.c.l.b16 %v3988
        %v4057 = vunpack.c.l.b16 %v3989
        %v4058 = vunpack.c.l.b16 %v3990
        %v4059 = vunpack.c.l.b16 %v3991
        %v4060 = vunpack.c.l.b16 %v3992
        %v4061 = vunpack.c.l.b16 %v3993
        %v4062 = vunpack.c.l.b16 %v3994
        %v4063 = vunpack.c.l.b16 %v3995
        %v4064 = vunpack.c.l.b16 %v3996
        %v4065 = vunpack.c.l.b16 %v3997
        %v4066 = vunpack.c.l.b16 %v3998
        %v4067 = vunpack.c.l.b16 %v3999
        %v4068 = vunpack.c.l.b16 %v4000
        %v4069 = vunpack.c.l.b16 %v4001
        %v4070 = vunpack.c.l.b16 %v4002
        %v4071 = vunpack.c.l.b16 %v4003
        %v4072 = vunpack.c.l.b16 %v4004
        %v4073 = vunpack.c.l.b16 %v4005
        %v4074 = vunpack.c.l.b16 %v4006
        %v4075 = vunpack.c.l.b16 %v4007
        %v4076 = vunpack.c.l.b16 %v4008
        %v4077 = vunpack.c.l.b16 %v4009
        %v4078 = vunpack.c.l.b16 %v4010
        %v4079 = vunpack.c.l.b16 %v4011
        %v4080 = vpack.c.b16 %v4049, %v4048
        %v4081 = vpack.c.b16 %v4051, %v4050
        %v4082 = vpack.c.b16 %v4053, %v4052
        %v4083 = vpack.c.b16 %v4055, %v4054
        %v4084 = vpack.c.b16 %v4057, %v4056
        %v4085 = vpack.c.b16 %v4059, %v4058
        %v4086 = vpack.c.b16 %v4061, %v4060
        %v4087 = vpack.c.b16 %v4063, %v4062
        %v4088 = vpack.c.b16 %v4065, %v4064
        %v4089 = vpack.c.b16 %v4067, %v4066
        %v4090 = vpack.c.b16 %v4069, %v4068
        %v4091 = vpack.c.b16 %v4071, %v4070
        %v4092 = vpack.c.b16 %v4073, %v4072
        %v4093 = vpack.c.b16 %v4075, %v4074
        %v4094 = vpack.c.b16 %v4077, %v4076
        %v4095 = vpack.c.b16 %v4079, %v4078
        %v4100 = vunpack.c.l.b16 %v4012
        %v4101 = vunpack.c.l.b16 %v4013
        %v4102 = vunpack.c.l.b16 %v4014
        %v4103 = vunpack.c.l.b16 %v4015
        %v4104 = vpack.c.b16 %v4101, %v4100
        %v4105 = vpack.c.b16 %v4103, %v4102
        %v4106 = vrot.slane %v4104, 2
        %v4107 = vrot.slane %v4105, 2
        %v4108 = vsel %vm1216, %v4106, %v4107
        %v4111 = vsel %vm2828, %v4080, 0
        %v4114 = vsel %vm2828, %v4081, 0
        %v4117 = vsel %vm2828, %v4082, 0
        %v4120 = vsel %vm2828, %v4083, 0
        %v4123 = vsel %vm2828, %v4084, 0
        %v4126 = vsel %vm2828, %v4085, 0
        %v4129 = vsel %vm2828, %v4086, 0
        %v4132 = vsel %vm2828, %v4087, 0
        %v4135 = vsel %vm2828, %v4088, 0
        %v4138 = vsel %vm2828, %v4089, 0
        %v4141 = vsel %vm2828, %v4090, 0
        %v4144 = vsel %vm2828, %v4091, 0
        %v4147 = vsel %vm2828, %v4092, 0
        %v4150 = vsel %vm2828, %v4093, 0
        %v4153 = vsel %vm2828, %v4094, 0
        %v4156 = vsel %vm2828, %v4095, 0
        %v4159 = vsel %vm432, %v4107, 0
        %4161 = vmatpush.bf16.msra.mxu0 0
        %4162 = vmatpush.bf16.msra.mxu0 0
        %4163 = vmatpush.bf16.msra.mxu0 0
        %4164 = vmatpush.bf16.msra.mxu0 0
        %4165 = vmatpush.bf16.msra.mxu0 0
        %4166 = vmatpush.bf16.msra.mxu0 0
        %4167 = vmatpush.bf16.msra.mxu0 %v4159
        %4168 = vmatpush.bf16.msra.mxu0 %v4108
        %4169 = vmatmul.bf16.gmra.mxu0 %v4111
        %v4170 = vpop.f32.mrf.mxu0
        %v4171 = vadd.f32 0.0, %v4170
        %v4172 = vpop.f32.mrf.mxu0
        %v4173 = vadd.f32 0.0, %v4172
        %4174 = vmatmul.bf16.gmra.mxu0 %v4114
        %v4175 = vpop.f32.mrf.mxu0
        %v4176 = vadd.f32 0.0, %v4175
        %v4177 = vpop.f32.mrf.mxu0
        %v4178 = vadd.f32 0.0, %v4177
        %4179 = vmatmul.bf16.gmra.mxu0 %v4117
        %v4180 = vpop.f32.mrf.mxu0
        %v4181 = vadd.f32 0.0, %v4180
        %v4182 = vpop.f32.mrf.mxu0
        %v4183 = vadd.f32 0.0, %v4182
        %4184 = vmatmul.bf16.gmra.mxu0 %v4120
        %v4185 = vpop.f32.mrf.mxu0
        %v4186 = vadd.f32 0.0, %v4185
        %v4187 = vpop.f32.mrf.mxu0
        %v4188 = vadd.f32 0.0, %v4187
        %4189 = vmatmul.bf16.gmra.mxu0 %v4123
        %v4190 = vpop.f32.mrf.mxu0
        %v4191 = vadd.f32 0.0, %v4190
        %v4192 = vpop.f32.mrf.mxu0
        %v4193 = vadd.f32 0.0, %v4192
        %4194 = vmatmul.bf16.gmra.mxu0 %v4126
        %v4195 = vpop.f32.mrf.mxu0
        %v4196 = vadd.f32 0.0, %v4195
        %v4197 = vpop.f32.mrf.mxu0
        %v4198 = vadd.f32 0.0, %v4197
        %4199 = vmatmul.bf16.gmra.mxu0 %v4129
        %v4200 = vpop.f32.mrf.mxu0
        %v4201 = vadd.f32 0.0, %v4200
        %v4202 = vpop.f32.mrf.mxu0
        %v4203 = vadd.f32 0.0, %v4202
        %4204 = vmatmul.bf16.gmra.mxu0 %v4132
        %v4205 = vpop.f32.mrf.mxu0
        %v4206 = vadd.f32 0.0, %v4205
        %v4207 = vpop.f32.mrf.mxu0
        %v4208 = vadd.f32 0.0, %v4207
        %4209 = vmatmul.bf16.gmra.mxu0 %v4135
        %v4210 = vpop.f32.mrf.mxu0
        %v4211 = vadd.f32 0.0, %v4210
        %v4212 = vpop.f32.mrf.mxu0
        %v4213 = vadd.f32 0.0, %v4212
        %4214 = vmatmul.bf16.gmra.mxu0 %v4138
        %v4215 = vpop.f32.mrf.mxu0
        %v4216 = vadd.f32 0.0, %v4215
        %v4217 = vpop.f32.mrf.mxu0
        %v4218 = vadd.f32 0.0, %v4217
        %4219 = vmatmul.bf16.gmra.mxu0 %v4141
        %v4220 = vpop.f32.mrf.mxu0
        %v4221 = vadd.f32 0.0, %v4220
        %v4222 = vpop.f32.mrf.mxu0
        %v4223 = vadd.f32 0.0, %v4222
        %4224 = vmatmul.bf16.gmra.mxu0 %v4144
        %v4225 = vpop.f32.mrf.mxu0
        %v4226 = vadd.f32 0.0, %v4225
        %v4227 = vpop.f32.mrf.mxu0
        %v4228 = vadd.f32 0.0, %v4227
        %4229 = vmatmul.bf16.gmra.mxu0 %v4147
        %v4230 = vpop.f32.mrf.mxu0
        %v4231 = vadd.f32 0.0, %v4230
        %v4232 = vpop.f32.mrf.mxu0
        %v4233 = vadd.f32 0.0, %v4232
        %4234 = vmatmul.bf16.gmra.mxu0 %v4150
        %v4235 = vpop.f32.mrf.mxu0
        %v4236 = vadd.f32 0.0, %v4235
        %v4237 = vpop.f32.mrf.mxu0
        %v4238 = vadd.f32 0.0, %v4237
        %4239 = vmatmul.bf16.gmra.mxu0 %v4153
        %v4240 = vpop.f32.mrf.mxu0
        %v4241 = vadd.f32 0.0, %v4240
        %v4242 = vpop.f32.mrf.mxu0
        %v4243 = vadd.f32 0.0, %v4242
        %4244 = vmatmul.bf16.gmra.mxu0 %v4156
        %v4245 = vpop.f32.mrf.mxu0
        %v4246 = vadd.f32 0.0, %v4245
        %v4247 = vpop.f32.mrf.mxu0
        %v4248 = vadd.f32 0.0, %v4247
        %4249 = vdwg.mxu0
        %v4250 = vadd.f32 %v3948, %v4171
        %v4251 = vadd.f32 %v3949, %v4173
        %v4252 = vadd.f32 %v3950, %v4176
        %v4253 = vadd.f32 %v3951, %v4178
        %v4254 = vadd.f32 %v3952, %v4181
        %v4255 = vadd.f32 %v3953, %v4183
        %v4256 = vadd.f32 %v3954, %v4186
        %v4257 = vadd.f32 %v3955, %v4188
        %v4258 = vadd.f32 %v3956, %v4191
        %v4259 = vadd.f32 %v3957, %v4193
        %v4260 = vadd.f32 %v3958, %v4196
        %v4261 = vadd.f32 %v3959, %v4198
        %v4262 = vadd.f32 %v3960, %v4201
        %v4263 = vadd.f32 %v3961, %v4203
        %v4264 = vadd.f32 %v3962, %v4206
        %v4265 = vadd.f32 %v3963, %v4208
        %v4266 = vadd.f32 %v3964, %v4211
        %v4267 = vadd.f32 %v3965, %v4213
        %v4268 = vadd.f32 %v3966, %v4216
        %v4269 = vadd.f32 %v3967, %v4218
        %v4270 = vadd.f32 %v3968, %v4221
        %v4271 = vadd.f32 %v3969, %v4223
        %v4272 = vadd.f32 %v3970, %v4226
        %v4273 = vadd.f32 %v3971, %v4228
        %v4274 = vadd.f32 %v3972, %v4231
        %v4275 = vadd.f32 %v3973, %v4233
        %v4276 = vadd.f32 %v3974, %v4236
        %v4277 = vadd.f32 %v3975, %v4238
        %v4278 = vadd.f32 %v3976, %v4241
        %v4279 = vadd.f32 %v3977, %v4243
        %v4280 = vadd.f32 %v3978, %v4246
        %v4281 = vadd.f32 %v3979, %v4248
        %v4282 = vld [vmem:[%s223 + $0x30] sm:$0xf]
        %v4283 = vld [vmem:[%s223 + $0x34] sm:$0xf]
        %v4284 = vld [vmem:[%s223 + $0x38] sm:$0xf]
        %v4285 = vld [vmem:[%s223 + $0x3c] sm:$0xf]
        %v4286 = vld [vmem:[%s223 + $0x40] sm:$0xf]
        %v4287 = vld [vmem:[%s223 + $0x44] sm:$0xf]
        %v4288 = vld [vmem:[%s223 + $0x48] sm:$0xf]
        %v4289 = vld [vmem:[%s223 + $0x4c] sm:$0xf]
        %v4290 = vld [vmem:[%s223 + $0x50] sm:$0xf]
        %v4291 = vld [vmem:[%s223 + $0x54] sm:$0xf]
        %v4292 = vld [vmem:[%s223 + $0x58] sm:$0xf]
        %v4293 = vld [vmem:[%s223 + $0x5c] sm:$0xf]
        %v4294 = vld [vmem:[%s223 + $0x60] sm:$0xf]
        %v4295 = vld [vmem:[%s223 + $0x64] sm:$0xf]
        %v4296 = vld [vmem:[%s223 + $0x68] sm:$0xf]
        %v4297 = vld [vmem:[%s223 + $0x6c] sm:$0xf]
        %v4298 = vld [vmem:[%s223 + $0x70] sm:$0xf]
        %v4299 = vld [vmem:[%s223 + $0x74] sm:$0xf]
        %v4300 = vld [vmem:[%s223 + $0x78] sm:$0xf]
        %v4301 = vld [vmem:[%s223 + $0x7c] sm:$0xf]
        %v4302 = vld [vmem:[%s223 + $0x80] sm:$0xf]
        %v4303 = vld [vmem:[%s223 + $0x84] sm:$0xf]
        %v4304 = vld [vmem:[%s223 + $0x88] sm:$0xf]
        %v4305 = vld [vmem:[%s223 + $0x8c] sm:$0xf]
        %v4306 = vld [vmem:[%s223 + $0x90] sm:$0xf]
        %v4307 = vld [vmem:[%s223 + $0x94] sm:$0xf]
        %v4308 = vld [vmem:[%s223 + $0x98] sm:$0xf]
        %v4309 = vld [vmem:[%s223 + $0x9c] sm:$0xf]
        %v4310 = vld [vmem:[%s223 + $0xa0] sm:$0xf]
        %v4311 = vld [vmem:[%s223 + $0xa4] sm:$0xf]
        %v4312 = vld [vmem:[%s223 + $0xa8] sm:$0xf]
        %v4313 = vld [vmem:[%s223 + $0xac] sm:$0xf]
        %v4314 = vld [vmem:[%s3 + $0x54] sm:$0xf]
        %v4315 = vld [vmem:[%s3 + $0x58] sm:$0xf]
        %v4316 = vld [vmem:[%s3 + $0x5c] sm:$0xf]
        %v4317 = vld [vmem:[%s3 + $0x60] sm:$0x3]
        %v4350 = vunpack.c.l.b16 %v4282
        %v4351 = vunpack.c.l.b16 %v4283
        %v4352 = vunpack.c.l.b16 %v4284
        %v4353 = vunpack.c.l.b16 %v4285
        %v4354 = vunpack.c.l.b16 %v4286
        %v4355 = vunpack.c.l.b16 %v4287
        %v4356 = vunpack.c.l.b16 %v4288
        %v4357 = vunpack.c.l.b16 %v4289
        %v4358 = vunpack.c.l.b16 %v4290
        %v4359 = vunpack.c.l.b16 %v4291
        %v4360 = vunpack.c.l.b16 %v4292
        %v4361 = vunpack.c.l.b16 %v4293
        %v4362 = vunpack.c.l.b16 %v4294
        %v4363 = vunpack.c.l.b16 %v4295
        %v4364 = vunpack.c.l.b16 %v4296
        %v4365 = vunpack.c.l.b16 %v4297
        %v4366 = vunpack.c.l.b16 %v4298
        %v4367 = vunpack.c.l.b16 %v4299
        %v4368 = vunpack.c.l.b16 %v4300
        %v4369 = vunpack.c.l.b16 %v4301
        %v4370 = vunpack.c.l.b16 %v4302
        %v4371 = vunpack.c.l.b16 %v4303
        %v4372 = vunpack.c.l.b16 %v4304
        %v4373 = vunpack.c.l.b16 %v4305
        %v4374 = vunpack.c.l.b16 %v4306
        %v4375 = vunpack.c.l.b16 %v4307
        %v4376 = vunpack.c.l.b16 %v4308
        %v4377 = vunpack.c.l.b16 %v4309
        %v4378 = vunpack.c.l.b16 %v4310
        %v4379 = vunpack.c.l.b16 %v4311
        %v4380 = vunpack.c.l.b16 %v4312
        %v4381 = vunpack.c.l.b16 %v4313
        %v4382 = vpack.c.b16 %v4351, %v4350
        %v4383 = vpack.c.b16 %v4353, %v4352
        %v4384 = vpack.c.b16 %v4355, %v4354
        %v4385 = vpack.c.b16 %v4357, %v4356
        %v4386 = vpack.c.b16 %v4359, %v4358
        %v4387 = vpack.c.b16 %v4361, %v4360
        %v4388 = vpack.c.b16 %v4363, %v4362
        %v4389 = vpack.c.b16 %v4365, %v4364
        %v4390 = vpack.c.b16 %v4367, %v4366
        %v4391 = vpack.c.b16 %v4369, %v4368
        %v4392 = vpack.c.b16 %v4371, %v4370
        %v4393 = vpack.c.b16 %v4373, %v4372
        %v4394 = vpack.c.b16 %v4375, %v4374
        %v4395 = vpack.c.b16 %v4377, %v4376
        %v4396 = vpack.c.b16 %v4379, %v4378
        %v4397 = vpack.c.b16 %v4381, %v4380
        %v4402 = vunpack.c.l.b16 %v4314
        %v4403 = vunpack.c.l.b16 %v4315
        %v4404 = vunpack.c.l.b16 %v4316
        %v4405 = vunpack.c.l.b16 %v4317
        %v4406 = vpack.c.b16 %v4403, %v4402
        %v4407 = vpack.c.b16 %v4405, %v4404
        %v4410 = vsel %vm2828, %v4382, 0
        %v4413 = vsel %vm2828, %v4383, 0
        %v4416 = vsel %vm2828, %v4384, 0
        %v4419 = vsel %vm2828, %v4385, 0
        %v4422 = vsel %vm2828, %v4386, 0
        %v4425 = vsel %vm2828, %v4387, 0
        %v4428 = vsel %vm2828, %v4388, 0
        %v4431 = vsel %vm2828, %v4389, 0
        %v4434 = vsel %vm2828, %v4390, 0
        %v4437 = vsel %vm2828, %v4391, 0
        %v4440 = vsel %vm2828, %v4392, 0
        %v4443 = vsel %vm2828, %v4393, 0
        %v4446 = vsel %vm2828, %v4394, 0
        %v4449 = vsel %vm2828, %v4395, 0
        %v4452 = vsel %vm2828, %v4396, 0
        %v4455 = vsel %vm2828, %v4397, 0
        %v4458 = vsel %vm432, %v4407, 0
        %4460 = vmatpush.bf16.msra.mxu0 0
        %4461 = vmatpush.bf16.msra.mxu0 0
        %4462 = vmatpush.bf16.msra.mxu0 0
        %4463 = vmatpush.bf16.msra.mxu0 0
        %4464 = vmatpush.bf16.msra.mxu0 0
        %4465 = vmatpush.bf16.msra.mxu0 0
        %4466 = vmatpush.bf16.msra.mxu0 %v4458
        %4467 = vmatpush.bf16.msra.mxu0 %v4406
        %4468 = vmatmul.bf16.gmra.mxu0 %v4410
        %v4469 = vpop.f32.mrf.mxu0
        %v4470 = vadd.f32 0.0, %v4469
        %v4471 = vpop.f32.mrf.mxu0
        %v4472 = vadd.f32 0.0, %v4471
        %4473 = vmatmul.bf16.gmra.mxu0 %v4413
        %v4474 = vpop.f32.mrf.mxu0
        %v4475 = vadd.f32 0.0, %v4474
        %v4476 = vpop.f32.mrf.mxu0
        %v4477 = vadd.f32 0.0, %v4476
        %4478 = vmatmul.bf16.gmra.mxu0 %v4416
        %v4479 = vpop.f32.mrf.mxu0
        %v4480 = vadd.f32 0.0, %v4479
        %v4481 = vpop.f32.mrf.mxu0
        %v4482 = vadd.f32 0.0, %v4481
        %4483 = vmatmul.bf16.gmra.mxu0 %v4419
        %v4484 = vpop.f32.mrf.mxu0
        %v4485 = vadd.f32 0.0, %v4484
        %v4486 = vpop.f32.mrf.mxu0
        %v4487 = vadd.f32 0.0, %v4486
        %4488 = vmatmul.bf16.gmra.mxu0 %v4422
        %v4489 = vpop.f32.mrf.mxu0
        %v4490 = vadd.f32 0.0, %v4489
        %v4491 = vpop.f32.mrf.mxu0
        %v4492 = vadd.f32 0.0, %v4491
        %4493 = vmatmul.bf16.gmra.mxu0 %v4425
        %v4494 = vpop.f32.mrf.mxu0
        %v4495 = vadd.f32 0.0, %v4494
        %v4496 = vpop.f32.mrf.mxu0
        %v4497 = vadd.f32 0.0, %v4496
        %4498 = vmatmul.bf16.gmra.mxu0 %v4428
        %v4499 = vpop.f32.mrf.mxu0
        %v4500 = vadd.f32 0.0, %v4499
        %v4501 = vpop.f32.mrf.mxu0
        %v4502 = vadd.f32 0.0, %v4501
        %4503 = vmatmul.bf16.gmra.mxu0 %v4431
        %v4504 = vpop.f32.mrf.mxu0
        %v4505 = vadd.f32 0.0, %v4504
        %v4506 = vpop.f32.mrf.mxu0
        %v4507 = vadd.f32 0.0, %v4506
        %4508 = vmatmul.bf16.gmra.mxu0 %v4434
        %v4509 = vpop.f32.mrf.mxu0
        %v4510 = vadd.f32 0.0, %v4509
        %v4511 = vpop.f32.mrf.mxu0
        %v4512 = vadd.f32 0.0, %v4511
        %4513 = vmatmul.bf16.gmra.mxu0 %v4437
        %v4514 = vpop.f32.mrf.mxu0
        %v4515 = vadd.f32 0.0, %v4514
        %v4516 = vpop.f32.mrf.mxu0
        %v4517 = vadd.f32 0.0, %v4516
        %4518 = vmatmul.bf16.gmra.mxu0 %v4440
        %v4519 = vpop.f32.mrf.mxu0
        %v4520 = vadd.f32 0.0, %v4519
        %v4521 = vpop.f32.mrf.mxu0
        %v4522 = vadd.f32 0.0, %v4521
        %4523 = vmatmul.bf16.gmra.mxu0 %v4443
        %v4524 = vpop.f32.mrf.mxu0
        %v4525 = vadd.f32 0.0, %v4524
        %v4526 = vpop.f32.mrf.mxu0
        %v4527 = vadd.f32 0.0, %v4526
        %4528 = vmatmul.bf16.gmra.mxu0 %v4446
        %v4529 = vpop.f32.mrf.mxu0
        %v4530 = vadd.f32 0.0, %v4529
        %v4531 = vpop.f32.mrf.mxu0
        %v4532 = vadd.f32 0.0, %v4531
        %4533 = vmatmul.bf16.gmra.mxu0 %v4449
        %v4534 = vpop.f32.mrf.mxu0
        %v4535 = vadd.f32 0.0, %v4534
        %v4536 = vpop.f32.mrf.mxu0
        %v4537 = vadd.f32 0.0, %v4536
        %4538 = vmatmul.bf16.gmra.mxu0 %v4452
        %v4539 = vpop.f32.mrf.mxu0
        %v4540 = vadd.f32 0.0, %v4539
        %v4541 = vpop.f32.mrf.mxu0
        %v4542 = vadd.f32 0.0, %v4541
        %4543 = vmatmul.bf16.gmra.mxu0 %v4455
        %v4544 = vpop.f32.mrf.mxu0
        %v4545 = vadd.f32 0.0, %v4544
        %v4546 = vpop.f32.mrf.mxu0
        %v4547 = vadd.f32 0.0, %v4546
        %4548 = vdwg.mxu0
        %v4549 = vadd.f32 %v4250, %v4470
        %v4550 = vadd.f32 %v4251, %v4472
        %v4551 = vadd.f32 %v4252, %v4475
        %v4552 = vadd.f32 %v4253, %v4477
        %v4553 = vadd.f32 %v4254, %v4480
        %v4554 = vadd.f32 %v4255, %v4482
        %v4555 = vadd.f32 %v4256, %v4485
        %v4556 = vadd.f32 %v4257, %v4487
        %v4557 = vadd.f32 %v4258, %v4490
        %v4558 = vadd.f32 %v4259, %v4492
        %v4559 = vadd.f32 %v4260, %v4495
        %v4560 = vadd.f32 %v4261, %v4497
        %v4561 = vadd.f32 %v4262, %v4500
        %v4562 = vadd.f32 %v4263, %v4502
        %v4563 = vadd.f32 %v4264, %v4505
        %v4564 = vadd.f32 %v4265, %v4507
        %v4565 = vadd.f32 %v4266, %v4510
        %v4566 = vadd.f32 %v4267, %v4512
        %v4567 = vadd.f32 %v4268, %v4515
        %v4568 = vadd.f32 %v4269, %v4517
        %v4569 = vadd.f32 %v4270, %v4520
        %v4570 = vadd.f32 %v4271, %v4522
        %v4571 = vadd.f32 %v4272, %v4525
        %v4572 = vadd.f32 %v4273, %v4527
        %v4573 = vadd.f32 %v4274, %v4530
        %v4574 = vadd.f32 %v4275, %v4532
        %v4575 = vadd.f32 %v4276, %v4535
        %v4576 = vadd.f32 %v4277, %v4537
        %v4577 = vadd.f32 %v4278, %v4540
        %v4578 = vadd.f32 %v4279, %v4542
        %v4579 = vadd.f32 %v4280, %v4545
        %v4580 = vadd.f32 %v4281, %v4547
        %v4581 = vld [vmem:[%s4] sm:$0x1]
        %v4583 = vperm.slane %v4581, 0
        %4584 = vrot.lane.b32.xlu0 %v4583, 112
        %v4585 = vpop.permute.xlu0 %4584
        %v4587 = vadd.f32 %v4549, %v4585
        %v4588 = vadd.f32 %v4550, %v4585
        %v4589 = vadd.f32 %v4551, %v4585
        %v4590 = vadd.f32 %v4552, %v4585
        %v4591 = vadd.f32 %v4553, %v4585
        %v4592 = vadd.f32 %v4554, %v4585
        %v4593 = vadd.f32 %v4555, %v4585
        %v4594 = vadd.f32 %v4556, %v4585
        %v4595 = vadd.f32 %v4557, %v4585
        %v4596 = vadd.f32 %v4558, %v4585
        %v4597 = vadd.f32 %v4559, %v4585
        %v4598 = vadd.f32 %v4560, %v4585
        %v4599 = vadd.f32 %v4561, %v4585
        %v4600 = vadd.f32 %v4562, %v4585
        %v4601 = vadd.f32 %v4563, %v4585
        %v4602 = vadd.f32 %v4564, %v4585
        %v4603 = vadd.f32 %v4565, %v4585
        %v4604 = vadd.f32 %v4566, %v4585
        %v4605 = vadd.f32 %v4567, %v4585
        %v4606 = vadd.f32 %v4568, %v4585
        %v4607 = vadd.f32 %v4569, %v4585
        %v4608 = vadd.f32 %v4570, %v4585
        %v4609 = vadd.f32 %v4571, %v4585
        %v4610 = vadd.f32 %v4572, %v4585
        %v4611 = vadd.f32 %v4573, %v4585
        %v4612 = vadd.f32 %v4574, %v4585
        %v4613 = vadd.f32 %v4575, %v4585
        %v4614 = vadd.f32 %v4576, %v4585
        %v4615 = vadd.f32 %v4577, %v4585
        %v4616 = vadd.f32 %v4578, %v4585
        %v4617 = vadd.f32 %v4579, %v4585
        %v4618 = vadd.f32 %v4580, %v4585
        %v4619 = vpack.c.bf16 %v4587, %v4587
        %v4620 = vpack.c.bf16 %v4588, %v4588
        %v4621 = vpack.c.bf16 %v4589, %v4589
        %v4622 = vpack.c.bf16 %v4590, %v4590
        %v4623 = vpack.c.bf16 %v4591, %v4591
        %v4624 = vpack.c.bf16 %v4592, %v4592
        %v4625 = vpack.c.bf16 %v4593, %v4593
        %v4626 = vpack.c.bf16 %v4594, %v4594
        %v4627 = vpack.c.bf16 %v4595, %v4595
        %v4628 = vpack.c.bf16 %v4596, %v4596
        %v4629 = vpack.c.bf16 %v4597, %v4597
        %v4630 = vpack.c.bf16 %v4598, %v4598
        %v4631 = vpack.c.bf16 %v4599, %v4599
        %v4632 = vpack.c.bf16 %v4600, %v4600
        %v4633 = vpack.c.bf16 %v4601, %v4601
        %v4634 = vpack.c.bf16 %v4602, %v4602
        %v4635 = vpack.c.bf16 %v4603, %v4603
        %v4636 = vpack.c.bf16 %v4604, %v4604
        %v4637 = vpack.c.bf16 %v4605, %v4605
        %v4638 = vpack.c.bf16 %v4606, %v4606
        %v4639 = vpack.c.bf16 %v4607, %v4607
        %v4640 = vpack.c.bf16 %v4608, %v4608
        %v4641 = vpack.c.bf16 %v4609, %v4609
        %v4642 = vpack.c.bf16 %v4610, %v4610
        %v4643 = vpack.c.bf16 %v4611, %v4611
        %v4644 = vpack.c.bf16 %v4612, %v4612
        %v4645 = vpack.c.bf16 %v4613, %v4613
        %v4646 = vpack.c.bf16 %v4614, %v4614
        %v4647 = vpack.c.bf16 %v4615, %v4615
        %v4648 = vpack.c.bf16 %v4616, %v4616
        %v4649 = vpack.c.bf16 %v4617, %v4617
        %v4650 = vpack.c.bf16 %v4618, %v4618
        %4683 = vrot.lane.b32.xlu0 %v4619, 16
        %v4684 = vpop.permute.xlu0 %4683
        %4685 = vrot.lane.b32.xlu0 %v4620, 16
        %v4686 = vpop.permute.xlu0 %4685
        %4687 = vrot.lane.b32.xlu0 %v4621, 16
        %v4688 = vpop.permute.xlu0 %4687
        %4689 = vrot.lane.b32.xlu0 %v4622, 16
        %v4690 = vpop.permute.xlu0 %4689
        %4691 = vrot.lane.b32.xlu0 %v4623, 16
        %v4692 = vpop.permute.xlu0 %4691
        %4693 = vrot.lane.b32.xlu0 %v4624, 16
        %v4694 = vpop.permute.xlu0 %4693
        %4695 = vrot.lane.b32.xlu0 %v4625, 16
        %v4696 = vpop.permute.xlu0 %4695
        %4697 = vrot.lane.b32.xlu0 %v4626, 16
        %v4698 = vpop.permute.xlu0 %4697
        %4699 = vrot.lane.b32.xlu0 %v4627, 16
        %v4700 = vpop.permute.xlu0 %4699
        %4701 = vrot.lane.b32.xlu0 %v4628, 16
        %v4702 = vpop.permute.xlu0 %4701
        %4703 = vrot.lane.b32.xlu0 %v4629, 16
        %v4704 = vpop.permute.xlu0 %4703
        %4705 = vrot.lane.b32.xlu0 %v4630, 16
        %v4706 = vpop.permute.xlu0 %4705
        %4707 = vrot.lane.b32.xlu0 %v4631, 16
        %v4708 = vpop.permute.xlu0 %4707
        %4709 = vrot.lane.b32.xlu0 %v4632, 16
        %v4710 = vpop.permute.xlu0 %4709
        %4711 = vrot.lane.b32.xlu0 %v4633, 16
        %v4712 = vpop.permute.xlu0 %4711
        %4713 = vrot.lane.b32.xlu0 %v4634, 16
        %v4714 = vpop.permute.xlu0 %4713
        %4715 = vrot.lane.b32.xlu0 %v4635, 16
        %v4716 = vpop.permute.xlu0 %4715
        %4717 = vrot.lane.b32.xlu0 %v4636, 16
        %v4718 = vpop.permute.xlu0 %4717
        %4719 = vrot.lane.b32.xlu0 %v4637, 16
        %v4720 = vpop.permute.xlu0 %4719
        %4721 = vrot.lane.b32.xlu0 %v4638, 16
        %v4722 = vpop.permute.xlu0 %4721
        %4723 = vrot.lane.b32.xlu0 %v4639, 16
        %v4724 = vpop.permute.xlu0 %4723
        %4725 = vrot.lane.b32.xlu0 %v4640, 16
        %v4726 = vpop.permute.xlu0 %4725
        %4727 = vrot.lane.b32.xlu0 %v4641, 16
        %v4728 = vpop.permute.xlu0 %4727
        %4729 = vrot.lane.b32.xlu0 %v4642, 16
        %v4730 = vpop.permute.xlu0 %4729
        %4731 = vrot.lane.b32.xlu0 %v4643, 16
        %v4732 = vpop.permute.xlu0 %4731
        %4733 = vrot.lane.b32.xlu0 %v4644, 16
        %v4734 = vpop.permute.xlu0 %4733
        %4735 = vrot.lane.b32.xlu0 %v4645, 16
        %v4736 = vpop.permute.xlu0 %4735
        %4737 = vrot.lane.b32.xlu0 %v4646, 16
        %v4738 = vpop.permute.xlu0 %4737
        %4739 = vrot.lane.b32.xlu0 %v4647, 16
        %v4740 = vpop.permute.xlu0 %4739
        %4741 = vrot.lane.b32.xlu0 %v4648, 16
        %v4742 = vpop.permute.xlu0 %4741
        %4743 = vrot.lane.b32.xlu0 %v4649, 16
        %v4744 = vpop.permute.xlu0 %4743
        %4745 = vrot.lane.b32.xlu0 %v4650, 16
        %v4746 = vpop.permute.xlu0 %4745
        %vm4779 = vcmask 191616
        %4780 = vst.msk [vmem:[%s218] sm:$0xf] %vm4779, %v4684
        %4781 = vst.msk [vmem:[%s218 + $0x4] sm:$0xf] %vm4779, %v4686
        %4782 = vst.msk [vmem:[%s218 + $0x8] sm:$0xf] %vm4779, %v4688
        %4783 = vst.msk [vmem:[%s218 + $0xc] sm:$0xf] %vm4779, %v4690
        %4784 = vst.msk [vmem:[%s218 + $0x10] sm:$0xf] %vm4779, %v4692
        %4785 = vst.msk [vmem:[%s218 + $0x14] sm:$0xf] %vm4779, %v4694
        %4786 = vst.msk [vmem:[%s218 + $0x18] sm:$0xf] %vm4779, %v4696
        %4787 = vst.msk [vmem:[%s218 + $0x1c] sm:$0xf] %vm4779, %v4698
        %4788 = vst.msk [vmem:[%s218 + $0x20] sm:$0xf] %vm4779, %v4700
        %4789 = vst.msk [vmem:[%s218 + $0x24] sm:$0xf] %vm4779, %v4702
        %4790 = vst.msk [vmem:[%s218 + $0x28] sm:$0xf] %vm4779, %v4704
        %4791 = vst.msk [vmem:[%s218 + $0x2c] sm:$0xf] %vm4779, %v4706
        %4792 = vst.msk [vmem:[%s218 + $0x30] sm:$0xf] %vm4779, %v4708
        %4793 = vst.msk [vmem:[%s218 + $0x34] sm:$0xf] %vm4779, %v4710
        %4794 = vst.msk [vmem:[%s218 + $0x38] sm:$0xf] %vm4779, %v4712
        %4795 = vst.msk [vmem:[%s218 + $0x3c] sm:$0xf] %vm4779, %v4714
        %4796 = vst.msk [vmem:[%s218 + $0x40] sm:$0xf] %vm4779, %v4716
        %4797 = vst.msk [vmem:[%s218 + $0x44] sm:$0xf] %vm4779, %v4718
        %4798 = vst.msk [vmem:[%s218 + $0x48] sm:$0xf] %vm4779, %v4720
        %4799 = vst.msk [vmem:[%s218 + $0x4c] sm:$0xf] %vm4779, %v4722
        %4800 = vst.msk [vmem:[%s218 + $0x50] sm:$0xf] %vm4779, %v4724
        %4801 = vst.msk [vmem:[%s218 + $0x54] sm:$0xf] %vm4779, %v4726
        %4802 = vst.msk [vmem:[%s218 + $0x58] sm:$0xf] %vm4779, %v4728
        %4803 = vst.msk [vmem:[%s218 + $0x5c] sm:$0xf] %vm4779, %v4730
        %4804 = vst.msk [vmem:[%s218 + $0x60] sm:$0xf] %vm4779, %v4732
        %4805 = vst.msk [vmem:[%s218 + $0x64] sm:$0xf] %vm4779, %v4734
        %4806 = vst.msk [vmem:[%s218 + $0x68] sm:$0xf] %vm4779, %v4736
        %4807 = vst.msk [vmem:[%s218 + $0x6c] sm:$0xf] %vm4779, %v4738
        %4808 = vst.msk [vmem:[%s218 + $0x70] sm:$0xf] %vm4779, %v4740
        %4809 = vst.msk [vmem:[%s218 + $0x74] sm:$0xf] %vm4779, %v4742
        %4810 = vst.msk [vmem:[%s218 + $0x78] sm:$0xf] %vm4779, %v4744
        %4811 = vst.msk [vmem:[%s218 + $0x7c] sm:$0xf] %vm4779, %v4746
        %s4812 = sand.u32 %s137, 1
        %s4813 = scalar_lea.sflag [#allocation3], %s4812
        %s4814 = sand.u32 %s137, 1
        %s4815 = smul.addr %s4814, 128
        %s4816 = scalar_lea.vmem [#allocation2], %s4815
        // Predicated region
        $region41: #{deformable_inception_forward.1} parent=39 // pred_check
          %p4817 = pneg %p147
        $region42: #{deformable_inception_forward.1} parent=39 // pred_check_branch
          %4819 = sbr.rel (%p4817) target = $region44
        $region43: #{deformable_inception_forward.1} parent=39 // pred_region
          %s4820 = smul.u32 32, %s19
          %4822 = vsyncadd %s4813, 0
          %s4823 = smul.addr %s4820, 4
          %s4824 = scalar_lea.hbm %s5, %s4823
          %s4825 = sshll.u32 %s4816, 4
          %s4826 = int_to_ptr.vmem [resolvable:$true] %s4825
          %s4827 = sshll.u32 %s4824, 4
          %s4828 = int_to_ptr.hbm [resolvable:$true] %s4827
          %4833 = dma.vmem_to_hbm [thread:$0]  %s4826, 2048, %s4828, %s4813, 64, 64, 4
        $region44: #{deformable_inception_forward.1} parent=39 // pred_fallthru
          _
      $region40: #{deformable_inception_forward.1} parent=5 // pred_fallthru
        _
      %p4834 = scmp.le.s32.totalorder 2, %s14
      // Predicated region
      $region45: #{deformable_inception_forward.1} parent=5 // pred_check
        %p4835 = pneg %p4834
      $region46: #{deformable_inception_forward.1} parent=5 // pred_check_branch
        %4837 = sbr.rel (%p4835) target = $region48
      $region47: #{deformable_inception_forward.1} parent=5 // pred_region
        %s4838 = ssub.s32 %s14, 2
        // Predicated region
        $region49: #{deformable_inception_forward.1} parent=47 // pred_check
          %p4839 = pneg %p153
        $region50: #{deformable_inception_forward.1} parent=47 // pred_check_branch
          %4841 = sbr.rel (%p4839) target = $region52
        $region51: #{deformable_inception_forward.1} parent=47 // pred_region
          %s4842 = sand.u32 %s138, 1
          %s4843 = scalar_lea.sflag [#allocation3], %s4842
          %s4844 = sand.u32 %s138, 1
          %s4845 = smul.addr %s4844, 128
          %s4846 = scalar_lea.vmem [#allocation2], %s4845
          %4848 = dma.done %s4843, 2048
        $region52: #{deformable_inception_forward.1} parent=47 // pred_fallthru
          _
      $region48: #{deformable_inception_forward.1} parent=5 // pred_fallthru
        _
    $region6: #{deformable_inception_forward.1} parent=1 // loop_footer
      %s18 = sadd.s32 1, %s14
    $region7: #{deformable_inception_forward.1} parent=1 // loop_footer_branch
      %13 = sbr.rel target = $region3
    $region8: #{deformable_inception_forward.1} parent=1 // loop_exit
      _
    %4849 = vsyncpa [#allocation3], 1
    %s4850 = scalar_lea.sflag [#allocation3], 1
    %4851 = vsyncpa %s4850, 1

</llo_original>
